<compile_context>
chip_gen: v5e
topology: v5e:2x2
jax: 0.10.0
libtpu: 0.0.40
codegen_flags: <defaults>
</compile_context>

<pallas_src>
import math

import jax
import jax.numpy as jnp
from jax.experimental import pallas as pl
from jax.experimental.pallas import tpu as pltpu

# ---- scaled-down synthetic "bert-base" config ----
VOCAB = 64
MAX_POS = 16
TYPE_VOCAB = 2
D_MODEL = 64          # 768 in the real model (LSTM input_size)
NUM_HEADS = 2
D_HEAD = D_MODEL // NUM_HEADS
D_FFN = 128
NUM_LAYERS = 2
LSTM_HIDDEN = 32      # lstm_hidden (256 in the real model)
LN_EPS = 1e-12

# ---- packed bias / LayerNorm-vector table layout (one lane-dense f32 array) ----
VEC_W = 192                                  # widest packed row (merged QKV bias)
ROW_EMB_G, ROW_EMB_B = 0, 1
ROW_LAYER0 = 2
ROWS_PER_LAYER = 8                           # bqkv, bo, ln1g, ln1b, b1, b2, ln2g, ln2b
ROW_BLSTM = ROW_LAYER0 + NUM_LAYERS * ROWS_PER_LAYER
ROW_WFC = ROW_BLSTM + 1
ROW_BFC = ROW_WFC + 1
N_VEC_ROWS = ROW_BFC + 1


def _layernorm(v, g, b):
    mu = jnp.mean(v, axis=-1, keepdims=True)
    var = jnp.mean((v - mu) ** 2, axis=-1, keepdims=True)
    return (v - mu) * jax.lax.rsqrt(var + LN_EPS) * g + b


# ---------------------------------------------------------------------------
# Single fused kernel:
#   embedding gather -> emb LayerNorm -> NUM_LAYERS BERT layers -> LSTM -> fc -> sigmoid
# ---------------------------------------------------------------------------
def bert_lstm_kernel(ids_ref, tok_ref, mask_ref, tables_ref,
                     wqkv_ref, wo_ref, w1_ref, w2_ref,
                     wih_ref, whh_ref, vecs_ref,
                     out_ref, emb_ref):
    B = mask_ref.shape[0]
    S = mask_ref.shape[2]
    D = D_MODEL
    BS = B * S
    H = LSTM_HIDDEN
    scale = 1.0 / math.sqrt(D_HEAD)

    # ---- in-kernel embedding gather: word + position + token-type rows ----
    for p in range(BS):                       # static unroll (BS = 16)
        s = p % S
        wid = ids_ref[p]
        tid = tok_ref[p]
        row = (tables_ref[pl.ds(wid, 1), :]
               + tables_ref[pl.ds(VOCAB + s, 1), :]
               + tables_ref[pl.ds(VOCAB + MAX_POS + tid, 1), :])
        emb_ref[pl.ds(p, 1), :] = row

    V = vecs_ref[...]                         # packed (R, 192) bias / gamma / beta table

    def vec(row, width):
        return V[row:row + 1, :width]

    # additive attention bias (B, 1, S); broadcasts over query rows of (B, S, S)
    bias = (1.0 - mask_ref[...]) * -1e4

    # ---- embeddings LayerNorm, working layout is (B*S, D) ----
    x = _layernorm(emb_ref[...], vec(ROW_EMB_G, D), vec(ROW_EMB_B, D))

    # ---- BERT encoder layers (static unroll over layers and heads) ----
    for l in range(NUM_LAYERS):
        base = ROW_LAYER0 + l * ROWS_PER_LAYER
        xb = x.astype(jnp.bfloat16)           # hoisted activation cast (used once per layer)

        # merged Q|K|V projection: one lane-dense (BS,64)x(64,192) MXU push per layer
        qkv = (jnp.dot(xb, wqkv_ref[l], preferred_element_type=jnp.float32)
               + vec(base + 0, 3 * D))
        qkvb = qkv.astype(jnp.bfloat16)       # cast once; heads are static 32-lane slices

        ctxs = []
        for h in range(NUM_HEADS):
            o = h * D_HEAD
            qh = qkvb[:, o:o + D_HEAD].reshape(B, S, D_HEAD)
            kh = qkvb[:, D + o:D + o + D_HEAD].reshape(B, S, D_HEAD)
            vh = qkvb[:, 2 * D + o:2 * D + o + D_HEAD].reshape(B, S, D_HEAD)
            sc = jnp.einsum('bqd,bkd->bqk', qh, kh,
                            preferred_element_type=jnp.float32) * scale + bias
            # manual softmax: divide goes to EUP via approx reciprocal
            m = jnp.max(sc, axis=-1, keepdims=True)
            e = jnp.exp(sc - m)
            p_att = e * pl.reciprocal(jnp.sum(e, axis=-1, keepdims=True), approx=True)
            ctx = jnp.einsum('bqk,bkd->bqd', p_att.astype(jnp.bfloat16), vh,
                             preferred_element_type=jnp.float32)
            ctxs.append(ctx.reshape(BS, D_HEAD))

        ctx = jnp.concatenate(ctxs, axis=-1)                       # (BS, D), head-major
        attn = (jnp.dot(ctx.astype(jnp.bfloat16), wo_ref[l],
                        preferred_element_type=jnp.float32) + vec(base + 1, D))
        x1 = _layernorm(x + attn, vec(base + 2, D), vec(base + 3, D))

        # TODO(synk): HF bert-base uses exact erf GELU; tanh approximation used here.
        hid = jax.nn.gelu(jnp.dot(x1.astype(jnp.bfloat16), w1_ref[l],
                                  preferred_element_type=jnp.float32) + vec(base + 4, D_FFN),
                          approximate=True)
        ffn = (jnp.dot(hid.astype(jnp.bfloat16), w2_ref[l],
                       preferred_element_type=jnp.float32) + vec(base + 5, D))
        x = _layernorm(x1 + ffn, vec(base + 6, D), vec(base + 7, D))

    # ---- LSTM over time ----
    # Input projection hoisted out of the recurrence: one (BS, D) x (D, 4H) matmul.
    # w_ih / w_hh / b_lstm have their i/f/o columns pre-scaled by 0.5 host-side so the
    # recurrence needs ONE tanh per step: sigmoid(z) = 0.5*tanh(z/2) + 0.5.
    xp = (jnp.dot(x.astype(jnp.bfloat16), wih_ref[...],
                  preferred_element_type=jnp.float32)
          + vec(ROW_BLSTM, 4 * H)).reshape(B, S, 4 * H)
    whh = whh_ref[...]                        # bf16 at rest, loaded once outside the loop

    lane = jax.lax.broadcasted_iota(jnp.int32, (B, 4 * H), 1)
    is_g = (lane >= 2 * H) & (lane < 3 * H)   # PyTorch gate order i, f, g, o (tanh on g)
    g_scale = jnp.where(is_g, 1.0, 0.5)
    g_shift = jnp.where(is_g, 0.0, 0.5)

    h_t = jnp.zeros((B, H), jnp.float32)
    c_t = jnp.zeros((B, H), jnp.float32)
    for t in range(S):                        # static unroll (S small & static)
        z = xp[:, t, :] + jnp.dot(h_t.astype(jnp.bfloat16), whh,
                                  preferred_element_type=jnp.float32)
        act = jnp.tanh(z) * g_scale + g_shift                       # one transcendental
        i_g = act[:, 0:H]
        f_g = act[:, H:2 * H]
        g_g = act[:, 2 * H:3 * H]
        o_g = act[:, 3 * H:4 * H]
        c_t = f_g * c_t + i_g * g_g
        h_t = o_g * jnp.tanh(c_t)

    # Dropout(0.2) is identity at inference; fc (weight packed as a (1, H) row) + sigmoid
    logits = jnp.sum(h_t * vec(ROW_WFC, H), axis=-1, keepdims=True) + vec(ROW_BFC, 1)
    out_ref[...] = jax.nn.sigmoid(logits)


@jax.jit
def bert_lstm_forward(params, input_ids, attention_mask, token_type_ids):
    B, S = input_ids.shape
    mask = attention_mask.astype(jnp.float32).reshape(B, 1, S)

    args = [input_ids.reshape(-1).astype(jnp.int32),
            token_type_ids.reshape(-1).astype(jnp.int32),
            mask,
            params['tables'],
            params['wqkv'], params['wo'], params['w1'], params['w2'],
            params['w_ih'], params['w_hh'], params['vecs']]

    smem = pl.BlockSpec(memory_space=pltpu.MemorySpace.SMEM)
    vmem = pl.BlockSpec(memory_space=pltpu.MemorySpace.VMEM)

    out = pl.pallas_call(
        bert_lstm_kernel,
        out_shape=jax.ShapeDtypeStruct((B, 1), jnp.float32),
        in_specs=[smem, smem] + [vmem] * (len(args) - 2),
        out_specs=vmem,
        scratch_shapes=[pltpu.VMEM((B * S, D_MODEL), jnp.float32)],
    )(*args)
    return out[:, 0]                          # == x.squeeze(1)


# ---------------------------------------------------------------------------
# Parameters (deterministic synthetic init), consolidated / bf16-at-rest layout
# ---------------------------------------------------------------------------
def init_params(key):
    keys = iter(jax.random.split(key, 32))

    def nrm(shape, scale=0.02):
        return scale * jax.random.normal(next(keys), shape, dtype=jnp.float32)

    L, D, F, H = NUM_LAYERS, D_MODEL, D_FFN, LSTM_HIDDEN

    # one concatenated embedding table: [word | position | token-type]
    tables = jnp.concatenate([nrm((VOCAB, D)), nrm((MAX_POS, D)), nrm((TYPE_VOCAB, D))],
                             axis=0)

    # When porting real torch weights: weights must be transposed to (in, out);
    # wqkv columns are [q|k|v], each head-major; wo rows are head-major.
    wqkv = nrm((L, D, 3 * D))
    wo = nrm((L, D, D))
    w1 = nrm((L, D, F))
    w2 = nrm((L, F, D))

    s = 1.0 / math.sqrt(H)

    def uni(shape):
        return jax.random.uniform(next(keys), shape, jnp.float32, -s, s)

    # LSTM: w_ih/w_hh transposed to (in, 4H); b_lstm = b_ih + b_hh for real weights.
    w_ih = uni((D, 4 * H))
    w_hh = uni((H, 4 * H))
    b_lstm = uni((4 * H,))

    # single-tanh gate trick: pre-scale i/f/o columns by 0.5 (sigmoid(x)=0.5*tanh(x/2)+0.5)
    col = jnp.arange(4 * H)
    is_g_col = (col >= 2 * H) & (col < 3 * H)
    gate_scale = jnp.where(is_g_col, 1.0, 0.5).astype(jnp.float32)
    w_ih = w_ih * gate_scale[None, :]
    w_hh = w_hh * gate_scale[None, :]
    b_lstm = b_lstm * gate_scale

    w_fc = uni((H,))                          # torch fc weight is (out=1, in=H)
    b_fc = jnp.zeros((), jnp.float32)

    # packed lane-dense vector table (LayerNorm gammas/betas + all biases + fc weight)
    vecs = jnp.zeros((N_VEC_ROWS, VEC_W), jnp.float32)
    vecs = vecs.at[ROW_EMB_G, :D].set(1.0)    # emb LayerNorm gamma (beta stays 0)
    for l in range(L):
        base = ROW_LAYER0 + l * ROWS_PER_LAYER
        # rows: +0 bqkv, +1 bo, +4 b1, +5 b2 stay zero (synthetic init); LN gammas = 1
        vecs = vecs.at[base + 2, :D].set(1.0)   # ln1 gamma
        vecs = vecs.at[base + 6, :D].set(1.0)   # ln2 gamma
    vecs = vecs.at[ROW_BLSTM, :4 * H].set(b_lstm)
    vecs = vecs.at[ROW_WFC, :H].set(w_fc)
    vecs = vecs.at[ROW_BFC, 0].set(b_fc)

    return {
        'tables': tables,                      # f32: feeds LayerNorm directly
        'wqkv': wqkv.astype(jnp.bfloat16),     # matmul weights bf16 at rest
        'wo': wo.astype(jnp.bfloat16),
        'w1': w1.astype(jnp.bfloat16),
        'w2': w2.astype(jnp.bfloat16),
        'w_ih': w_ih.astype(jnp.bfloat16),
        'w_hh': w_hh.astype(jnp.bfloat16),
        'vecs': vecs,                          # f32 packed bias / gamma / beta table
    }


if __name__ == "__main__":
    key = jax.random.PRNGKey(0)
    pkey, ikey, tkey = jax.random.split(key, 3)
    params = init_params(pkey)

    B, S = 2, 8
    input_ids = jax.random.randint(ikey, (B, S), 0, VOCAB, dtype=jnp.int32)
    token_type_ids = jax.random.randint(tkey, (B, S), 0, TYPE_VOCAB, dtype=jnp.int32)
    attention_mask = jnp.array([[1] * S, [1] * 6 + [0] * 2], dtype=jnp.int32)

    probs = bert_lstm_forward(params, input_ids, attention_mask, token_type_ids)
    probs = jax.block_until_ready(probs)
    assert probs.shape == (B,)
    assert bool(jnp.all(jnp.isfinite(probs)))
    print("KERNEL_OK")
</pallas_src>

<mosaic_0001>
module attributes {stable_mosaic.version = 11 : i64} {
  func.func @bert_lstm_kernel(%arg0: memref<16xi32, #tpu.memory_space<smem>>, %arg1: memref<16xi32, #tpu.memory_space<smem>>, %arg2: memref<2x1x8xf32, #tpu.memory_space<vmem>>, %arg3: memref<82x64xf32, #tpu.memory_space<vmem>>, %arg4: memref<2x64x192xbf16, #tpu.memory_space<vmem>>, %arg5: memref<2x64x64xbf16, #tpu.memory_space<vmem>>, %arg6: memref<2x64x128xbf16, #tpu.memory_space<vmem>>, %arg7: memref<2x128x64xbf16, #tpu.memory_space<vmem>>, %arg8: memref<64x128xbf16, #tpu.memory_space<vmem>>, %arg9: memref<32x128xbf16, #tpu.memory_space<vmem>>, %arg10: memref<21x192xf32, #tpu.memory_space<vmem>>, %arg11: memref<2x1xf32, #tpu.memory_space<vmem>>, %arg12: memref<16x64xf32, #tpu.memory_space<vmem>>) attributes {dimension_semantics = [], scalar_prefetch = 0 : i64, scratch_operands = 1 : i64, tpu.core_type = #tpu.core_type<tc>} {
    %c0 = arith.constant 0 : index
    %0 = memref.load %arg0[%c0] : memref<16xi32, #tpu.memory_space<smem>>
    %c0_0 = arith.constant 0 : index
    %1 = memref.load %arg1[%c0_0] : memref<16xi32, #tpu.memory_space<smem>>
    %2 = arith.index_cast %0 : i32 to index
    %c0_1 = arith.constant 0 : index
    %3 = vector.load %arg3[%2, %c0_1] : memref<82x64xf32, #tpu.memory_space<vmem>>, vector<1x64xf32>
    %c64 = arith.constant 64 : index
    %c0_2 = arith.constant 0 : index
    %4 = vector.load %arg3[%c64, %c0_2] : memref<82x64xf32, #tpu.memory_space<vmem>>, vector<1x64xf32>
    %5 = arith.addf %3, %4 : vector<1x64xf32>
    %c80_i32 = arith.constant 80 : i32
    %6 = arith.addi %c80_i32, %1 : i32
    %7 = arith.index_cast %6 : i32 to index
    %c0_3 = arith.constant 0 : index
    %8 = vector.load %arg3[%7, %c0_3] : memref<82x64xf32, #tpu.memory_space<vmem>>, vector<1x64xf32>
    %9 = arith.addf %5, %8 : vector<1x64xf32>
    %c0_4 = arith.constant 0 : index
    %c0_5 = arith.constant 0 : index
    %10 = vector.load %arg12[%c0_4, %c0_5] : memref<16x64xf32, #tpu.memory_space<vmem>>, vector<1x64xf32>
    tpu.vector_store %arg12[%c0_4, %c0_5], %9 {strides = array<i32>} : memref<16x64xf32, #tpu.memory_space<vmem>>, vector<1x64xf32>,
    %c1 = arith.constant 1 : index
    %11 = memref.load %arg0[%c1] : memref<16xi32, #tpu.memory_space<smem>>
    %c1_6 = arith.constant 1 : index
    %12 = memref.load %arg1[%c1_6] : memref<16xi32, #tpu.memory_space<smem>>
    %13 = arith.index_cast %11 : i32 to index
    %c0_7 = arith.constant 0 : index
    %14 = vector.load %arg3[%13, %c0_7] : memref<82x64xf32, #tpu.memory_space<vmem>>, vector<1x64xf32>
    %c65 = arith.constant 65 : index
    %c0_8 = arith.constant 0 : index
    %15 = vector.load %arg3[%c65, %c0_8] : memref<82x64xf32, #tpu.memory_space<vmem>>, vector<1x64xf32>
    %16 = arith.addf %14, %15 : vector<1x64xf32>
    %c80_i32_9 = arith.constant 80 : i32
    %17 = arith.addi %c80_i32_9, %12 : i32
    %18 = arith.index_cast %17 : i32 to index
    %c0_10 = arith.constant 0 : index
    %19 = vector.load %arg3[%18, %c0_10] : memref<82x64xf32, #tpu.memory_space<vmem>>, vector<1x64xf32>
    %20 = arith.addf %16, %19 : vector<1x64xf32>
    %c1_11 = arith.constant 1 : index
    %c0_12 = arith.constant 0 : index
    %21 = vector.load %arg12[%c1_11, %c0_12] : memref<16x64xf32, #tpu.memory_space<vmem>>, vector<1x64xf32>
    tpu.vector_store %arg12[%c1_11, %c0_12], %20 {strides = array<i32>} : memref<16x64xf32, #tpu.memory_space<vmem>>, vector<1x64xf32>,
    %c2 = arith.constant 2 : index
    %22 = memref.load %arg0[%c2] : memref<16xi32, #tpu.memory_space<smem>>
    %c2_13 = arith.constant 2 : index
    %23 = memref.load %arg1[%c2_13] : memref<16xi32, #tpu.memory_space<smem>>
    %24 = arith.index_cast %22 : i32 to index
    %c0_14 = arith.constant 0 : index
    %25 = vector.load %arg3[%24, %c0_14] : memref<82x64xf32, #tpu.memory_space<vmem>>, vector<1x64xf32>
    %c66 = arith.constant 66 : index
    %c0_15 = arith.constant 0 : index
    %26 = vector.load %arg3[%c66, %c0_15] : memref<82x64xf32, #tpu.memory_space<vmem>>, vector<1x64xf32>
    %27 = arith.addf %25, %26 : vector<1x64xf32>
    %c80_i32_16 = arith.constant 80 : i32
    %28 = arith.addi %c80_i32_16, %23 : i32
    %29 = arith.index_cast %28 : i32 to index
    %c0_17 = arith.constant 0 : index
    %30 = vector.load %arg3[%29, %c0_17] : memref<82x64xf32, #tpu.memory_space<vmem>>, vector<1x64xf32>
    %31 = arith.addf %27, %30 : vector<1x64xf32>
    %c2_18 = arith.constant 2 : index
    %c0_19 = arith.constant 0 : index
    %32 = vector.load %arg12[%c2_18, %c0_19] : memref<16x64xf32, #tpu.memory_space<vmem>>, vector<1x64xf32>
    tpu.vector_store %arg12[%c2_18, %c0_19], %31 {strides = array<i32>} : memref<16x64xf32, #tpu.memory_space<vmem>>, vector<1x64xf32>,
    %c3 = arith.constant 3 : index
    %33 = memref.load %arg0[%c3] : memref<16xi32, #tpu.memory_space<smem>>
    %c3_20 = arith.constant 3 : index
    %34 = memref.load %arg1[%c3_20] : memref<16xi32, #tpu.memory_space<smem>>
    %35 = arith.index_cast %33 : i32 to index
    %c0_21 = arith.constant 0 : index
    %36 = vector.load %arg3[%35, %c0_21] : memref<82x64xf32, #tpu.memory_space<vmem>>, vector<1x64xf32>
    %c67 = arith.constant 67 : index
    %c0_22 = arith.constant 0 : index
    %37 = vector.load %arg3[%c67, %c0_22] : memref<82x64xf32, #tpu.memory_space<vmem>>, vector<1x64xf32>
    %38 = arith.addf %36, %37 : vector<1x64xf32>
    %c80_i32_23 = arith.constant 80 : i32
    %39 = arith.addi %c80_i32_23, %34 : i32
    %40 = arith.index_cast %39 : i32 to index
    %c0_24 = arith.constant 0 : index
    %41 = vector.load %arg3[%40, %c0_24] : memref<82x64xf32, #tpu.memory_space<vmem>>, vector<1x64xf32>
    %42 = arith.addf %38, %41 : vector<1x64xf32>
    %c3_25 = arith.constant 3 : index
    %c0_26 = arith.constant 0 : index
    %43 = vector.load %arg12[%c3_25, %c0_26] : memref<16x64xf32, #tpu.memory_space<vmem>>, vector<1x64xf32>
    tpu.vector_store %arg12[%c3_25, %c0_26], %42 {strides = array<i32>} : memref<16x64xf32, #tpu.memory_space<vmem>>, vector<1x64xf32>,
    %c4 = arith.constant 4 : index
    %44 = memref.load %arg0[%c4] : memref<16xi32, #tpu.memory_space<smem>>
    %c4_27 = arith.constant 4 : index
    %45 = memref.load %arg1[%c4_27] : memref<16xi32, #tpu.memory_space<smem>>
    %46 = arith.index_cast %44 : i32 to index
    %c0_28 = arith.constant 0 : index
    %47 = vector.load %arg3[%46, %c0_28] : memref<82x64xf32, #tpu.memory_space<vmem>>, vector<1x64xf32>
    %c68 = arith.constant 68 : index
    %c0_29 = arith.constant 0 : index
    %48 = vector.load %arg3[%c68, %c0_29] : memref<82x64xf32, #tpu.memory_space<vmem>>, vector<1x64xf32>
    %49 = arith.addf %47, %48 : vector<1x64xf32>
    %c80_i32_30 = arith.constant 80 : i32
    %50 = arith.addi %c80_i32_30, %45 : i32
    %51 = arith.index_cast %50 : i32 to index
    %c0_31 = arith.constant 0 : index
    %52 = vector.load %arg3[%51, %c0_31] : memref<82x64xf32, #tpu.memory_space<vmem>>, vector<1x64xf32>
    %53 = arith.addf %49, %52 : vector<1x64xf32>
    %c4_32 = arith.constant 4 : index
    %c0_33 = arith.constant 0 : index
    %54 = vector.load %arg12[%c4_32, %c0_33] : memref<16x64xf32, #tpu.memory_space<vmem>>, vector<1x64xf32>
    tpu.vector_store %arg12[%c4_32, %c0_33], %53 {strides = array<i32>} : memref<16x64xf32, #tpu.memory_space<vmem>>, vector<1x64xf32>,
    %c5 = arith.constant 5 : index
    %55 = memref.load %arg0[%c5] : memref<16xi32, #tpu.memory_space<smem>>
    %c5_34 = arith.constant 5 : index
    %56 = memref.load %arg1[%c5_34] : memref<16xi32, #tpu.memory_space<smem>>
    %57 = arith.index_cast %55 : i32 to index
    %c0_35 = arith.constant 0 : index
    %58 = vector.load %arg3[%57, %c0_35] : memref<82x64xf32, #tpu.memory_space<vmem>>, vector<1x64xf32>
    %c69 = arith.constant 69 : index
    %c0_36 = arith.constant 0 : index
    %59 = vector.load %arg3[%c69, %c0_36] : memref<82x64xf32, #tpu.memory_space<vmem>>, vector<1x64xf32>
    %60 = arith.addf %58, %59 : vector<1x64xf32>
    %c80_i32_37 = arith.constant 80 : i32
    %61 = arith.addi %c80_i32_37, %56 : i32
    %62 = arith.index_cast %61 : i32 to index
    %c0_38 = arith.constant 0 : index
    %63 = vector.load %arg3[%62, %c0_38] : memref<82x64xf32, #tpu.memory_space<vmem>>, vector<1x64xf32>
    %64 = arith.addf %60, %63 : vector<1x64xf32>
    %c5_39 = arith.constant 5 : index
    %c0_40 = arith.constant 0 : index
    %65 = vector.load %arg12[%c5_39, %c0_40] : memref<16x64xf32, #tpu.memory_space<vmem>>, vector<1x64xf32>
    tpu.vector_store %arg12[%c5_39, %c0_40], %64 {strides = array<i32>} : memref<16x64xf32, #tpu.memory_space<vmem>>, vector<1x64xf32>,
    %c6 = arith.constant 6 : index
    %66 = memref.load %arg0[%c6] : memref<16xi32, #tpu.memory_space<smem>>
    %c6_41 = arith.constant 6 : index
    %67 = memref.load %arg1[%c6_41] : memref<16xi32, #tpu.memory_space<smem>>
    %68 = arith.index_cast %66 : i32 to index
    %c0_42 = arith.constant 0 : index
    %69 = vector.load %arg3[%68, %c0_42] : memref<82x64xf32, #tpu.memory_space<vmem>>, vector<1x64xf32>
    %c70 = arith.constant 70 : index
    %c0_43 = arith.constant 0 : index
    %70 = vector.load %arg3[%c70, %c0_43] : memref<82x64xf32, #tpu.memory_space<vmem>>, vector<1x64xf32>
    %71 = arith.addf %69, %70 : vector<1x64xf32>
    %c80_i32_44 = arith.constant 80 : i32
    %72 = arith.addi %c80_i32_44, %67 : i32
    %73 = arith.index_cast %72 : i32 to index
    %c0_45 = arith.constant 0 : index
    %74 = vector.load %arg3[%73, %c0_45] : memref<82x64xf32, #tpu.memory_space<vmem>>, vector<1x64xf32>
    %75 = arith.addf %71, %74 : vector<1x64xf32>
    %c6_46 = arith.constant 6 : index
    %c0_47 = arith.constant 0 : index
    %76 = vector.load %arg12[%c6_46, %c0_47] : memref<16x64xf32, #tpu.memory_space<vmem>>, vector<1x64xf32>
    tpu.vector_store %arg12[%c6_46, %c0_47], %75 {strides = array<i32>} : memref<16x64xf32, #tpu.memory_space<vmem>>, vector<1x64xf32>,
    %c7 = arith.constant 7 : index
    %77 = memref.load %arg0[%c7] : memref<16xi32, #tpu.memory_space<smem>>
    %c7_48 = arith.constant 7 : index
    %78 = memref.load %arg1[%c7_48] : memref<16xi32, #tpu.memory_space<smem>>
    %79 = arith.index_cast %77 : i32 to index
    %c0_49 = arith.constant 0 : index
    %80 = vector.load %arg3[%79, %c0_49] : memref<82x64xf32, #tpu.memory_space<vmem>>, vector<1x64xf32>
    %c71 = arith.constant 71 : index
    %c0_50 = arith.constant 0 : index
    %81 = vector.load %arg3[%c71, %c0_50] : memref<82x64xf32, #tpu.memory_space<vmem>>, vector<1x64xf32>
    %82 = arith.addf %80, %81 : vector<1x64xf32>
    %c80_i32_51 = arith.constant 80 : i32
    %83 = arith.addi %c80_i32_51, %78 : i32
    %84 = arith.index_cast %83 : i32 to index
    %c0_52 = arith.constant 0 : index
    %85 = vector.load %arg3[%84, %c0_52] : memref<82x64xf32, #tpu.memory_space<vmem>>, vector<1x64xf32>
    %86 = arith.addf %82, %85 : vector<1x64xf32>
    %c7_53 = arith.constant 7 : index
    %c0_54 = arith.constant 0 : index
    %87 = vector.load %arg12[%c7_53, %c0_54] : memref<16x64xf32, #tpu.memory_space<vmem>>, vector<1x64xf32>
    tpu.vector_store %arg12[%c7_53, %c0_54], %86 {strides = array<i32>} : memref<16x64xf32, #tpu.memory_space<vmem>>, vector<1x64xf32>,
    %c8 = arith.constant 8 : index
    %88 = memref.load %arg0[%c8] : memref<16xi32, #tpu.memory_space<smem>>
    %c8_55 = arith.constant 8 : index
    %89 = memref.load %arg1[%c8_55] : memref<16xi32, #tpu.memory_space<smem>>
    %90 = arith.index_cast %88 : i32 to index
    %c0_56 = arith.constant 0 : index
    %91 = vector.load %arg3[%90, %c0_56] : memref<82x64xf32, #tpu.memory_space<vmem>>, vector<1x64xf32>
    %c64_57 = arith.constant 64 : index
    %c0_58 = arith.constant 0 : index
    %92 = vector.load %arg3[%c64_57, %c0_58] : memref<82x64xf32, #tpu.memory_space<vmem>>, vector<1x64xf32>
    %93 = arith.addf %91, %92 : vector<1x64xf32>
    %c80_i32_59 = arith.constant 80 : i32
    %94 = arith.addi %c80_i32_59, %89 : i32
    %95 = arith.index_cast %94 : i32 to index
    %c0_60 = arith.constant 0 : index
    %96 = vector.load %arg3[%95, %c0_60] : memref<82x64xf32, #tpu.memory_space<vmem>>, vector<1x64xf32>
    %97 = arith.addf %93, %96 : vector<1x64xf32>
    %c8_61 = arith.constant 8 : index
    %c0_62 = arith.constant 0 : index
    %98 = vector.load %arg12[%c8_61, %c0_62] : memref<16x64xf32, #tpu.memory_space<vmem>>, vector<1x64xf32>
    tpu.vector_store %arg12[%c8_61, %c0_62], %97 {strides = array<i32>} : memref<16x64xf32, #tpu.memory_space<vmem>>, vector<1x64xf32>,
    %c9 = arith.constant 9 : index
    %99 = memref.load %arg0[%c9] : memref<16xi32, #tpu.memory_space<smem>>
    %c9_63 = arith.constant 9 : index
    %100 = memref.load %arg1[%c9_63] : memref<16xi32, #tpu.memory_space<smem>>
    %101 = arith.index_cast %99 : i32 to index
    %c0_64 = arith.constant 0 : index
    %102 = vector.load %arg3[%101, %c0_64] : memref<82x64xf32, #tpu.memory_space<vmem>>, vector<1x64xf32>
    %c65_65 = arith.constant 65 : index
    %c0_66 = arith.constant 0 : index
    %103 = vector.load %arg3[%c65_65, %c0_66] : memref<82x64xf32, #tpu.memory_space<vmem>>, vector<1x64xf32>
    %104 = arith.addf %102, %103 : vector<1x64xf32>
    %c80_i32_67 = arith.constant 80 : i32
    %105 = arith.addi %c80_i32_67, %100 : i32
    %106 = arith.index_cast %105 : i32 to index
    %c0_68 = arith.constant 0 : index
    %107 = vector.load %arg3[%106, %c0_68] : memref<82x64xf32, #tpu.memory_space<vmem>>, vector<1x64xf32>
    %108 = arith.addf %104, %107 : vector<1x64xf32>
    %c9_69 = arith.constant 9 : index
    %c0_70 = arith.constant 0 : index
    %109 = vector.load %arg12[%c9_69, %c0_70] : memref<16x64xf32, #tpu.memory_space<vmem>>, vector<1x64xf32>
    tpu.vector_store %arg12[%c9_69, %c0_70], %108 {strides = array<i32>} : memref<16x64xf32, #tpu.memory_space<vmem>>, vector<1x64xf32>,
    %c10 = arith.constant 10 : index
    %110 = memref.load %arg0[%c10] : memref<16xi32, #tpu.memory_space<smem>>
    %c10_71 = arith.constant 10 : index
    %111 = memref.load %arg1[%c10_71] : memref<16xi32, #tpu.memory_space<smem>>
    %112 = arith.index_cast %110 : i32 to index
    %c0_72 = arith.constant 0 : index
    %113 = vector.load %arg3[%112, %c0_72] : memref<82x64xf32, #tpu.memory_space<vmem>>, vector<1x64xf32>
    %c66_73 = arith.constant 66 : index
    %c0_74 = arith.constant 0 : index
    %114 = vector.load %arg3[%c66_73, %c0_74] : memref<82x64xf32, #tpu.memory_space<vmem>>, vector<1x64xf32>
    %115 = arith.addf %113, %114 : vector<1x64xf32>
    %c80_i32_75 = arith.constant 80 : i32
    %116 = arith.addi %c80_i32_75, %111 : i32
    %117 = arith.index_cast %116 : i32 to index
    %c0_76 = arith.constant 0 : index
    %118 = vector.load %arg3[%117, %c0_76] : memref<82x64xf32, #tpu.memory_space<vmem>>, vector<1x64xf32>
    %119 = arith.addf %115, %118 : vector<1x64xf32>
    %c10_77 = arith.constant 10 : index
    %c0_78 = arith.constant 0 : index
    %120 = vector.load %arg12[%c10_77, %c0_78] : memref<16x64xf32, #tpu.memory_space<vmem>>, vector<1x64xf32>
    tpu.vector_store %arg12[%c10_77, %c0_78], %119 {strides = array<i32>} : memref<16x64xf32, #tpu.memory_space<vmem>>, vector<1x64xf32>,
    %c11 = arith.constant 11 : index
    %121 = memref.load %arg0[%c11] : memref<16xi32, #tpu.memory_space<smem>>
    %c11_79 = arith.constant 11 : index
    %122 = memref.load %arg1[%c11_79] : memref<16xi32, #tpu.memory_space<smem>>
    %123 = arith.index_cast %121 : i32 to index
    %c0_80 = arith.constant 0 : index
    %124 = vector.load %arg3[%123, %c0_80] : memref<82x64xf32, #tpu.memory_space<vmem>>, vector<1x64xf32>
    %c67_81 = arith.constant 67 : index
    %c0_82 = arith.constant 0 : index
    %125 = vector.load %arg3[%c67_81, %c0_82] : memref<82x64xf32, #tpu.memory_space<vmem>>, vector<1x64xf32>
    %126 = arith.addf %124, %125 : vector<1x64xf32>
    %c80_i32_83 = arith.constant 80 : i32
    %127 = arith.addi %c80_i32_83, %122 : i32
    %128 = arith.index_cast %127 : i32 to index
    %c0_84 = arith.constant 0 : index
    %129 = vector.load %arg3[%128, %c0_84] : memref<82x64xf32, #tpu.memory_space<vmem>>, vector<1x64xf32>
    %130 = arith.addf %126, %129 : vector<1x64xf32>
    %c11_85 = arith.constant 11 : index
    %c0_86 = arith.constant 0 : index
    %131 = vector.load %arg12[%c11_85, %c0_86] : memref<16x64xf32, #tpu.memory_space<vmem>>, vector<1x64xf32>
    tpu.vector_store %arg12[%c11_85, %c0_86], %130 {strides = array<i32>} : memref<16x64xf32, #tpu.memory_space<vmem>>, vector<1x64xf32>,
    %c12 = arith.constant 12 : index
    %132 = memref.load %arg0[%c12] : memref<16xi32, #tpu.memory_space<smem>>
    %c12_87 = arith.constant 12 : index
    %133 = memref.load %arg1[%c12_87] : memref<16xi32, #tpu.memory_space<smem>>
    %134 = arith.index_cast %132 : i32 to index
    %c0_88 = arith.constant 0 : index
    %135 = vector.load %arg3[%134, %c0_88] : memref<82x64xf32, #tpu.memory_space<vmem>>, vector<1x64xf32>
    %c68_89 = arith.constant 68 : index
    %c0_90 = arith.constant 0 : index
    %136 = vector.load %arg3[%c68_89, %c0_90] : memref<82x64xf32, #tpu.memory_space<vmem>>, vector<1x64xf32>
    %137 = arith.addf %135, %136 : vector<1x64xf32>
    %c80_i32_91 = arith.constant 80 : i32
    %138 = arith.addi %c80_i32_91, %133 : i32
    %139 = arith.index_cast %138 : i32 to index
    %c0_92 = arith.constant 0 : index
    %140 = vector.load %arg3[%139, %c0_92] : memref<82x64xf32, #tpu.memory_space<vmem>>, vector<1x64xf32>
    %141 = arith.addf %137, %140 : vector<1x64xf32>
    %c12_93 = arith.constant 12 : index
    %c0_94 = arith.constant 0 : index
    %142 = vector.load %arg12[%c12_93, %c0_94] : memref<16x64xf32, #tpu.memory_space<vmem>>, vector<1x64xf32>
    tpu.vector_store %arg12[%c12_93, %c0_94], %141 {strides = array<i32>} : memref<16x64xf32, #tpu.memory_space<vmem>>, vector<1x64xf32>,
    %c13 = arith.constant 13 : index
    %143 = memref.load %arg0[%c13] : memref<16xi32, #tpu.memory_space<smem>>
    %c13_95 = arith.constant 13 : index
    %144 = memref.load %arg1[%c13_95] : memref<16xi32, #tpu.memory_space<smem>>
    %145 = arith.index_cast %143 : i32 to index
    %c0_96 = arith.constant 0 : index
    %146 = vector.load %arg3[%145, %c0_96] : memref<82x64xf32, #tpu.memory_space<vmem>>, vector<1x64xf32>
    %c69_97 = arith.constant 69 : index
    %c0_98 = arith.constant 0 : index
    %147 = vector.load %arg3[%c69_97, %c0_98] : memref<82x64xf32, #tpu.memory_space<vmem>>, vector<1x64xf32>
    %148 = arith.addf %146, %147 : vector<1x64xf32>
    %c80_i32_99 = arith.constant 80 : i32
    %149 = arith.addi %c80_i32_99, %144 : i32
    %150 = arith.index_cast %149 : i32 to index
    %c0_100 = arith.constant 0 : index
    %151 = vector.load %arg3[%150, %c0_100] : memref<82x64xf32, #tpu.memory_space<vmem>>, vector<1x64xf32>
    %152 = arith.addf %148, %151 : vector<1x64xf32>
    %c13_101 = arith.constant 13 : index
    %c0_102 = arith.constant 0 : index
    %153 = vector.load %arg12[%c13_101, %c0_102] : memref<16x64xf32, #tpu.memory_space<vmem>>, vector<1x64xf32>
    tpu.vector_store %arg12[%c13_101, %c0_102], %152 {strides = array<i32>} : memref<16x64xf32, #tpu.memory_space<vmem>>, vector<1x64xf32>,
    %c14 = arith.constant 14 : index
    %154 = memref.load %arg0[%c14] : memref<16xi32, #tpu.memory_space<smem>>
    %c14_103 = arith.constant 14 : index
    %155 = memref.load %arg1[%c14_103] : memref<16xi32, #tpu.memory_space<smem>>
    %156 = arith.index_cast %154 : i32 to index
    %c0_104 = arith.constant 0 : index
    %157 = vector.load %arg3[%156, %c0_104] : memref<82x64xf32, #tpu.memory_space<vmem>>, vector<1x64xf32>
    %c70_105 = arith.constant 70 : index
    %c0_106 = arith.constant 0 : index
    %158 = vector.load %arg3[%c70_105, %c0_106] : memref<82x64xf32, #tpu.memory_space<vmem>>, vector<1x64xf32>
    %159 = arith.addf %157, %158 : vector<1x64xf32>
    %c80_i32_107 = arith.constant 80 : i32
    %160 = arith.addi %c80_i32_107, %155 : i32
    %161 = arith.index_cast %160 : i32 to index
    %c0_108 = arith.constant 0 : index
    %162 = vector.load %arg3[%161, %c0_108] : memref<82x64xf32, #tpu.memory_space<vmem>>, vector<1x64xf32>
    %163 = arith.addf %159, %162 : vector<1x64xf32>
    %c14_109 = arith.constant 14 : index
    %c0_110 = arith.constant 0 : index
    %164 = vector.load %arg12[%c14_109, %c0_110] : memref<16x64xf32, #tpu.memory_space<vmem>>, vector<1x64xf32>
    tpu.vector_store %arg12[%c14_109, %c0_110], %163 {strides = array<i32>} : memref<16x64xf32, #tpu.memory_space<vmem>>, vector<1x64xf32>,
    %c15 = arith.constant 15 : index
    %165 = memref.load %arg0[%c15] : memref<16xi32, #tpu.memory_space<smem>>
    %c15_111 = arith.constant 15 : index
    %166 = memref.load %arg1[%c15_111] : memref<16xi32, #tpu.memory_space<smem>>
    %167 = arith.index_cast %165 : i32 to index
    %c0_112 = arith.constant 0 : index
    %168 = vector.load %arg3[%167, %c0_112] : memref<82x64xf32, #tpu.memory_space<vmem>>, vector<1x64xf32>
    %c71_113 = arith.constant 71 : index
    %c0_114 = arith.constant 0 : index
    %169 = vector.load %arg3[%c71_113, %c0_114] : memref<82x64xf32, #tpu.memory_space<vmem>>, vector<1x64xf32>
    %170 = arith.addf %168, %169 : vector<1x64xf32>
    %c80_i32_115 = arith.constant 80 : i32
    %171 = arith.addi %c80_i32_115, %166 : i32
    %172 = arith.index_cast %171 : i32 to index
    %c0_116 = arith.constant 0 : index
    %173 = vector.load %arg3[%172, %c0_116] : memref<82x64xf32, #tpu.memory_space<vmem>>, vector<1x64xf32>
    %174 = arith.addf %170, %173 : vector<1x64xf32>
    %c15_117 = arith.constant 15 : index
    %c0_118 = arith.constant 0 : index
    %175 = vector.load %arg12[%c15_117, %c0_118] : memref<16x64xf32, #tpu.memory_space<vmem>>, vector<1x64xf32>
    tpu.vector_store %arg12[%c15_117, %c0_118], %174 {strides = array<i32>} : memref<16x64xf32, #tpu.memory_space<vmem>>, vector<1x64xf32>,
    %c0_119 = arith.constant 0 : index
    %c0_120 = arith.constant 0 : index
    %176 = vector.load %arg10[%c0_119, %c0_120] : memref<21x192xf32, #tpu.memory_space<vmem>>, vector<21x192xf32>
    %c0_121 = arith.constant 0 : index
    %c0_122 = arith.constant 0 : index
    %c0_123 = arith.constant 0 : index
    %177 = vector.load %arg2[%c0_121, %c0_122, %c0_123] : memref<2x1x8xf32, #tpu.memory_space<vmem>>, vector<2x1x8xf32>
    %cst = arith.constant 1.000000e+00 : f32
    %178 = vector.broadcast %cst : f32 to vector<2x1x8xf32>
    %179 = arith.subf %178, %177 : vector<2x1x8xf32>
    %cst_124 = arith.constant -1.000000e+04 : f32
    %180 = vector.broadcast %cst_124 : f32 to vector<2x1x8xf32>
    %181 = arith.mulf %179, %180 : vector<2x1x8xf32>
    %c0_125 = arith.constant 0 : index
    %c0_126 = arith.constant 0 : index
    %182 = vector.load %arg12[%c0_125, %c0_126] : memref<16x64xf32, #tpu.memory_space<vmem>>, vector<16x64xf32>
    %183 = vector.extract_strided_slice %176 {offsets = [0, 0], sizes = [1, 64], strides = [1, 1]} : vector<21x192xf32> to vector<1x64xf32>
    %184 = vector.extract_strided_slice %176 {offsets = [1, 0], sizes = [1, 64], strides = [1, 1]} : vector<21x192xf32> to vector<1x64xf32>
    %cst_127 = arith.constant dense<0.000000e+00> : vector<16xf32>
    %185 = vector.multi_reduction <add>, %182, %cst_127 [1] : vector<16x64xf32> to vector<16xf32>
    %186 = vector.shape_cast %185 : vector<16xf32> to vector<16x1xf32>
    %cst_128 = arith.constant 6.400000e+01 : f32
    %187 = vector.broadcast %cst_128 : f32 to vector<16x1xf32>
    %188 = arith.divf %186, %187 : vector<16x1xf32>
    %189 = vector.broadcast %188 : vector<16x1xf32> to vector<16x64xf32>
    %190 = arith.subf %182, %189 : vector<16x64xf32>
    %191 = arith.mulf %190, %190 : vector<16x64xf32>
    %cst_129 = arith.constant dense<0.000000e+00> : vector<16xf32>
    %192 = vector.multi_reduction <add>, %191, %cst_129 [1] : vector<16x64xf32> to vector<16xf32>
    %193 = vector.shape_cast %192 : vector<16xf32> to vector<16x1xf32>
    %cst_130 = arith.constant 6.400000e+01 : f32
    %194 = vector.broadcast %cst_130 : f32 to vector<16x1xf32>
    %195 = arith.divf %193, %194 : vector<16x1xf32>
    %196 = vector.broadcast %188 : vector<16x1xf32> to vector<16x64xf32>
    %197 = arith.subf %182, %196 : vector<16x64xf32>
    %cst_131 = arith.constant 9.99999996E-13 : f32
    %198 = vector.broadcast %cst_131 : f32 to vector<16x1xf32>
    %199 = arith.addf %195, %198 : vector<16x1xf32>
    %200 = math.rsqrt %199 : vector<16x1xf32>
    %201 = vector.broadcast %200 : vector<16x1xf32> to vector<16x64xf32>
    %202 = arith.mulf %197, %201 : vector<16x64xf32>
    %203 = vector.broadcast %183 : vector<1x64xf32> to vector<16x64xf32>
    %204 = arith.mulf %202, %203 : vector<16x64xf32>
    %205 = vector.broadcast %184 : vector<1x64xf32> to vector<16x64xf32>
    %206 = arith.addf %204, %205 : vector<16x64xf32>
    %207 = arith.truncf %206 : vector<16x64xf32> to vector<16x64xbf16>
    %c0_132 = arith.constant 0 : index
    %c0_133 = arith.constant 0 : index
    %c0_134 = arith.constant 0 : index
    %208 = vector.load %arg4[%c0_132, %c0_133, %c0_134] : memref<2x64x192xbf16, #tpu.memory_space<vmem>>, vector<1x64x192xbf16>
    %209 = vector.shape_cast %208 : vector<1x64x192xbf16> to vector<64x192xbf16>
    %cst_135 = arith.constant dense<0.000000e+00> : vector<16x192xf32>
    %210 = tpu.matmul %207, %209, %cst_135 {dimension_numbers = #tpu.dot_dimension_numbers<[1], [0], [0], [1], [0, 0, 1, 1], [], []>} : vector<16x64xbf16>, vector<64x192xbf16>, vector<16x192xf32> -> vector<16x192xf32>
    %211 = vector.extract_strided_slice %176 {offsets = [2, 0], sizes = [1, 192], strides = [1, 1]} : vector<21x192xf32> to vector<1x192xf32>
    %212 = vector.broadcast %211 : vector<1x192xf32> to vector<16x192xf32>
    %213 = arith.addf %210, %212 : vector<16x192xf32>
    %214 = arith.truncf %213 : vector<16x192xf32> to vector<16x192xbf16>
    %215 = vector.extract_strided_slice %214 {offsets = [0, 0], sizes = [16, 32], strides = [1, 1]} : vector<16x192xbf16> to vector<16x32xbf16>
    %216 = vector.shape_cast %215 : vector<16x32xbf16> to vector<2x8x32xbf16>
    %217 = vector.extract_strided_slice %214 {offsets = [0, 64], sizes = [16, 32], strides = [1, 1]} : vector<16x192xbf16> to vector<16x32xbf16>
    %218 = vector.shape_cast %217 : vector<16x32xbf16> to vector<2x8x32xbf16>
    %219 = vector.extract_strided_slice %214 {offsets = [0, 128], sizes = [16, 32], strides = [1, 1]} : vector<16x192xbf16> to vector<16x32xbf16>
    %220 = vector.shape_cast %219 : vector<16x32xbf16> to vector<2x8x32xbf16>
    "tpu.trace_start"() <{level = 10 : i32, message = "bqd,bkd->bqk"}> : () -> ()
    %cst_136 = arith.constant dense<0.000000e+00> : vector<2x8x8xf32>
    %221 = tpu.matmul %216, %218, %cst_136 {dimension_numbers = #tpu.dot_dimension_numbers<[2], [2], [1], [1], [0, 0, 0, 1, 1, 1], [0], [0]>} : vector<2x8x32xbf16>, vector<2x8x32xbf16>, vector<2x8x8xf32> -> vector<2x8x8xf32>
    "tpu.trace_stop"() : () -> ()
    %cst_137 = arith.constant 0.176776692 : f32
    %222 = vector.broadcast %cst_137 : f32 to vector<2x8x8xf32>
    %223 = arith.mulf %221, %222 : vector<2x8x8xf32>
    %224 = vector.broadcast %181 : vector<2x1x8xf32> to vector<2x8x8xf32>
    %225 = arith.addf %223, %224 : vector<2x8x8xf32>
    %cst_138 = arith.constant dense<0xFF800000> : vector<2x8xf32>
    %226 = vector.multi_reduction <maximumf>, %225, %cst_138 [2] : vector<2x8x8xf32> to vector<2x8xf32>
    %227 = vector.shape_cast %226 : vector<2x8xf32> to vector<2x8x1xf32>
    %228 = vector.broadcast %227 : vector<2x8x1xf32> to vector<2x8x8xf32>
    %229 = arith.subf %225, %228 : vector<2x8x8xf32>
    %230 = math.exp %229 : vector<2x8x8xf32>
    %cst_139 = arith.constant dense<0.000000e+00> : vector<2x8xf32>
    %231 = vector.multi_reduction <add>, %230, %cst_139 [2] : vector<2x8x8xf32> to vector<2x8xf32>
    %232 = vector.shape_cast %231 : vector<2x8xf32> to vector<2x8x1xf32>
    %233 = tpu.reciprocal %232 {approx = true} : vector<2x8x1xf32> -> vector<2x8x1xf32>
    %234 = vector.broadcast %233 : vector<2x8x1xf32> to vector<2x8x8xf32>
    %235 = arith.mulf %230, %234 : vector<2x8x8xf32>
    %236 = arith.truncf %235 : vector<2x8x8xf32> to vector<2x8x8xbf16>
    "tpu.trace_start"() <{level = 10 : i32, message = "bqk,bkd->bqd"}> : () -> ()
    %cst_140 = arith.constant dense<0.000000e+00> : vector<2x8x32xf32>
    %237 = tpu.matmul %236, %220, %cst_140 {dimension_numbers = #tpu.dot_dimension_numbers<[2], [1], [1], [2], [0, 0, 0, 1, 1, 2], [0], [0]>} : vector<2x8x8xbf16>, vector<2x8x32xbf16>, vector<2x8x32xf32> -> vector<2x8x32xf32>
    "tpu.trace_stop"() : () -> ()
    %238 = vector.shape_cast %237 : vector<2x8x32xf32> to vector<16x32xf32>
    %239 = vector.extract_strided_slice %214 {offsets = [0, 32], sizes = [16, 32], strides = [1, 1]} : vector<16x192xbf16> to vector<16x32xbf16>
    %240 = vector.shape_cast %239 : vector<16x32xbf16> to vector<2x8x32xbf16>
    %241 = vector.extract_strided_slice %214 {offsets = [0, 96], sizes = [16, 32], strides = [1, 1]} : vector<16x192xbf16> to vector<16x32xbf16>
    %242 = vector.shape_cast %241 : vector<16x32xbf16> to vector<2x8x32xbf16>
    %243 = vector.extract_strided_slice %214 {offsets = [0, 160], sizes = [16, 32], strides = [1, 1]} : vector<16x192xbf16> to vector<16x32xbf16>
    %244 = vector.shape_cast %243 : vector<16x32xbf16> to vector<2x8x32xbf16>
    "tpu.trace_start"() <{level = 10 : i32, message = "bqd,bkd->bqk"}> : () -> ()
    %cst_141 = arith.constant dense<0.000000e+00> : vector<2x8x8xf32>
    %245 = tpu.matmul %240, %242, %cst_141 {dimension_numbers = #tpu.dot_dimension_numbers<[2], [2], [1], [1], [0, 0, 0, 1, 1, 1], [0], [0]>} : vector<2x8x32xbf16>, vector<2x8x32xbf16>, vector<2x8x8xf32> -> vector<2x8x8xf32>
    "tpu.trace_stop"() : () -> ()
    %cst_142 = arith.constant 0.176776692 : f32
    %246 = vector.broadcast %cst_142 : f32 to vector<2x8x8xf32>
    %247 = arith.mulf %245, %246 : vector<2x8x8xf32>
    %248 = vector.broadcast %181 : vector<2x1x8xf32> to vector<2x8x8xf32>
    %249 = arith.addf %247, %248 : vector<2x8x8xf32>
    %cst_143 = arith.constant dense<0xFF800000> : vector<2x8xf32>
    %250 = vector.multi_reduction <maximumf>, %249, %cst_143 [2] : vector<2x8x8xf32> to vector<2x8xf32>
    %251 = vector.shape_cast %250 : vector<2x8xf32> to vector<2x8x1xf32>
    %252 = vector.broadcast %251 : vector<2x8x1xf32> to vector<2x8x8xf32>
    %253 = arith.subf %249, %252 : vector<2x8x8xf32>
    %254 = math.exp %253 : vector<2x8x8xf32>
    %cst_144 = arith.constant dense<0.000000e+00> : vector<2x8xf32>
    %255 = vector.multi_reduction <add>, %254, %cst_144 [2] : vector<2x8x8xf32> to vector<2x8xf32>
    %256 = vector.shape_cast %255 : vector<2x8xf32> to vector<2x8x1xf32>
    %257 = tpu.reciprocal %256 {approx = true} : vector<2x8x1xf32> -> vector<2x8x1xf32>
    %258 = vector.broadcast %257 : vector<2x8x1xf32> to vector<2x8x8xf32>
    %259 = arith.mulf %254, %258 : vector<2x8x8xf32>
    %260 = arith.truncf %259 : vector<2x8x8xf32> to vector<2x8x8xbf16>
    "tpu.trace_start"() <{level = 10 : i32, message = "bqk,bkd->bqd"}> : () -> ()
    %cst_145 = arith.constant dense<0.000000e+00> : vector<2x8x32xf32>
    %261 = tpu.matmul %260, %244, %cst_145 {dimension_numbers = #tpu.dot_dimension_numbers<[2], [1], [1], [2], [0, 0, 0, 1, 1, 2], [0], [0]>} : vector<2x8x8xbf16>, vector<2x8x32xbf16>, vector<2x8x32xf32> -> vector<2x8x32xf32>
    "tpu.trace_stop"() : () -> ()
    %262 = vector.shape_cast %261 : vector<2x8x32xf32> to vector<16x32xf32>
    %263 = tpu.concatenate %238, %262 in 1 : vector<16x32xf32>, vector<16x32xf32> -> vector<16x64xf32>
    %264 = arith.truncf %263 : vector<16x64xf32> to vector<16x64xbf16>
    %c0_146 = arith.constant 0 : index
    %c0_147 = arith.constant 0 : index
    %c0_148 = arith.constant 0 : index
    %265 = vector.load %arg5[%c0_146, %c0_147, %c0_148] : memref<2x64x64xbf16, #tpu.memory_space<vmem>>, vector<1x64x64xbf16>
    %266 = vector.shape_cast %265 : vector<1x64x64xbf16> to vector<64x64xbf16>
    %cst_149 = arith.constant dense<0.000000e+00> : vector<16x64xf32>
    %267 = tpu.matmul %264, %266, %cst_149 {dimension_numbers = #tpu.dot_dimension_numbers<[1], [0], [0], [1], [0, 0, 1, 1], [], []>} : vector<16x64xbf16>, vector<64x64xbf16>, vector<16x64xf32> -> vector<16x64xf32>
    %268 = vector.extract_strided_slice %176 {offsets = [3, 0], sizes = [1, 64], strides = [1, 1]} : vector<21x192xf32> to vector<1x64xf32>
    %269 = vector.broadcast %268 : vector<1x64xf32> to vector<16x64xf32>
    %270 = arith.addf %267, %269 : vector<16x64xf32>
    %271 = arith.addf %206, %270 : vector<16x64xf32>
    %272 = vector.extract_strided_slice %176 {offsets = [4, 0], sizes = [1, 64], strides = [1, 1]} : vector<21x192xf32> to vector<1x64xf32>
    %273 = vector.extract_strided_slice %176 {offsets = [5, 0], sizes = [1, 64], strides = [1, 1]} : vector<21x192xf32> to vector<1x64xf32>
    %cst_150 = arith.constant dense<0.000000e+00> : vector<16xf32>
    %274 = vector.multi_reduction <add>, %271, %cst_150 [1] : vector<16x64xf32> to vector<16xf32>
    %275 = vector.shape_cast %274 : vector<16xf32> to vector<16x1xf32>
    %cst_151 = arith.constant 6.400000e+01 : f32
    %276 = vector.broadcast %cst_151 : f32 to vector<16x1xf32>
    %277 = arith.divf %275, %276 : vector<16x1xf32>
    %278 = vector.broadcast %277 : vector<16x1xf32> to vector<16x64xf32>
    %279 = arith.subf %271, %278 : vector<16x64xf32>
    %280 = arith.mulf %279, %279 : vector<16x64xf32>
    %cst_152 = arith.constant dense<0.000000e+00> : vector<16xf32>
    %281 = vector.multi_reduction <add>, %280, %cst_152 [1] : vector<16x64xf32> to vector<16xf32>
    %282 = vector.shape_cast %281 : vector<16xf32> to vector<16x1xf32>
    %cst_153 = arith.constant 6.400000e+01 : f32
    %283 = vector.broadcast %cst_153 : f32 to vector<16x1xf32>
    %284 = arith.divf %282, %283 : vector<16x1xf32>
    %285 = vector.broadcast %277 : vector<16x1xf32> to vector<16x64xf32>
    %286 = arith.subf %271, %285 : vector<16x64xf32>
    %cst_154 = arith.constant 9.99999996E-13 : f32
    %287 = vector.broadcast %cst_154 : f32 to vector<16x1xf32>
    %288 = arith.addf %284, %287 : vector<16x1xf32>
    %289 = math.rsqrt %288 : vector<16x1xf32>
    %290 = vector.broadcast %289 : vector<16x1xf32> to vector<16x64xf32>
    %291 = arith.mulf %286, %290 : vector<16x64xf32>
    %292 = vector.broadcast %272 : vector<1x64xf32> to vector<16x64xf32>
    %293 = arith.mulf %291, %292 : vector<16x64xf32>
    %294 = vector.broadcast %273 : vector<1x64xf32> to vector<16x64xf32>
    %295 = arith.addf %293, %294 : vector<16x64xf32>
    %296 = arith.truncf %295 : vector<16x64xf32> to vector<16x64xbf16>
    %c0_155 = arith.constant 0 : index
    %c0_156 = arith.constant 0 : index
    %c0_157 = arith.constant 0 : index
    %297 = vector.load %arg6[%c0_155, %c0_156, %c0_157] : memref<2x64x128xbf16, #tpu.memory_space<vmem>>, vector<1x64x128xbf16>
    %298 = vector.shape_cast %297 : vector<1x64x128xbf16> to vector<64x128xbf16>
    %cst_158 = arith.constant dense<0.000000e+00> : vector<16x128xf32>
    %299 = tpu.matmul %296, %298, %cst_158 {dimension_numbers = #tpu.dot_dimension_numbers<[1], [0], [0], [1], [0, 0, 1, 1], [], []>} : vector<16x64xbf16>, vector<64x128xbf16>, vector<16x128xf32> -> vector<16x128xf32>
    %300 = vector.extract_strided_slice %176 {offsets = [6, 0], sizes = [1, 128], strides = [1, 1]} : vector<21x192xf32> to vector<1x128xf32>
    %301 = vector.broadcast %300 : vector<1x128xf32> to vector<16x128xf32>
    %302 = arith.addf %299, %301 : vector<16x128xf32>
    %303 = arith.mulf %302, %302 : vector<16x128xf32>
    %304 = arith.mulf %302, %303 : vector<16x128xf32>
    %cst_159 = arith.constant 4.471500e-02 : f32
    %305 = vector.broadcast %cst_159 : f32 to vector<16x128xf32>
    %306 = arith.mulf %305, %304 : vector<16x128xf32>
    %307 = arith.addf %302, %306 : vector<16x128xf32>
    %cst_160 = arith.constant 0.797884583 : f32
    %308 = vector.broadcast %cst_160 : f32 to vector<16x128xf32>
    %309 = arith.mulf %308, %307 : vector<16x128xf32>
    %310 = math.tanh %309 : vector<16x128xf32>
    %cst_161 = arith.constant 1.000000e+00 : f32
    %311 = vector.broadcast %cst_161 : f32 to vector<16x128xf32>
    %312 = arith.addf %311, %310 : vector<16x128xf32>
    %cst_162 = arith.constant 5.000000e-01 : f32
    %313 = vector.broadcast %cst_162 : f32 to vector<16x128xf32>
    %314 = arith.mulf %313, %312 : vector<16x128xf32>
    %315 = arith.mulf %302, %314 : vector<16x128xf32>
    %316 = arith.truncf %315 : vector<16x128xf32> to vector<16x128xbf16>
    %c0_163 = arith.constant 0 : index
    %c0_164 = arith.constant 0 : index
    %c0_165 = arith.constant 0 : index
    %317 = vector.load %arg7[%c0_163, %c0_164, %c0_165] : memref<2x128x64xbf16, #tpu.memory_space<vmem>>, vector<1x128x64xbf16>
    %318 = vector.shape_cast %317 : vector<1x128x64xbf16> to vector<128x64xbf16>
    %cst_166 = arith.constant dense<0.000000e+00> : vector<16x64xf32>
    %319 = tpu.matmul %316, %318, %cst_166 {dimension_numbers = #tpu.dot_dimension_numbers<[1], [0], [0], [1], [0, 0, 1, 1], [], []>} : vector<16x128xbf16>, vector<128x64xbf16>, vector<16x64xf32> -> vector<16x64xf32>
    %320 = vector.extract_strided_slice %176 {offsets = [7, 0], sizes = [1, 64], strides = [1, 1]} : vector<21x192xf32> to vector<1x64xf32>
    %321 = vector.broadcast %320 : vector<1x64xf32> to vector<16x64xf32>
    %322 = arith.addf %319, %321 : vector<16x64xf32>
    %323 = arith.addf %295, %322 : vector<16x64xf32>
    %324 = vector.extract_strided_slice %176 {offsets = [8, 0], sizes = [1, 64], strides = [1, 1]} : vector<21x192xf32> to vector<1x64xf32>
    %325 = vector.extract_strided_slice %176 {offsets = [9, 0], sizes = [1, 64], strides = [1, 1]} : vector<21x192xf32> to vector<1x64xf32>
    %cst_167 = arith.constant dense<0.000000e+00> : vector<16xf32>
    %326 = vector.multi_reduction <add>, %323, %cst_167 [1] : vector<16x64xf32> to vector<16xf32>
    %327 = vector.shape_cast %326 : vector<16xf32> to vector<16x1xf32>
    %cst_168 = arith.constant 6.400000e+01 : f32
    %328 = vector.broadcast %cst_168 : f32 to vector<16x1xf32>
    %329 = arith.divf %327, %328 : vector<16x1xf32>
    %330 = vector.broadcast %329 : vector<16x1xf32> to vector<16x64xf32>
    %331 = arith.subf %323, %330 : vector<16x64xf32>
    %332 = arith.mulf %331, %331 : vector<16x64xf32>
    %cst_169 = arith.constant dense<0.000000e+00> : vector<16xf32>
    %333 = vector.multi_reduction <add>, %332, %cst_169 [1] : vector<16x64xf32> to vector<16xf32>
    %334 = vector.shape_cast %333 : vector<16xf32> to vector<16x1xf32>
    %cst_170 = arith.constant 6.400000e+01 : f32
    %335 = vector.broadcast %cst_170 : f32 to vector<16x1xf32>
    %336 = arith.divf %334, %335 : vector<16x1xf32>
    %337 = vector.broadcast %329 : vector<16x1xf32> to vector<16x64xf32>
    %338 = arith.subf %323, %337 : vector<16x64xf32>
    %cst_171 = arith.constant 9.99999996E-13 : f32
    %339 = vector.broadcast %cst_171 : f32 to vector<16x1xf32>
    %340 = arith.addf %336, %339 : vector<16x1xf32>
    %341 = math.rsqrt %340 : vector<16x1xf32>
    %342 = vector.broadcast %341 : vector<16x1xf32> to vector<16x64xf32>
    %343 = arith.mulf %338, %342 : vector<16x64xf32>
    %344 = vector.broadcast %324 : vector<1x64xf32> to vector<16x64xf32>
    %345 = arith.mulf %343, %344 : vector<16x64xf32>
    %346 = vector.broadcast %325 : vector<1x64xf32> to vector<16x64xf32>
    %347 = arith.addf %345, %346 : vector<16x64xf32>
    %348 = arith.truncf %347 : vector<16x64xf32> to vector<16x64xbf16>
    %c1_172 = arith.constant 1 : index
    %c0_173 = arith.constant 0 : index
    %c0_174 = arith.constant 0 : index
    %349 = vector.load %arg4[%c1_172, %c0_173, %c0_174] : memref<2x64x192xbf16, #tpu.memory_space<vmem>>, vector<1x64x192xbf16>
    %350 = vector.shape_cast %349 : vector<1x64x192xbf16> to vector<64x192xbf16>
    %cst_175 = arith.constant dense<0.000000e+00> : vector<16x192xf32>
    %351 = tpu.matmul %348, %350, %cst_175 {dimension_numbers = #tpu.dot_dimension_numbers<[1], [0], [0], [1], [0, 0, 1, 1], [], []>} : vector<16x64xbf16>, vector<64x192xbf16>, vector<16x192xf32> -> vector<16x192xf32>
    %352 = vector.extract_strided_slice %176 {offsets = [10, 0], sizes = [1, 192], strides = [1, 1]} : vector<21x192xf32> to vector<1x192xf32>
    %353 = vector.broadcast %352 : vector<1x192xf32> to vector<16x192xf32>
    %354 = arith.addf %351, %353 : vector<16x192xf32>
    %355 = arith.truncf %354 : vector<16x192xf32> to vector<16x192xbf16>
    %356 = vector.extract_strided_slice %355 {offsets = [0, 0], sizes = [16, 32], strides = [1, 1]} : vector<16x192xbf16> to vector<16x32xbf16>
    %357 = vector.shape_cast %356 : vector<16x32xbf16> to vector<2x8x32xbf16>
    %358 = vector.extract_strided_slice %355 {offsets = [0, 64], sizes = [16, 32], strides = [1, 1]} : vector<16x192xbf16> to vector<16x32xbf16>
    %359 = vector.shape_cast %358 : vector<16x32xbf16> to vector<2x8x32xbf16>
    %360 = vector.extract_strided_slice %355 {offsets = [0, 128], sizes = [16, 32], strides = [1, 1]} : vector<16x192xbf16> to vector<16x32xbf16>
    %361 = vector.shape_cast %360 : vector<16x32xbf16> to vector<2x8x32xbf16>
    "tpu.trace_start"() <{level = 10 : i32, message = "bqd,bkd->bqk"}> : () -> ()
    %cst_176 = arith.constant dense<0.000000e+00> : vector<2x8x8xf32>
    %362 = tpu.matmul %357, %359, %cst_176 {dimension_numbers = #tpu.dot_dimension_numbers<[2], [2], [1], [1], [0, 0, 0, 1, 1, 1], [0], [0]>} : vector<2x8x32xbf16>, vector<2x8x32xbf16>, vector<2x8x8xf32> -> vector<2x8x8xf32>
    "tpu.trace_stop"() : () -> ()
    %cst_177 = arith.constant 0.176776692 : f32
    %363 = vector.broadcast %cst_177 : f32 to vector<2x8x8xf32>
    %364 = arith.mulf %362, %363 : vector<2x8x8xf32>
    %365 = vector.broadcast %181 : vector<2x1x8xf32> to vector<2x8x8xf32>
    %366 = arith.addf %364, %365 : vector<2x8x8xf32>
    %cst_178 = arith.constant dense<0xFF800000> : vector<2x8xf32>
    %367 = vector.multi_reduction <maximumf>, %366, %cst_178 [2] : vector<2x8x8xf32> to vector<2x8xf32>
    %368 = vector.shape_cast %367 : vector<2x8xf32> to vector<2x8x1xf32>
    %369 = vector.broadcast %368 : vector<2x8x1xf32> to vector<2x8x8xf32>
    %370 = arith.subf %366, %369 : vector<2x8x8xf32>
    %371 = math.exp %370 : vector<2x8x8xf32>
    %cst_179 = arith.constant dense<0.000000e+00> : vector<2x8xf32>
    %372 = vector.multi_reduction <add>, %371, %cst_179 [2] : vector<2x8x8xf32> to vector<2x8xf32>
    %373 = vector.shape_cast %372 : vector<2x8xf32> to vector<2x8x1xf32>
    %374 = tpu.reciprocal %373 {approx = true} : vector<2x8x1xf32> -> vector<2x8x1xf32>
    %375 = vector.broadcast %374 : vector<2x8x1xf32> to vector<2x8x8xf32>
    %376 = arith.mulf %371, %375 : vector<2x8x8xf32>
    %377 = arith.truncf %376 : vector<2x8x8xf32> to vector<2x8x8xbf16>
    "tpu.trace_start"() <{level = 10 : i32, message = "bqk,bkd->bqd"}> : () -> ()
    %cst_180 = arith.constant dense<0.000000e+00> : vector<2x8x32xf32>
    %378 = tpu.matmul %377, %361, %cst_180 {dimension_numbers = #tpu.dot_dimension_numbers<[2], [1], [1], [2], [0, 0, 0, 1, 1, 2], [0], [0]>} : vector<2x8x8xbf16>, vector<2x8x32xbf16>, vector<2x8x32xf32> -> vector<2x8x32xf32>
    "tpu.trace_stop"() : () -> ()
    %379 = vector.shape_cast %378 : vector<2x8x32xf32> to vector<16x32xf32>
    %380 = vector.extract_strided_slice %355 {offsets = [0, 32], sizes = [16, 32], strides = [1, 1]} : vector<16x192xbf16> to vector<16x32xbf16>
    %381 = vector.shape_cast %380 : vector<16x32xbf16> to vector<2x8x32xbf16>
    %382 = vector.extract_strided_slice %355 {offsets = [0, 96], sizes = [16, 32], strides = [1, 1]} : vector<16x192xbf16> to vector<16x32xbf16>
    %383 = vector.shape_cast %382 : vector<16x32xbf16> to vector<2x8x32xbf16>
    %384 = vector.extract_strided_slice %355 {offsets = [0, 160], sizes = [16, 32], strides = [1, 1]} : vector<16x192xbf16> to vector<16x32xbf16>
    %385 = vector.shape_cast %384 : vector<16x32xbf16> to vector<2x8x32xbf16>
    "tpu.trace_start"() <{level = 10 : i32, message = "bqd,bkd->bqk"}> : () -> ()
    %cst_181 = arith.constant dense<0.000000e+00> : vector<2x8x8xf32>
    %386 = tpu.matmul %381, %383, %cst_181 {dimension_numbers = #tpu.dot_dimension_numbers<[2], [2], [1], [1], [0, 0, 0, 1, 1, 1], [0], [0]>} : vector<2x8x32xbf16>, vector<2x8x32xbf16>, vector<2x8x8xf32> -> vector<2x8x8xf32>
    "tpu.trace_stop"() : () -> ()
    %cst_182 = arith.constant 0.176776692 : f32
    %387 = vector.broadcast %cst_182 : f32 to vector<2x8x8xf32>
    %388 = arith.mulf %386, %387 : vector<2x8x8xf32>
    %389 = vector.broadcast %181 : vector<2x1x8xf32> to vector<2x8x8xf32>
    %390 = arith.addf %388, %389 : vector<2x8x8xf32>
    %cst_183 = arith.constant dense<0xFF800000> : vector<2x8xf32>
    %391 = vector.multi_reduction <maximumf>, %390, %cst_183 [2] : vector<2x8x8xf32> to vector<2x8xf32>
    %392 = vector.shape_cast %391 : vector<2x8xf32> to vector<2x8x1xf32>
    %393 = vector.broadcast %392 : vector<2x8x1xf32> to vector<2x8x8xf32>
    %394 = arith.subf %390, %393 : vector<2x8x8xf32>
    %395 = math.exp %394 : vector<2x8x8xf32>
    %cst_184 = arith.constant dense<0.000000e+00> : vector<2x8xf32>
    %396 = vector.multi_reduction <add>, %395, %cst_184 [2] : vector<2x8x8xf32> to vector<2x8xf32>
    %397 = vector.shape_cast %396 : vector<2x8xf32> to vector<2x8x1xf32>
    %398 = tpu.reciprocal %397 {approx = true} : vector<2x8x1xf32> -> vector<2x8x1xf32>
    %399 = vector.broadcast %398 : vector<2x8x1xf32> to vector<2x8x8xf32>
    %400 = arith.mulf %395, %399 : vector<2x8x8xf32>
    %401 = arith.truncf %400 : vector<2x8x8xf32> to vector<2x8x8xbf16>
    "tpu.trace_start"() <{level = 10 : i32, message = "bqk,bkd->bqd"}> : () -> ()
    %cst_185 = arith.constant dense<0.000000e+00> : vector<2x8x32xf32>
    %402 = tpu.matmul %401, %385, %cst_185 {dimension_numbers = #tpu.dot_dimension_numbers<[2], [1], [1], [2], [0, 0, 0, 1, 1, 2], [0], [0]>} : vector<2x8x8xbf16>, vector<2x8x32xbf16>, vector<2x8x32xf32> -> vector<2x8x32xf32>
    "tpu.trace_stop"() : () -> ()
    %403 = vector.shape_cast %402 : vector<2x8x32xf32> to vector<16x32xf32>
    %404 = tpu.concatenate %379, %403 in 1 : vector<16x32xf32>, vector<16x32xf32> -> vector<16x64xf32>
    %405 = arith.truncf %404 : vector<16x64xf32> to vector<16x64xbf16>
    %c1_186 = arith.constant 1 : index
    %c0_187 = arith.constant 0 : index
    %c0_188 = arith.constant 0 : index
    %406 = vector.load %arg5[%c1_186, %c0_187, %c0_188] : memref<2x64x64xbf16, #tpu.memory_space<vmem>>, vector<1x64x64xbf16>
    %407 = vector.shape_cast %406 : vector<1x64x64xbf16> to vector<64x64xbf16>
    %cst_189 = arith.constant dense<0.000000e+00> : vector<16x64xf32>
    %408 = tpu.matmul %405, %407, %cst_189 {dimension_numbers = #tpu.dot_dimension_numbers<[1], [0], [0], [1], [0, 0, 1, 1], [], []>} : vector<16x64xbf16>, vector<64x64xbf16>, vector<16x64xf32> -> vector<16x64xf32>
    %409 = vector.extract_strided_slice %176 {offsets = [11, 0], sizes = [1, 64], strides = [1, 1]} : vector<21x192xf32> to vector<1x64xf32>
    %410 = vector.broadcast %409 : vector<1x64xf32> to vector<16x64xf32>
    %411 = arith.addf %408, %410 : vector<16x64xf32>
    %412 = arith.addf %347, %411 : vector<16x64xf32>
    %413 = vector.extract_strided_slice %176 {offsets = [12, 0], sizes = [1, 64], strides = [1, 1]} : vector<21x192xf32> to vector<1x64xf32>
    %414 = vector.extract_strided_slice %176 {offsets = [13, 0], sizes = [1, 64], strides = [1, 1]} : vector<21x192xf32> to vector<1x64xf32>
    %cst_190 = arith.constant dense<0.000000e+00> : vector<16xf32>
    %415 = vector.multi_reduction <add>, %412, %cst_190 [1] : vector<16x64xf32> to vector<16xf32>
    %416 = vector.shape_cast %415 : vector<16xf32> to vector<16x1xf32>
    %cst_191 = arith.constant 6.400000e+01 : f32
    %417 = vector.broadcast %cst_191 : f32 to vector<16x1xf32>
    %418 = arith.divf %416, %417 : vector<16x1xf32>
    %419 = vector.broadcast %418 : vector<16x1xf32> to vector<16x64xf32>
    %420 = arith.subf %412, %419 : vector<16x64xf32>
    %421 = arith.mulf %420, %420 : vector<16x64xf32>
    %cst_192 = arith.constant dense<0.000000e+00> : vector<16xf32>
    %422 = vector.multi_reduction <add>, %421, %cst_192 [1] : vector<16x64xf32> to vector<16xf32>
    %423 = vector.shape_cast %422 : vector<16xf32> to vector<16x1xf32>
    %cst_193 = arith.constant 6.400000e+01 : f32
    %424 = vector.broadcast %cst_193 : f32 to vector<16x1xf32>
    %425 = arith.divf %423, %424 : vector<16x1xf32>
    %426 = vector.broadcast %418 : vector<16x1xf32> to vector<16x64xf32>
    %427 = arith.subf %412, %426 : vector<16x64xf32>
    %cst_194 = arith.constant 9.99999996E-13 : f32
    %428 = vector.broadcast %cst_194 : f32 to vector<16x1xf32>
    %429 = arith.addf %425, %428 : vector<16x1xf32>
    %430 = math.rsqrt %429 : vector<16x1xf32>
    %431 = vector.broadcast %430 : vector<16x1xf32> to vector<16x64xf32>
    %432 = arith.mulf %427, %431 : vector<16x64xf32>
    %433 = vector.broadcast %413 : vector<1x64xf32> to vector<16x64xf32>
    %434 = arith.mulf %432, %433 : vector<16x64xf32>
    %435 = vector.broadcast %414 : vector<1x64xf32> to vector<16x64xf32>
    %436 = arith.addf %434, %435 : vector<16x64xf32>
    %437 = arith.truncf %436 : vector<16x64xf32> to vector<16x64xbf16>
    %c1_195 = arith.constant 1 : index
    %c0_196 = arith.constant 0 : index
    %c0_197 = arith.constant 0 : index
    %438 = vector.load %arg6[%c1_195, %c0_196, %c0_197] : memref<2x64x128xbf16, #tpu.memory_space<vmem>>, vector<1x64x128xbf16>
    %439 = vector.shape_cast %438 : vector<1x64x128xbf16> to vector<64x128xbf16>
    %cst_198 = arith.constant dense<0.000000e+00> : vector<16x128xf32>
    %440 = tpu.matmul %437, %439, %cst_198 {dimension_numbers = #tpu.dot_dimension_numbers<[1], [0], [0], [1], [0, 0, 1, 1], [], []>} : vector<16x64xbf16>, vector<64x128xbf16>, vector<16x128xf32> -> vector<16x128xf32>
    %441 = vector.extract_strided_slice %176 {offsets = [14, 0], sizes = [1, 128], strides = [1, 1]} : vector<21x192xf32> to vector<1x128xf32>
    %442 = vector.broadcast %441 : vector<1x128xf32> to vector<16x128xf32>
    %443 = arith.addf %440, %442 : vector<16x128xf32>
    %444 = arith.mulf %443, %443 : vector<16x128xf32>
    %445 = arith.mulf %443, %444 : vector<16x128xf32>
    %cst_199 = arith.constant 4.471500e-02 : f32
    %446 = vector.broadcast %cst_199 : f32 to vector<16x128xf32>
    %447 = arith.mulf %446, %445 : vector<16x128xf32>
    %448 = arith.addf %443, %447 : vector<16x128xf32>
    %cst_200 = arith.constant 0.797884583 : f32
    %449 = vector.broadcast %cst_200 : f32 to vector<16x128xf32>
    %450 = arith.mulf %449, %448 : vector<16x128xf32>
    %451 = math.tanh %450 : vector<16x128xf32>
    %cst_201 = arith.constant 1.000000e+00 : f32
    %452 = vector.broadcast %cst_201 : f32 to vector<16x128xf32>
    %453 = arith.addf %452, %451 : vector<16x128xf32>
    %cst_202 = arith.constant 5.000000e-01 : f32
    %454 = vector.broadcast %cst_202 : f32 to vector<16x128xf32>
    %455 = arith.mulf %454, %453 : vector<16x128xf32>
    %456 = arith.mulf %443, %455 : vector<16x128xf32>
    %457 = arith.truncf %456 : vector<16x128xf32> to vector<16x128xbf16>
    %c1_203 = arith.constant 1 : index
    %c0_204 = arith.constant 0 : index
    %c0_205 = arith.constant 0 : index
    %458 = vector.load %arg7[%c1_203, %c0_204, %c0_205] : memref<2x128x64xbf16, #tpu.memory_space<vmem>>, vector<1x128x64xbf16>
    %459 = vector.shape_cast %458 : vector<1x128x64xbf16> to vector<128x64xbf16>
    %cst_206 = arith.constant dense<0.000000e+00> : vector<16x64xf32>
    %460 = tpu.matmul %457, %459, %cst_206 {dimension_numbers = #tpu.dot_dimension_numbers<[1], [0], [0], [1], [0, 0, 1, 1], [], []>} : vector<16x128xbf16>, vector<128x64xbf16>, vector<16x64xf32> -> vector<16x64xf32>
    %461 = vector.extract_strided_slice %176 {offsets = [15, 0], sizes = [1, 64], strides = [1, 1]} : vector<21x192xf32> to vector<1x64xf32>
    %462 = vector.broadcast %461 : vector<1x64xf32> to vector<16x64xf32>
    %463 = arith.addf %460, %462 : vector<16x64xf32>
    %464 = arith.addf %436, %463 : vector<16x64xf32>
    %465 = vector.extract_strided_slice %176 {offsets = [16, 0], sizes = [1, 64], strides = [1, 1]} : vector<21x192xf32> to vector<1x64xf32>
    %466 = vector.extract_strided_slice %176 {offsets = [17, 0], sizes = [1, 64], strides = [1, 1]} : vector<21x192xf32> to vector<1x64xf32>
    %cst_207 = arith.constant dense<0.000000e+00> : vector<16xf32>
    %467 = vector.multi_reduction <add>, %464, %cst_207 [1] : vector<16x64xf32> to vector<16xf32>
    %468 = vector.shape_cast %467 : vector<16xf32> to vector<16x1xf32>
    %cst_208 = arith.constant 6.400000e+01 : f32
    %469 = vector.broadcast %cst_208 : f32 to vector<16x1xf32>
    %470 = arith.divf %468, %469 : vector<16x1xf32>
    %471 = vector.broadcast %470 : vector<16x1xf32> to vector<16x64xf32>
    %472 = arith.subf %464, %471 : vector<16x64xf32>
    %473 = arith.mulf %472, %472 : vector<16x64xf32>
    %cst_209 = arith.constant dense<0.000000e+00> : vector<16xf32>
    %474 = vector.multi_reduction <add>, %473, %cst_209 [1] : vector<16x64xf32> to vector<16xf32>
    %475 = vector.shape_cast %474 : vector<16xf32> to vector<16x1xf32>
    %cst_210 = arith.constant 6.400000e+01 : f32
    %476 = vector.broadcast %cst_210 : f32 to vector<16x1xf32>
    %477 = arith.divf %475, %476 : vector<16x1xf32>
    %478 = vector.broadcast %470 : vector<16x1xf32> to vector<16x64xf32>
    %479 = arith.subf %464, %478 : vector<16x64xf32>
    %cst_211 = arith.constant 9.99999996E-13 : f32
    %480 = vector.broadcast %cst_211 : f32 to vector<16x1xf32>
    %481 = arith.addf %477, %480 : vector<16x1xf32>
    %482 = math.rsqrt %481 : vector<16x1xf32>
    %483 = vector.broadcast %482 : vector<16x1xf32> to vector<16x64xf32>
    %484 = arith.mulf %479, %483 : vector<16x64xf32>
    %485 = vector.broadcast %465 : vector<1x64xf32> to vector<16x64xf32>
    %486 = arith.mulf %484, %485 : vector<16x64xf32>
    %487 = vector.broadcast %466 : vector<1x64xf32> to vector<16x64xf32>
    %488 = arith.addf %486, %487 : vector<16x64xf32>
    %489 = arith.truncf %488 : vector<16x64xf32> to vector<16x64xbf16>
    %c0_212 = arith.constant 0 : index
    %c0_213 = arith.constant 0 : index
    %490 = vector.load %arg8[%c0_212, %c0_213] : memref<64x128xbf16, #tpu.memory_space<vmem>>, vector<64x128xbf16>
    %cst_214 = arith.constant dense<0.000000e+00> : vector<16x128xf32>
    %491 = tpu.matmul %489, %490, %cst_214 {dimension_numbers = #tpu.dot_dimension_numbers<[1], [0], [0], [1], [0, 0, 1, 1], [], []>} : vector<16x64xbf16>, vector<64x128xbf16>, vector<16x128xf32> -> vector<16x128xf32>
    %492 = vector.extract_strided_slice %176 {offsets = [18, 0], sizes = [1, 128], strides = [1, 1]} : vector<21x192xf32> to vector<1x128xf32>
    %493 = vector.broadcast %492 : vector<1x128xf32> to vector<16x128xf32>
    %494 = arith.addf %491, %493 : vector<16x128xf32>
    %495 = vector.shape_cast %494 : vector<16x128xf32> to vector<2x8x128xf32>
    %c0_215 = arith.constant 0 : index
    %c0_216 = arith.constant 0 : index
    %496 = vector.load %arg9[%c0_215, %c0_216] : memref<32x128xbf16, #tpu.memory_space<vmem>>, vector<32x128xbf16>
    %497 = tpu.iota {dimensions = array<i32: 1>} : vector<2x128xi32>
    %c64_i32 = arith.constant 64 : i32
    %498 = vector.broadcast %c64_i32 : i32 to vector<2x128xi32>
    %499 = arith.cmpi sge, %497, %498 : vector<2x128xi32>
    %c96_i32 = arith.constant 96 : i32
    %500 = vector.broadcast %c96_i32 : i32 to vector<2x128xi32>
    %501 = arith.cmpi slt, %497, %500 : vector<2x128xi32>
    %502 = arith.andi %499, %501 : vector<2x128xi1>
    %cst_217 = arith.constant 1.000000e+00 : f32
    %cst_218 = arith.constant 5.000000e-01 : f32
    %503 = vector.broadcast %cst_217 : f32 to vector<2x128xf32>
    %504 = vector.broadcast %cst_218 : f32 to vector<2x128xf32>
    %505 = arith.select %502, %503, %504 : vector<2x128xi1>, vector<2x128xf32>
    %cst_219 = arith.constant 0.000000e+00 : f32
    %cst_220 = arith.constant 5.000000e-01 : f32
    %506 = vector.broadcast %cst_219 : f32 to vector<2x128xf32>
    %507 = vector.broadcast %cst_220 : f32 to vector<2x128xf32>
    %508 = arith.select %502, %506, %507 : vector<2x128xi1>, vector<2x128xf32>
    %cst_221 = arith.constant 0.000000e+00 : f32
    %509 = vector.broadcast %cst_221 : f32 to vector<2x32xf32>
    %cst_222 = arith.constant 0.000000e+00 : f32
    %510 = vector.broadcast %cst_222 : f32 to vector<2x32xf32>
    %511 = vector.extract_strided_slice %495 {offsets = [0, 0, 0], sizes = [2, 1, 128], strides = [1, 1, 1]} : vector<2x8x128xf32> to vector<2x1x128xf32>
    %512 = vector.shape_cast %511 : vector<2x1x128xf32> to vector<2x128xf32>
    %513 = arith.truncf %509 : vector<2x32xf32> to vector<2x32xbf16>
    %cst_223 = arith.constant dense<0.000000e+00> : vector<2x128xf32>
    %514 = tpu.matmul %513, %496, %cst_223 {dimension_numbers = #tpu.dot_dimension_numbers<[1], [0], [0], [1], [0, 0, 1, 1], [], []>} : vector<2x32xbf16>, vector<32x128xbf16>, vector<2x128xf32> -> vector<2x128xf32>
    %515 = arith.addf %512, %514 : vector<2x128xf32>
    %516 = math.tanh %515 : vector<2x128xf32>
    %517 = arith.mulf %516, %505 : vector<2x128xf32>
    %518 = arith.addf %517, %508 : vector<2x128xf32>
    %519 = vector.extract_strided_slice %518 {offsets = [0, 0], sizes = [2, 32], strides = [1, 1]} : vector<2x128xf32> to vector<2x32xf32>
    %520 = vector.extract_strided_slice %518 {offsets = [0, 32], sizes = [2, 32], strides = [1, 1]} : vector<2x128xf32> to vector<2x32xf32>
    %521 = vector.extract_strided_slice %518 {offsets = [0, 64], sizes = [2, 32], strides = [1, 1]} : vector<2x128xf32> to vector<2x32xf32>
    %522 = vector.extract_strided_slice %518 {offsets = [0, 96], sizes = [2, 32], strides = [1, 1]} : vector<2x128xf32> to vector<2x32xf32>
    %523 = arith.mulf %520, %510 : vector<2x32xf32>
    %524 = arith.mulf %519, %521 : vector<2x32xf32>
    %525 = arith.addf %523, %524 : vector<2x32xf32>
    %526 = math.tanh %525 : vector<2x32xf32>
    %527 = arith.mulf %522, %526 : vector<2x32xf32>
    %528 = vector.extract_strided_slice %495 {offsets = [0, 1, 0], sizes = [2, 1, 128], strides = [1, 1, 1]} : vector<2x8x128xf32> to vector<2x1x128xf32>
    %529 = vector.shape_cast %528 : vector<2x1x128xf32> to vector<2x128xf32>
    %530 = arith.truncf %527 : vector<2x32xf32> to vector<2x32xbf16>
    %cst_224 = arith.constant dense<0.000000e+00> : vector<2x128xf32>
    %531 = tpu.matmul %530, %496, %cst_224 {dimension_numbers = #tpu.dot_dimension_numbers<[1], [0], [0], [1], [0, 0, 1, 1], [], []>} : vector<2x32xbf16>, vector<32x128xbf16>, vector<2x128xf32> -> vector<2x128xf32>
    %532 = arith.addf %529, %531 : vector<2x128xf32>
    %533 = math.tanh %532 : vector<2x128xf32>
    %534 = arith.mulf %533, %505 : vector<2x128xf32>
    %535 = arith.addf %534, %508 : vector<2x128xf32>
    %536 = vector.extract_strided_slice %535 {offsets = [0, 0], sizes = [2, 32], strides = [1, 1]} : vector<2x128xf32> to vector<2x32xf32>
    %537 = vector.extract_strided_slice %535 {offsets = [0, 32], sizes = [2, 32], strides = [1, 1]} : vector<2x128xf32> to vector<2x32xf32>
    %538 = vector.extract_strided_slice %535 {offsets = [0, 64], sizes = [2, 32], strides = [1, 1]} : vector<2x128xf32> to vector<2x32xf32>
    %539 = vector.extract_strided_slice %535 {offsets = [0, 96], sizes = [2, 32], strides = [1, 1]} : vector<2x128xf32> to vector<2x32xf32>
    %540 = arith.mulf %537, %525 : vector<2x32xf32>
    %541 = arith.mulf %536, %538 : vector<2x32xf32>
    %542 = arith.addf %540, %541 : vector<2x32xf32>
    %543 = math.tanh %542 : vector<2x32xf32>
    %544 = arith.mulf %539, %543 : vector<2x32xf32>
    %545 = vector.extract_strided_slice %495 {offsets = [0, 2, 0], sizes = [2, 1, 128], strides = [1, 1, 1]} : vector<2x8x128xf32> to vector<2x1x128xf32>
    %546 = vector.shape_cast %545 : vector<2x1x128xf32> to vector<2x128xf32>
    %547 = arith.truncf %544 : vector<2x32xf32> to vector<2x32xbf16>
    %cst_225 = arith.constant dense<0.000000e+00> : vector<2x128xf32>
    %548 = tpu.matmul %547, %496, %cst_225 {dimension_numbers = #tpu.dot_dimension_numbers<[1], [0], [0], [1], [0, 0, 1, 1], [], []>} : vector<2x32xbf16>, vector<32x128xbf16>, vector<2x128xf32> -> vector<2x128xf32>
    %549 = arith.addf %546, %548 : vector<2x128xf32>
    %550 = math.tanh %549 : vector<2x128xf32>
    %551 = arith.mulf %550, %505 : vector<2x128xf32>
    %552 = arith.addf %551, %508 : vector<2x128xf32>
    %553 = vector.extract_strided_slice %552 {offsets = [0, 0], sizes = [2, 32], strides = [1, 1]} : vector<2x128xf32> to vector<2x32xf32>
    %554 = vector.extract_strided_slice %552 {offsets = [0, 32], sizes = [2, 32], strides = [1, 1]} : vector<2x128xf32> to vector<2x32xf32>
    %555 = vector.extract_strided_slice %552 {offsets = [0, 64], sizes = [2, 32], strides = [1, 1]} : vector<2x128xf32> to vector<2x32xf32>
    %556 = vector.extract_strided_slice %552 {offsets = [0, 96], sizes = [2, 32], strides = [1, 1]} : vector<2x128xf32> to vector<2x32xf32>
    %557 = arith.mulf %554, %542 : vector<2x32xf32>
    %558 = arith.mulf %553, %555 : vector<2x32xf32>
    %559 = arith.addf %557, %558 : vector<2x32xf32>
    %560 = math.tanh %559 : vector<2x32xf32>
    %561 = arith.mulf %556, %560 : vector<2x32xf32>
    %562 = vector.extract_strided_slice %495 {offsets = [0, 3, 0], sizes = [2, 1, 128], strides = [1, 1, 1]} : vector<2x8x128xf32> to vector<2x1x128xf32>
    %563 = vector.shape_cast %562 : vector<2x1x128xf32> to vector<2x128xf32>
    %564 = arith.truncf %561 : vector<2x32xf32> to vector<2x32xbf16>
    %cst_226 = arith.constant dense<0.000000e+00> : vector<2x128xf32>
    %565 = tpu.matmul %564, %496, %cst_226 {dimension_numbers = #tpu.dot_dimension_numbers<[1], [0], [0], [1], [0, 0, 1, 1], [], []>} : vector<2x32xbf16>, vector<32x128xbf16>, vector<2x128xf32> -> vector<2x128xf32>
    %566 = arith.addf %563, %565 : vector<2x128xf32>
    %567 = math.tanh %566 : vector<2x128xf32>
    %568 = arith.mulf %567, %505 : vector<2x128xf32>
    %569 = arith.addf %568, %508 : vector<2x128xf32>
    %570 = vector.extract_strided_slice %569 {offsets = [0, 0], sizes = [2, 32], strides = [1, 1]} : vector<2x128xf32> to vector<2x32xf32>
    %571 = vector.extract_strided_slice %569 {offsets = [0, 32], sizes = [2, 32], strides = [1, 1]} : vector<2x128xf32> to vector<2x32xf32>
    %572 = vector.extract_strided_slice %569 {offsets = [0, 64], sizes = [2, 32], strides = [1, 1]} : vector<2x128xf32> to vector<2x32xf32>
    %573 = vector.extract_strided_slice %569 {offsets = [0, 96], sizes = [2, 32], strides = [1, 1]} : vector<2x128xf32> to vector<2x32xf32>
    %574 = arith.mulf %571, %559 : vector<2x32xf32>
    %575 = arith.mulf %570, %572 : vector<2x32xf32>
    %576 = arith.addf %574, %575 : vector<2x32xf32>
    %577 = math.tanh %576 : vector<2x32xf32>
    %578 = arith.mulf %573, %577 : vector<2x32xf32>
    %579 = vector.extract_strided_slice %495 {offsets = [0, 4, 0], sizes = [2, 1, 128], strides = [1, 1, 1]} : vector<2x8x128xf32> to vector<2x1x128xf32>
    %580 = vector.shape_cast %579 : vector<2x1x128xf32> to vector<2x128xf32>
    %581 = arith.truncf %578 : vector<2x32xf32> to vector<2x32xbf16>
    %cst_227 = arith.constant dense<0.000000e+00> : vector<2x128xf32>
    %582 = tpu.matmul %581, %496, %cst_227 {dimension_numbers = #tpu.dot_dimension_numbers<[1], [0], [0], [1], [0, 0, 1, 1], [], []>} : vector<2x32xbf16>, vector<32x128xbf16>, vector<2x128xf32> -> vector<2x128xf32>
    %583 = arith.addf %580, %582 : vector<2x128xf32>
    %584 = math.tanh %583 : vector<2x128xf32>
    %585 = arith.mulf %584, %505 : vector<2x128xf32>
    %586 = arith.addf %585, %508 : vector<2x128xf32>
    %587 = vector.extract_strided_slice %586 {offsets = [0, 0], sizes = [2, 32], strides = [1, 1]} : vector<2x128xf32> to vector<2x32xf32>
    %588 = vector.extract_strided_slice %586 {offsets = [0, 32], sizes = [2, 32], strides = [1, 1]} : vector<2x128xf32> to vector<2x32xf32>
    %589 = vector.extract_strided_slice %586 {offsets = [0, 64], sizes = [2, 32], strides = [1, 1]} : vector<2x128xf32> to vector<2x32xf32>
    %590 = vector.extract_strided_slice %586 {offsets = [0, 96], sizes = [2, 32], strides = [1, 1]} : vector<2x128xf32> to vector<2x32xf32>
    %591 = arith.mulf %588, %576 : vector<2x32xf32>
    %592 = arith.mulf %587, %589 : vector<2x32xf32>
    %593 = arith.addf %591, %592 : vector<2x32xf32>
    %594 = math.tanh %593 : vector<2x32xf32>
    %595 = arith.mulf %590, %594 : vector<2x32xf32>
    %596 = vector.extract_strided_slice %495 {offsets = [0, 5, 0], sizes = [2, 1, 128], strides = [1, 1, 1]} : vector<2x8x128xf32> to vector<2x1x128xf32>
    %597 = vector.shape_cast %596 : vector<2x1x128xf32> to vector<2x128xf32>
    %598 = arith.truncf %595 : vector<2x32xf32> to vector<2x32xbf16>
    %cst_228 = arith.constant dense<0.000000e+00> : vector<2x128xf32>
    %599 = tpu.matmul %598, %496, %cst_228 {dimension_numbers = #tpu.dot_dimension_numbers<[1], [0], [0], [1], [0, 0, 1, 1], [], []>} : vector<2x32xbf16>, vector<32x128xbf16>, vector<2x128xf32> -> vector<2x128xf32>
    %600 = arith.addf %597, %599 : vector<2x128xf32>
    %601 = math.tanh %600 : vector<2x128xf32>
    %602 = arith.mulf %601, %505 : vector<2x128xf32>
    %603 = arith.addf %602, %508 : vector<2x128xf32>
    %604 = vector.extract_strided_slice %603 {offsets = [0, 0], sizes = [2, 32], strides = [1, 1]} : vector<2x128xf32> to vector<2x32xf32>
    %605 = vector.extract_strided_slice %603 {offsets = [0, 32], sizes = [2, 32], strides = [1, 1]} : vector<2x128xf32> to vector<2x32xf32>
    %606 = vector.extract_strided_slice %603 {offsets = [0, 64], sizes = [2, 32], strides = [1, 1]} : vector<2x128xf32> to vector<2x32xf32>
    %607 = vector.extract_strided_slice %603 {offsets = [0, 96], sizes = [2, 32], strides = [1, 1]} : vector<2x128xf32> to vector<2x32xf32>
    %608 = arith.mulf %605, %593 : vector<2x32xf32>
    %609 = arith.mulf %604, %606 : vector<2x32xf32>
    %610 = arith.addf %608, %609 : vector<2x32xf32>
    %611 = math.tanh %610 : vector<2x32xf32>
    %612 = arith.mulf %607, %611 : vector<2x32xf32>
    %613 = vector.extract_strided_slice %495 {offsets = [0, 6, 0], sizes = [2, 1, 128], strides = [1, 1, 1]} : vector<2x8x128xf32> to vector<2x1x128xf32>
    %614 = vector.shape_cast %613 : vector<2x1x128xf32> to vector<2x128xf32>
    %615 = arith.truncf %612 : vector<2x32xf32> to vector<2x32xbf16>
    %cst_229 = arith.constant dense<0.000000e+00> : vector<2x128xf32>
    %616 = tpu.matmul %615, %496, %cst_229 {dimension_numbers = #tpu.dot_dimension_numbers<[1], [0], [0], [1], [0, 0, 1, 1], [], []>} : vector<2x32xbf16>, vector<32x128xbf16>, vector<2x128xf32> -> vector<2x128xf32>
    %617 = arith.addf %614, %616 : vector<2x128xf32>
    %618 = math.tanh %617 : vector<2x128xf32>
    %619 = arith.mulf %618, %505 : vector<2x128xf32>
    %620 = arith.addf %619, %508 : vector<2x128xf32>
    %621 = vector.extract_strided_slice %620 {offsets = [0, 0], sizes = [2, 32], strides = [1, 1]} : vector<2x128xf32> to vector<2x32xf32>
    %622 = vector.extract_strided_slice %620 {offsets = [0, 32], sizes = [2, 32], strides = [1, 1]} : vector<2x128xf32> to vector<2x32xf32>
    %623 = vector.extract_strided_slice %620 {offsets = [0, 64], sizes = [2, 32], strides = [1, 1]} : vector<2x128xf32> to vector<2x32xf32>
    %624 = vector.extract_strided_slice %620 {offsets = [0, 96], sizes = [2, 32], strides = [1, 1]} : vector<2x128xf32> to vector<2x32xf32>
    %625 = arith.mulf %622, %610 : vector<2x32xf32>
    %626 = arith.mulf %621, %623 : vector<2x32xf32>
    %627 = arith.addf %625, %626 : vector<2x32xf32>
    %628 = math.tanh %627 : vector<2x32xf32>
    %629 = arith.mulf %624, %628 : vector<2x32xf32>
    %630 = vector.extract_strided_slice %495 {offsets = [0, 7, 0], sizes = [2, 1, 128], strides = [1, 1, 1]} : vector<2x8x128xf32> to vector<2x1x128xf32>
    %631 = vector.shape_cast %630 : vector<2x1x128xf32> to vector<2x128xf32>
    %632 = arith.truncf %629 : vector<2x32xf32> to vector<2x32xbf16>
    %cst_230 = arith.constant dense<0.000000e+00> : vector<2x128xf32>
    %633 = tpu.matmul %632, %496, %cst_230 {dimension_numbers = #tpu.dot_dimension_numbers<[1], [0], [0], [1], [0, 0, 1, 1], [], []>} : vector<2x32xbf16>, vector<32x128xbf16>, vector<2x128xf32> -> vector<2x128xf32>
    %634 = arith.addf %631, %633 : vector<2x128xf32>
    %635 = math.tanh %634 : vector<2x128xf32>
    %636 = arith.mulf %635, %505 : vector<2x128xf32>
    %637 = arith.addf %636, %508 : vector<2x128xf32>
    %638 = vector.extract_strided_slice %637 {offsets = [0, 0], sizes = [2, 32], strides = [1, 1]} : vector<2x128xf32> to vector<2x32xf32>
    %639 = vector.extract_strided_slice %637 {offsets = [0, 32], sizes = [2, 32], strides = [1, 1]} : vector<2x128xf32> to vector<2x32xf32>
    %640 = vector.extract_strided_slice %637 {offsets = [0, 64], sizes = [2, 32], strides = [1, 1]} : vector<2x128xf32> to vector<2x32xf32>
    %641 = vector.extract_strided_slice %637 {offsets = [0, 96], sizes = [2, 32], strides = [1, 1]} : vector<2x128xf32> to vector<2x32xf32>
    %642 = arith.mulf %639, %627 : vector<2x32xf32>
    %643 = arith.mulf %638, %640 : vector<2x32xf32>
    %644 = arith.addf %642, %643 : vector<2x32xf32>
    %645 = math.tanh %644 : vector<2x32xf32>
    %646 = arith.mulf %641, %645 : vector<2x32xf32>
    %647 = vector.extract_strided_slice %176 {offsets = [19, 0], sizes = [1, 32], strides = [1, 1]} : vector<21x192xf32> to vector<1x32xf32>
    %648 = vector.broadcast %647 : vector<1x32xf32> to vector<2x32xf32>
    %649 = arith.mulf %646, %648 : vector<2x32xf32>
    %cst_231 = arith.constant dense<0.000000e+00> : vector<2xf32>
    %650 = vector.multi_reduction <add>, %649, %cst_231 [1] : vector<2x32xf32> to vector<2xf32>
    %651 = vector.shape_cast %650 : vector<2xf32> to vector<2x1xf32>
    %652 = vector.extract_strided_slice %176 {offsets = [20, 0], sizes = [1, 1], strides = [1, 1]} : vector<21x192xf32> to vector<1x1xf32>
    %653 = vector.broadcast %652 : vector<1x1xf32> to vector<2x1xf32>
    %654 = arith.addf %651, %653 : vector<2x1xf32>
    %655 = arith.negf %654 : vector<2x1xf32>
    %656 = math.exp %655 : vector<2x1xf32>
    %cst_232 = arith.constant 1.000000e+00 : f32
    %657 = vector.broadcast %cst_232 : f32 to vector<2x1xf32>
    %658 = arith.addf %657, %656 : vector<2x1xf32>
    %659 = arith.divf %657, %658 : vector<2x1xf32>
    %c0_233 = arith.constant 0 : index
    %c0_234 = arith.constant 0 : index
    %660 = vector.load %arg11[%c0_233, %c0_234] : memref<2x1xf32, #tpu.memory_space<vmem>>, vector<2x1xf32>
    tpu.vector_store %arg11[%c0_233, %c0_234], %659 {strides = array<i32>} : memref<2x1xf32, #tpu.memory_space<vmem>>, vector<2x1xf32>,
    return
  }
}

</mosaic_0001>

<llo_original>
// kernel: bert_lstm_forward.1
$region0: #{bert_lstm_forward.1}
  #allocation0 [shape = 'u32[]', space=smem, size = 0x4, offset = 0x4, fixed_abs, tag = 'smem constant byte address 0x4 - core index']
  #allocation1 [shape = 'u32[72,128]{1,0:T(1,128)}', space=vmem, size = 0x9000, scoped, tag = 'internal scratch']
  #allocation2 [shape = 'f32[16,64]{1,0:T(8,128)}', space=vmem, size = 0x2000, scoped, tag = 'scratch operand']
  %s0 = inlined_call_operand.vmem [shape: s32[16], index: 0, kind: input, shape index: {}]
  %s1 = inlined_call_operand.vmem [shape: s32[16], index: 1, kind: input, shape index: {}]
  %s2 = inlined_call_operand.vmem [shape: f32[2,1,8], index: 2, kind: input, shape index: {}]
  %s3 = inlined_call_operand.vmem [shape: f32[82,64], index: 3, kind: input, shape index: {}]
  %s4 = inlined_call_operand.vmem [shape: bf16[2,64,192], index: 4, kind: input, shape index: {}]
  %s5 = inlined_call_operand.vmem [shape: bf16[2,64,64], index: 5, kind: input, shape index: {}]
  %s6 = inlined_call_operand.vmem [shape: bf16[2,64,128], index: 6, kind: input, shape index: {}]
  %s7 = inlined_call_operand.vmem [shape: bf16[2,128,64], index: 7, kind: input, shape index: {}]
  %s8 = inlined_call_operand.hbm [shape: bf16[64,128], index: 8, kind: input, shape index: {}]
  %s9 = inlined_call_operand.vmem [shape: bf16[32,128], index: 9, kind: input, shape index: {}]
  %s10 = inlined_call_operand.hbm [shape: f32[21,192], index: 10, kind: input, shape index: {}]
  %s11 = inlined_call_operand.vmem [shape: f32[2,1], index: 11, kind: output, shape index: {}]
  %s12 = sld [smem:[#allocation0]]
  $region70: #{bert_lstm_forward.1} parent=0
    _
  %s14 = ssub.s32 1, %s12
  %s15 = scalar_select 0, %s14, %s12
  $region1: #{bert_lstm_forward.1} parent=0
    #allocation3 [shape = 'u8[512]{0}', space=smem, size = 0x200, scoped, tag = 'input window, operand 0, single buffered']
    #allocation4 [shape = 's32[1]{0}', space=sflag, size = 0x4, scoped, tag = 'scoped memory for bert_lstm_forward.1']
    #allocation5 [shape = 's32[1]{0}', space=sflag, size = 0x4, scoped, tag = 'scoped memory for bert_lstm_forward.1']
    #allocation6 [shape = 'u8[512]{0}', space=smem, size = 0x200, scoped, tag = 'input window, operand 1, single buffered']
    #allocation7 [shape = 's32[1]{0}', space=sflag, size = 0x4, scoped, tag = 'scoped memory for bert_lstm_forward.1']
    #allocation8 [shape = 'u8[16384]{0}', space=vmem, size = 0x4000, scoped, tag = 'input window, operand 8, single buffered']
    #allocation9 [shape = 'u8[24576]{0}', space=vmem, size = 0x6000, scoped, tag = 'input window, operand 10, single buffered']
    #allocation10 [shape = 's32[1]{0}', space=sflag, size = 0x4, scoped, tag = 'scoped memory for bert_lstm_forward.1']
    %16 = vsyncpa [#allocation5], 0
    %17 = vsyncpa [#allocation7], 0
    %18 = vsyncpa [#allocation4], 0
    %19 = vsyncpa [#allocation10], 0
    // Predicated region
    $region2: #{bert_lstm_forward.1} parent=1 // pred_check
      _
    $region3: #{bert_lstm_forward.1} parent=1 // pred_check_branch
      %21 = sbr.rel (0) target = $region5
    $region4: #{bert_lstm_forward.1} parent=1 // pred_region
      %23 = vsyncadd [#allocation5], 0
      %s25 = sshll.u32 %s0, 4
      %s26 = int_to_ptr.vmem [resolvable:$true] %s25
      %28 = dma.vmem_to_smem %s26, 16, [#allocation3], [#allocation5]
    $region5: #{bert_lstm_forward.1} parent=1 // pred_fallthru
      _
    // Predicated region
    $region6: #{bert_lstm_forward.1} parent=1 // pred_check
      _
    $region7: #{bert_lstm_forward.1} parent=1 // pred_check_branch
      %30 = sbr.rel (0) target = $region9
    $region8: #{bert_lstm_forward.1} parent=1 // pred_region
      %32 = vsyncadd [#allocation7], 0
      %s34 = sshll.u32 %s1, 4
      %s35 = int_to_ptr.vmem [resolvable:$true] %s34
      %37 = dma.vmem_to_smem %s35, 16, [#allocation6], [#allocation7]
    $region9: #{bert_lstm_forward.1} parent=1 // pred_fallthru
      _
    // Predicated region
    $region10: #{bert_lstm_forward.1} parent=1 // pred_check
      _
    $region11: #{bert_lstm_forward.1} parent=1 // pred_check_branch
      %39 = sbr.rel (0) target = $region13
    $region12: #{bert_lstm_forward.1} parent=1 // pred_region
      _
    $region13: #{bert_lstm_forward.1} parent=1 // pred_fallthru
      _
    // Predicated region
    $region14: #{bert_lstm_forward.1} parent=1 // pred_check
      _
    $region15: #{bert_lstm_forward.1} parent=1 // pred_check_branch
      %41 = sbr.rel (0) target = $region17
    $region16: #{bert_lstm_forward.1} parent=1 // pred_region
      _
    $region17: #{bert_lstm_forward.1} parent=1 // pred_fallthru
      _
    // Predicated region
    $region18: #{bert_lstm_forward.1} parent=1 // pred_check
      _
    $region19: #{bert_lstm_forward.1} parent=1 // pred_check_branch
      %43 = sbr.rel (0) target = $region21
    $region20: #{bert_lstm_forward.1} parent=1 // pred_region
      _
    $region21: #{bert_lstm_forward.1} parent=1 // pred_fallthru
      _
    // Predicated region
    $region22: #{bert_lstm_forward.1} parent=1 // pred_check
      _
    $region23: #{bert_lstm_forward.1} parent=1 // pred_check_branch
      %45 = sbr.rel (0) target = $region25
    $region24: #{bert_lstm_forward.1} parent=1 // pred_region
      _
    $region25: #{bert_lstm_forward.1} parent=1 // pred_fallthru
      _
    // Predicated region
    $region26: #{bert_lstm_forward.1} parent=1 // pred_check
      _
    $region27: #{bert_lstm_forward.1} parent=1 // pred_check_branch
      %47 = sbr.rel (0) target = $region29
    $region28: #{bert_lstm_forward.1} parent=1 // pred_region
      _
    $region29: #{bert_lstm_forward.1} parent=1 // pred_fallthru
      _
    // Predicated region
    $region30: #{bert_lstm_forward.1} parent=1 // pred_check
      _
    $region31: #{bert_lstm_forward.1} parent=1 // pred_check_branch
      %49 = sbr.rel (0) target = $region33
    $region32: #{bert_lstm_forward.1} parent=1 // pred_region
      _
    $region33: #{bert_lstm_forward.1} parent=1 // pred_fallthru
      _
    // Predicated region
    $region34: #{bert_lstm_forward.1} parent=1 // pred_check
      _
    $region35: #{bert_lstm_forward.1} parent=1 // pred_check_branch
      %51 = sbr.rel (0) target = $region37
    $region36: #{bert_lstm_forward.1} parent=1 // pred_region
      %53 = vsyncadd [#allocation4], 0
      %s54 = sshll.u32 %s8, 4
      %s55 = int_to_ptr.hbm [resolvable:$true] %s54
      %s56 = sshll.u32 [#allocation8], 4
      %s57 = int_to_ptr.vmem [resolvable:$true] %s56
      %62 = dma.hbm_to_vmem [thread:$0]  %s55, 512, %s57, [#allocation4], 64, 64, 4
    $region37: #{bert_lstm_forward.1} parent=1 // pred_fallthru
      _
    // Predicated region
    $region38: #{bert_lstm_forward.1} parent=1 // pred_check
      _
    $region39: #{bert_lstm_forward.1} parent=1 // pred_check_branch
      %64 = sbr.rel (0) target = $region41
    $region40: #{bert_lstm_forward.1} parent=1 // pred_region
      _
    $region41: #{bert_lstm_forward.1} parent=1 // pred_fallthru
      _
    // Predicated region
    $region42: #{bert_lstm_forward.1} parent=1 // pred_check
      _
    $region43: #{bert_lstm_forward.1} parent=1 // pred_check_branch
      %66 = sbr.rel (0) target = $region45
    $region44: #{bert_lstm_forward.1} parent=1 // pred_region
      %68 = vsyncadd [#allocation10], 0
      %s69 = sshll.u32 %s10, 4
      %s70 = int_to_ptr.hbm [resolvable:$true] %s69
      %s71 = sshll.u32 [#allocation9], 4
      %s72 = int_to_ptr.vmem [resolvable:$true] %s71
      %77 = dma.hbm_to_vmem [thread:$0]  %s70, 768, %s72, [#allocation10], 256, 256, 16
    $region45: #{bert_lstm_forward.1} parent=1 // pred_fallthru
      _
    // Predicated region
    $region46: #{bert_lstm_forward.1} parent=1 // pred_check
      _
    $region47: #{bert_lstm_forward.1} parent=1 // pred_check_branch
      %79 = sbr.rel (0) target = $region49
    $region48: #{bert_lstm_forward.1} parent=1 // pred_region
      %81 = dma.done [#allocation5], 16
    $region49: #{bert_lstm_forward.1} parent=1 // pred_fallthru
      _
    // Predicated region
    $region50: #{bert_lstm_forward.1} parent=1 // pred_check
      _
    $region51: #{bert_lstm_forward.1} parent=1 // pred_check_branch
      %83 = sbr.rel (0) target = $region53
    $region52: #{bert_lstm_forward.1} parent=1 // pred_region
      %85 = dma.done [#allocation7], 16
    $region53: #{bert_lstm_forward.1} parent=1 // pred_fallthru
      _
    // Predicated region
    $region54: #{bert_lstm_forward.1} parent=1 // pred_check
      _
    $region55: #{bert_lstm_forward.1} parent=1 // pred_check_branch
      %87 = sbr.rel (0) target = $region57
    $region56: #{bert_lstm_forward.1} parent=1 // pred_region
      %89 = dma.done [#allocation4], 512
    $region57: #{bert_lstm_forward.1} parent=1 // pred_fallthru
      _
    // Predicated region
    $region58: #{bert_lstm_forward.1} parent=1 // pred_check
      _
    $region59: #{bert_lstm_forward.1} parent=1 // pred_check_branch
      %91 = sbr.rel (0) target = $region61
    $region60: #{bert_lstm_forward.1} parent=1 // pred_region
      %93 = dma.done [#allocation10], 768
    $region61: #{bert_lstm_forward.1} parent=1 // pred_fallthru
      _
    %94 = sfence
    %s96 = sld [smem:[#allocation3]]
    %s97 = sld [smem:[#allocation6]]
    %s98 = scalar_lea.vmem %s3, %s96
    %v99 = vld [vmem:[%s98] sm:$0x1]
    %v100 = vld [vmem:[%s3 + $0x40] sm:$0x1]
    %v101 = vadd.f32 %v99, %v100
    %s102 = sadd.s32 %s97, 80
    %s103 = scalar_lea.vmem %s3, %s102
    %v104 = vld [vmem:[%s103] sm:$0x1]
    %v105 = vadd.f32 %v101, %v104
    %vm106 = vcmask 516096
    %107 = vst.msk [vmem:[#allocation2] sm:$0x1] %vm106, %v105
    %s108 = sld [smem:[#allocation3 + $0x1]]
    %s109 = sld [smem:[#allocation6 + $0x1]]
    %s110 = scalar_lea.vmem %s3, %s108
    %v111 = vld [vmem:[%s110] sm:$0x1]
    %v112 = vld [vmem:[%s3 + $0x41] sm:$0x1]
    %v113 = vadd.f32 %v111, %v112
    %s114 = sadd.s32 %s109, 80
    %s115 = scalar_lea.vmem %s3, %s114
    %v116 = vld [vmem:[%s115] sm:$0x1]
    %v117 = vadd.f32 %v113, %v116
    %118 = vst.msk [vmem:[#allocation2 + $0x1] sm:$0x1] %vm106, %v117
    %s119 = sld [smem:[#allocation3 + $0x2]]
    %s120 = sld [smem:[#allocation6 + $0x2]]
    %s121 = scalar_lea.vmem %s3, %s119
    %v122 = vld [vmem:[%s121] sm:$0x1]
    %v123 = vld [vmem:[%s3 + $0x42] sm:$0x1]
    %v124 = vadd.f32 %v122, %v123
    %s125 = sadd.s32 %s120, 80
    %s126 = scalar_lea.vmem %s3, %s125
    %v127 = vld [vmem:[%s126] sm:$0x1]
    %v128 = vadd.f32 %v124, %v127
    %129 = vst.msk [vmem:[#allocation2 + $0x2] sm:$0x1] %vm106, %v128
    %s130 = sld [smem:[#allocation3 + $0x3]]
    %s131 = sld [smem:[#allocation6 + $0x3]]
    %s132 = scalar_lea.vmem %s3, %s130
    %v133 = vld [vmem:[%s132] sm:$0x1]
    %v134 = vld [vmem:[%s3 + $0x43] sm:$0x1]
    %v135 = vadd.f32 %v133, %v134
    %s136 = sadd.s32 %s131, 80
    %s137 = scalar_lea.vmem %s3, %s136
    %v138 = vld [vmem:[%s137] sm:$0x1]
    %v139 = vadd.f32 %v135, %v138
    %140 = vst.msk [vmem:[#allocation2 + $0x3] sm:$0x1] %vm106, %v139
    %s141 = sld [smem:[#allocation3 + $0x4]]
    %s142 = sld [smem:[#allocation6 + $0x4]]
    %s143 = scalar_lea.vmem %s3, %s141
    %v144 = vld [vmem:[%s143] sm:$0x1]
    %v145 = vld [vmem:[%s3 + $0x44] sm:$0x1]
    %v146 = vadd.f32 %v144, %v145
    %s147 = sadd.s32 %s142, 80
    %s148 = scalar_lea.vmem %s3, %s147
    %v149 = vld [vmem:[%s148] sm:$0x1]
    %v150 = vadd.f32 %v146, %v149
    %151 = vst.msk [vmem:[#allocation2 + $0x4] sm:$0x1] %vm106, %v150
    %s152 = sld [smem:[#allocation3 + $0x5]]
    %s153 = sld [smem:[#allocation6 + $0x5]]
    %s154 = scalar_lea.vmem %s3, %s152
    %v155 = vld [vmem:[%s154] sm:$0x1]
    %v156 = vld [vmem:[%s3 + $0x45] sm:$0x1]
    %v157 = vadd.f32 %v155, %v156
    %s158 = sadd.s32 %s153, 80
    %s159 = scalar_lea.vmem %s3, %s158
    %v160 = vld [vmem:[%s159] sm:$0x1]
    %v161 = vadd.f32 %v157, %v160
    %162 = vst.msk [vmem:[#allocation2 + $0x5] sm:$0x1] %vm106, %v161
    %s163 = sld [smem:[#allocation3 + $0x6]]
    %s164 = sld [smem:[#allocation6 + $0x6]]
    %s165 = scalar_lea.vmem %s3, %s163
    %v166 = vld [vmem:[%s165] sm:$0x1]
    %v167 = vld [vmem:[%s3 + $0x46] sm:$0x1]
    %v168 = vadd.f32 %v166, %v167
    %s169 = sadd.s32 %s164, 80
    %s170 = scalar_lea.vmem %s3, %s169
    %v171 = vld [vmem:[%s170] sm:$0x1]
    %v172 = vadd.f32 %v168, %v171
    %173 = vst.msk [vmem:[#allocation2 + $0x6] sm:$0x1] %vm106, %v172
    %s174 = sld [smem:[#allocation3 + $0x7]]
    %s175 = sld [smem:[#allocation6 + $0x7]]
    %s176 = scalar_lea.vmem %s3, %s174
    %v177 = vld [vmem:[%s176] sm:$0x1]
    %v178 = vld [vmem:[%s3 + $0x47] sm:$0x1]
    %v179 = vadd.f32 %v177, %v178
    %s180 = sadd.s32 %s175, 80
    %s181 = scalar_lea.vmem %s3, %s180
    %v182 = vld [vmem:[%s181] sm:$0x1]
    %v183 = vadd.f32 %v179, %v182
    %184 = vst.msk [vmem:[#allocation2 + $0x7] sm:$0x1] %vm106, %v183
    %s185 = sld [smem:[#allocation3 + $0x8]]
    %s186 = sld [smem:[#allocation6 + $0x8]]
    %s187 = scalar_lea.vmem %s3, %s185
    %v188 = vld [vmem:[%s187] sm:$0x1]
    %v189 = vld [vmem:[%s3 + $0x40] sm:$0x1]
    %v190 = vadd.f32 %v188, %v189
    %s191 = sadd.s32 %s186, 80
    %s192 = scalar_lea.vmem %s3, %s191
    %v193 = vld [vmem:[%s192] sm:$0x1]
    %v194 = vadd.f32 %v190, %v193
    %195 = vst.msk [vmem:[#allocation2 + $0x8] sm:$0x1] %vm106, %v194
    %s196 = sld [smem:[#allocation3 + $0x9]]
    %s197 = sld [smem:[#allocation6 + $0x9]]
    %s198 = scalar_lea.vmem %s3, %s196
    %v199 = vld [vmem:[%s198] sm:$0x1]
    %v200 = vld [vmem:[%s3 + $0x41] sm:$0x1]
    %v201 = vadd.f32 %v199, %v200
    %s202 = sadd.s32 %s197, 80
    %s203 = scalar_lea.vmem %s3, %s202
    %v204 = vld [vmem:[%s203] sm:$0x1]
    %v205 = vadd.f32 %v201, %v204
    %206 = vst.msk [vmem:[#allocation2 + $0x9] sm:$0x1] %vm106, %v205
    %s207 = sld [smem:[#allocation3 + $0xa]]
    %s208 = sld [smem:[#allocation6 + $0xa]]
    %s209 = scalar_lea.vmem %s3, %s207
    %v210 = vld [vmem:[%s209] sm:$0x1]
    %v211 = vld [vmem:[%s3 + $0x42] sm:$0x1]
    %v212 = vadd.f32 %v210, %v211
    %s213 = sadd.s32 %s208, 80
    %s214 = scalar_lea.vmem %s3, %s213
    %v215 = vld [vmem:[%s214] sm:$0x1]
    %v216 = vadd.f32 %v212, %v215
    %217 = vst.msk [vmem:[#allocation2 + $0xa] sm:$0x1] %vm106, %v216
    %s218 = sld [smem:[#allocation3 + $0xb]]
    %s219 = sld [smem:[#allocation6 + $0xb]]
    %s220 = scalar_lea.vmem %s3, %s218
    %v221 = vld [vmem:[%s220] sm:$0x1]
    %v222 = vld [vmem:[%s3 + $0x43] sm:$0x1]
    %v223 = vadd.f32 %v221, %v222
    %s224 = sadd.s32 %s219, 80
    %s225 = scalar_lea.vmem %s3, %s224
    %v226 = vld [vmem:[%s225] sm:$0x1]
    %v227 = vadd.f32 %v223, %v226
    %228 = vst.msk [vmem:[#allocation2 + $0xb] sm:$0x1] %vm106, %v227
    %s229 = sld [smem:[#allocation3 + $0xc]]
    %s230 = sld [smem:[#allocation6 + $0xc]]
    %s231 = scalar_lea.vmem %s3, %s229
    %v232 = vld [vmem:[%s231] sm:$0x1]
    %v233 = vld [vmem:[%s3 + $0x44] sm:$0x1]
    %v234 = vadd.f32 %v232, %v233
    %s235 = sadd.s32 %s230, 80
    %s236 = scalar_lea.vmem %s3, %s235
    %v237 = vld [vmem:[%s236] sm:$0x1]
    %v238 = vadd.f32 %v234, %v237
    %239 = vst.msk [vmem:[#allocation2 + $0xc] sm:$0x1] %vm106, %v238
    %s240 = sld [smem:[#allocation3 + $0xd]]
    %s241 = sld [smem:[#allocation6 + $0xd]]
    %s242 = scalar_lea.vmem %s3, %s240
    %v243 = vld [vmem:[%s242] sm:$0x1]
    %v244 = vld [vmem:[%s3 + $0x45] sm:$0x1]
    %v245 = vadd.f32 %v243, %v244
    %s246 = sadd.s32 %s241, 80
    %s247 = scalar_lea.vmem %s3, %s246
    %v248 = vld [vmem:[%s247] sm:$0x1]
    %v249 = vadd.f32 %v245, %v248
    %250 = vst.msk [vmem:[#allocation2 + $0xd] sm:$0x1] %vm106, %v249
    %s251 = sld [smem:[#allocation3 + $0xe]]
    %s252 = sld [smem:[#allocation6 + $0xe]]
    %s253 = scalar_lea.vmem %s3, %s251
    %v254 = vld [vmem:[%s253] sm:$0x1]
    %v255 = vld [vmem:[%s3 + $0x46] sm:$0x1]
    %v256 = vadd.f32 %v254, %v255
    %s257 = sadd.s32 %s252, 80
    %s258 = scalar_lea.vmem %s3, %s257
    %v259 = vld [vmem:[%s258] sm:$0x1]
    %v260 = vadd.f32 %v256, %v259
    %261 = vst.msk [vmem:[#allocation2 + $0xe] sm:$0x1] %vm106, %v260
    %s262 = sld [smem:[#allocation3 + $0xf]]
    %s263 = sld [smem:[#allocation6 + $0xf]]
    %s264 = scalar_lea.vmem %s3, %s262
    %v265 = vld [vmem:[%s264] sm:$0x1]
    %v266 = vld [vmem:[%s3 + $0x47] sm:$0x1]
    %v267 = vadd.f32 %v265, %v266
    %s268 = sadd.s32 %s263, 80
    %s269 = scalar_lea.vmem %s3, %s268
    %v270 = vld [vmem:[%s269] sm:$0x1]
    %v271 = vadd.f32 %v267, %v270
    %272 = vst.msk [vmem:[#allocation2 + $0xf] sm:$0x1] %vm106, %v271
    %v273 = vld [vmem:[#allocation9] sm:$0xff]
    %v274 = vld [vmem:[#allocation9 + $0x8] sm:$0xff]
    %v275 = vld [vmem:[#allocation9 + $0x10] sm:$0xff]
    %v276 = vld [vmem:[#allocation9 + $0x18] sm:$0xff]
    %v277 = vld [vmem:[#allocation9 + $0x20] sm:$0x1f]
    %v278 = vld [vmem:[%s2] sm:$0x1]
    %v279 = vld [vmem:[%s2 + $0x1] sm:$0x1]
    %v280 = vsub.f32 1.0, %v278
    %v281 = vsub.f32 1.0, %v279
    %v282 = vmul.f32 %v280, -10000.0
    %v283 = vmul.f32 %v281, -10000.0
    %v284 = vld [vmem:[#allocation2] sm:$0xff]
    %v285 = vld [vmem:[#allocation2 + $0x8] sm:$0xff]
    %vm286 = vcmask 523264
    %v287 = vsel %vm286, %v284, 0.0
    %288 = vadd.xlane.f32.xlu0 %v287
    %v289 = vpop.xlane.xlu0 %288
    %v290 = vsel %vm286, %v285, 0.0
    %291 = vadd.xlane.f32.xlu0 %v290
    %v292 = vpop.xlane.xlu0 %291
    %v293 = vrcp.pop 64.0
    %v294 = vmul.f32 64.0, %v293
    %v295 = vsub.f32 1.0, %v294
    %v296 = vmul.f32 %v293, %v295
    %v297 = vadd.f32 %v293, %v296
    %vm298 = vweird.f32 %v293
    %v299 = vsel %vm298, %v293, %v297
    %v300 = vmul.f32 %v289, %v299
    %v301 = vmul.f32 %v292, %v299
    %v302 = vsub.f32 %v284, %v300
    %v303 = vsub.f32 %v285, %v301
    %v304 = vmul.f32 %v302, %v302
    %v305 = vmul.f32 %v303, %v303
    %v306 = vsel %vm286, %v304, 0.0
    %307 = vadd.xlane.f32.xlu0 %v306
    %v308 = vpop.xlane.xlu0 %307
    %v309 = vsel %vm286, %v305, 0.0
    %310 = vadd.xlane.f32.xlu0 %v309
    %v311 = vpop.xlane.xlu0 %310
    %v312 = vmul.f32 %v308, %v299
    %v313 = vmul.f32 %v311, %v299
    %v314 = vadd.f32 %v312, 1e-12
    %v315 = vadd.f32 %v313, 1e-12
    %v316 = vrsqrt.pop %v314
    %v317 = vmul.f32 %v316, %v314
    %v318 = vmul.f32 %v317, %v316
    %v319 = vmul.f32 0.5, %v318
    %v320 = vsub.f32 1.5, %v319
    %v321 = vmul.f32 %v316, %v320
    %vm322 = vweird.f32 %v314
    %vm323 = vweird.f32 %v316
    %vm324 = vmor %vm322, %vm323
    %v325 = vsel %vm324, %v316, %v321
    %v326 = vrsqrt.pop %v315
    %v327 = vmul.f32 %v326, %v315
    %v328 = vmul.f32 %v327, %v326
    %v329 = vmul.f32 0.5, %v328
    %v330 = vsub.f32 1.5, %v329
    %v331 = vmul.f32 %v326, %v330
    %vm332 = vweird.f32 %v315
    %vm333 = vweird.f32 %v326
    %vm334 = vmor %vm332, %vm333
    %v335 = vsel %vm334, %v326, %v331
    %v336 = vmul.f32 %v302, %v325
    %v337 = vmul.f32 %v303, %v335
    %v338 = vperm.slane %v273, 0
    %v339 = vmul.f32 %v336, %v338
    %v340 = vmul.f32 %v337, %v338
    %v341 = vperm.slane %v273, 1
    %v342 = vadd.f32 %v339, %v341
    %v343 = vadd.f32 %v340, %v341
    %v344 = vpack.c.bf16 %v343, %v342
    %v345 = vld [vmem:[%s4] sm:$0xff]
    %v346 = vld [vmem:[%s4 + $0x8] sm:$0xff]
    %v347 = vld [vmem:[%s4 + $0x10] sm:$0xff]
    %v348 = vld [vmem:[%s4 + $0x18] sm:$0xff]
    %v349 = vld [vmem:[%s4 + $0x20] sm:$0xff]
    %v350 = vld [vmem:[%s4 + $0x28] sm:$0xff]
    %v351 = vld [vmem:[%s4 + $0x30] sm:$0xff]
    %v352 = vld [vmem:[%s4 + $0x38] sm:$0xff]
    %v353 = vperm.slane %v273, 2
    %v354 = vperm.slane %v274, 2
    %v363 = vunpack.c.l.b16 %v345
    %v364 = vunpack.c.h.b16 %v345
    %v365 = vunpack.c.l.b16 %v346
    %v366 = vunpack.c.h.b16 %v346
    %v367 = vunpack.c.l.b16 %v347
    %v368 = vunpack.c.h.b16 %v347
    %v369 = vunpack.c.l.b16 %v348
    %v370 = vunpack.c.h.b16 %v348
    %v371 = vunpack.c.l.b16 %v349
    %v372 = vunpack.c.h.b16 %v349
    %v373 = vunpack.c.l.b16 %v350
    %v374 = vunpack.c.h.b16 %v350
    %v375 = vunpack.c.l.b16 %v351
    %v376 = vunpack.c.h.b16 %v351
    %v377 = vunpack.c.l.b16 %v352
    %v378 = vunpack.c.h.b16 %v352
    %v379 = vpack.c.b16 %v365, %v363
    %v380 = vpack.c.b16 %v366, %v364
    %v381 = vpack.c.b16 %v369, %v367
    %v382 = vpack.c.b16 %v370, %v368
    %v383 = vpack.c.b16 %v373, %v371
    %v384 = vpack.c.b16 %v374, %v372
    %v385 = vpack.c.b16 %v377, %v375
    %v386 = vpack.c.b16 %v378, %v376
    %v396 = vsel %vm286, %v344, 0
    %398 = vmatpush.bf16.msra.mxu0 0
    %399 = vmatpush.bf16.msra.mxu0 0
    %400 = vmatpush.bf16.msra.mxu0 0
    %401 = vmatpush.bf16.msra.mxu0 0
    %402 = vmatpush.bf16.msra.mxu0 %v385
    %403 = vmatpush.bf16.msra.mxu0 %v383
    %404 = vmatpush.bf16.msra.mxu0 %v381
    %405 = vmatpush.bf16.msra.mxu0 %v379
    %406 = vmatmul.bf16.gmra.mxu0 %v396
    %v407 = vpop.f32.mrf.mxu0
    %v408 = vadd.f32 %v353, %v407
    %v409 = vpop.f32.mrf.mxu0
    %v410 = vadd.f32 %v353, %v409
    %411 = vdwg.mxu0
    %412 = vmatpush.bf16.msra.mxu0 0
    %413 = vmatpush.bf16.msra.mxu0 0
    %414 = vmatpush.bf16.msra.mxu0 0
    %415 = vmatpush.bf16.msra.mxu0 0
    %416 = vmatpush.bf16.msra.mxu0 %v386
    %417 = vmatpush.bf16.msra.mxu0 %v384
    %418 = vmatpush.bf16.msra.mxu0 %v382
    %419 = vmatpush.bf16.msra.mxu0 %v380
    %420 = vmatmul.bf16.gmra.mxu0 %v396
    %v421 = vpop.f32.mrf.mxu0
    %v422 = vadd.f32 %v354, %v421
    %v423 = vpop.f32.mrf.mxu0
    %v424 = vadd.f32 %v354, %v423
    %425 = vdwg.mxu0
    %v426 = vpack.c.bf16 %v422, %v408
    %v427 = vpack.c.bf16 %v424, %v410
    %v430 = vrot.slane %v426, 4
    %v431 = vrot.slane %v427, 4
    %v432 = vunpack.c.l.b16 %v426
    %v433 = vpack.c.b16 %v432, %v432
    %434 = vrot.lane.b32.xlu0 %v433, 64
    %v435 = vpop.permute.xlu0 %434
    %vm436 = vcmask 261120
    %v438 = vsel %vm436, %v426, 0
    %v441 = vsel %vm436, %v435, 0
    %443 = vmatpush.bf16.xpose.msra.mxu0 0
    %444 = vmatpush.bf16.xpose.msra.mxu0 0
    %445 = vmatpush.bf16.xpose.msra.mxu0 0
    %446 = vmatpush.bf16.xpose.msra.mxu0 0
    %447 = vmatpush.bf16.xpose.msra.mxu0 0
    %448 = vmatpush.bf16.xpose.msra.mxu0 0
    %449 = vmatpush.bf16.xpose.msra.mxu0 0
    %450 = vmatpush.bf16.xpose.msra.mxu0 %v441
    %451 = vmatmul.bf16.gmra.mxu0 %v438
    %v452 = vpop.f32.mrf.mxu0
    %v453 = vadd.f32 0.0, %v452
    %v454 = vpop.f32.mrf.mxu0
    %455 = vdwg.mxu0
    %v456 = vunpack.c.l.b16 %v427
    %v457 = vpack.c.b16 %v456, %v456
    %458 = vrot.lane.b32.xlu0 %v457, 64
    %v459 = vpop.permute.xlu0 %458
    %v461 = vsel %vm436, %v427, 0
    %v464 = vsel %vm436, %v459, 0
    %466 = vmatpush.bf16.xpose.msra.mxu0 0
    %467 = vmatpush.bf16.xpose.msra.mxu0 0
    %468 = vmatpush.bf16.xpose.msra.mxu0 0
    %469 = vmatpush.bf16.xpose.msra.mxu0 0
    %470 = vmatpush.bf16.xpose.msra.mxu0 0
    %471 = vmatpush.bf16.xpose.msra.mxu0 0
    %472 = vmatpush.bf16.xpose.msra.mxu0 0
    %473 = vmatpush.bf16.xpose.msra.mxu0 %v464
    %474 = vmatmul.bf16.gmra.mxu0 %v461
    %v475 = vpop.f32.mrf.mxu0
    %v476 = vadd.f32 0.0, %v475
    %v477 = vpop.f32.mrf.mxu0
    %478 = vdwg.mxu0
    %v479 = vmul.f32 %v453, 0.17677669
    %v480 = vmul.f32 %v476, 0.17677669
    %v483 = vperm.slane %v282, 0
    %v484 = vperm.slane %v283, 0
    %v487 = vadd.f32 %v479, %v483
    %v488 = vadd.f32 %v480, %v484
    %vm489 = vcmask 64512
    %v490 = vsel %vm489, %v487, -inf
    %491 = vmax.xlane.f32.xlu0 %v490
    %v492 = vpop.xlane.xlu0 %491
    %v493 = vsel %vm489, %v488, -inf
    %494 = vmax.xlane.f32.xlu0 %v493
    %v495 = vpop.xlane.xlu0 %494
    %v496 = vsub.f32 %v487, %v492
    %v497 = vsub.f32 %v488, %v495
    %v498 = vmul.f32 %v496, 1.442695
    %v499 = vpow.pop %v498
    %v500 = vmul.f32 %v497, 1.442695
    %v501 = vpow.pop %v500
    %v502 = vsel %vm489, %v499, 0.0
    %503 = vadd.xlane.f32.xlu0 %v502
    %v504 = vpop.xlane.xlu0 %503
    %v505 = vsel %vm489, %v501, 0.0
    %506 = vadd.xlane.f32.xlu0 %v505
    %v507 = vpop.xlane.xlu0 %506
    %v508 = vrcp.pop %v504
    %v509 = vrcp.pop %v507
    %v510 = vmul.f32 %v499, %v508
    %v511 = vmul.f32 %v501, %v509
    %v512 = vpack.c.bf16 %v510, %v510
    %v513 = vpack.c.bf16 %v511, %v511
    %v515 = vsel %vm489, %v512, 0
    %vm517 = vcmask 1043456
    %v519 = vsel %vm517, %v430, 0
    %521 = vmatpush.bf16.msra.mxu0 0
    %522 = vmatpush.bf16.msra.mxu0 0
    %523 = vmatpush.bf16.msra.mxu0 0
    %524 = vmatpush.bf16.msra.mxu0 0
    %525 = vmatpush.bf16.msra.mxu0 0
    %526 = vmatpush.bf16.msra.mxu0 0
    %527 = vmatpush.bf16.msra.mxu0 0
    %528 = vmatpush.bf16.msra.mxu0 %v519
    %529 = vmatmul.bf16.gmra.mxu0 %v515
    %v530 = vpop.f32.mrf.mxu0
    %v531 = vadd.f32 0.0, %v530
    %v532 = vpop.f32.mrf.mxu0
    %533 = vdwg.mxu0
    %v535 = vsel %vm489, %v513, 0
    %v538 = vsel %vm517, %v431, 0
    %540 = vmatpush.bf16.msra.mxu0 0
    %541 = vmatpush.bf16.msra.mxu0 0
    %542 = vmatpush.bf16.msra.mxu0 0
    %543 = vmatpush.bf16.msra.mxu0 0
    %544 = vmatpush.bf16.msra.mxu0 0
    %545 = vmatpush.bf16.msra.mxu0 0
    %546 = vmatpush.bf16.msra.mxu0 0
    %547 = vmatpush.bf16.msra.mxu0 %v538
    %548 = vmatmul.bf16.gmra.mxu0 %v535
    %v549 = vpop.f32.mrf.mxu0
    %v550 = vadd.f32 0.0, %v549
    %v551 = vpop.f32.mrf.mxu0
    %552 = vdwg.mxu0
    %553 = vrot.lane.b32.xlu0 %v426, 96
    %v554 = vpop.permute.xlu0 %553
    %555 = vrot.lane.b32.xlu0 %v427, 96
    %v556 = vpop.permute.xlu0 %555
    %v557 = vrot.slane %v554, 4
    %v558 = vrot.slane %v556, 4
    %559 = vrot.lane.b32.xlu0 %v433, 96
    %v560 = vpop.permute.xlu0 %559
    %561 = vrot.lane.b32.xlu0 %v433, 32
    %v562 = vpop.permute.xlu0 %561
    %v564 = vsel %vm436, %v560, 0
    %v567 = vsel %vm436, %v562, 0
    %569 = vmatpush.bf16.xpose.msra.mxu0 0
    %570 = vmatpush.bf16.xpose.msra.mxu0 0
    %571 = vmatpush.bf16.xpose.msra.mxu0 0
    %572 = vmatpush.bf16.xpose.msra.mxu0 0
    %573 = vmatpush.bf16.xpose.msra.mxu0 0
    %574 = vmatpush.bf16.xpose.msra.mxu0 0
    %575 = vmatpush.bf16.xpose.msra.mxu0 0
    %576 = vmatpush.bf16.xpose.msra.mxu0 %v567
    %577 = vmatmul.bf16.gmra.mxu0 %v564
    %v578 = vpop.f32.mrf.mxu0
    %v579 = vadd.f32 0.0, %v578
    %v580 = vpop.f32.mrf.mxu0
    %581 = vdwg.mxu0
    %582 = vrot.lane.b32.xlu0 %v457, 96
    %v583 = vpop.permute.xlu0 %582
    %584 = vrot.lane.b32.xlu0 %v457, 32
    %v585 = vpop.permute.xlu0 %584
    %v587 = vsel %vm436, %v583, 0
    %v590 = vsel %vm436, %v585, 0
    %592 = vmatpush.bf16.xpose.msra.mxu0 0
    %593 = vmatpush.bf16.xpose.msra.mxu0 0
    %594 = vmatpush.bf16.xpose.msra.mxu0 0
    %595 = vmatpush.bf16.xpose.msra.mxu0 0
    %596 = vmatpush.bf16.xpose.msra.mxu0 0
    %597 = vmatpush.bf16.xpose.msra.mxu0 0
    %598 = vmatpush.bf16.xpose.msra.mxu0 0
    %599 = vmatpush.bf16.xpose.msra.mxu0 %v590
    %600 = vmatmul.bf16.gmra.mxu0 %v587
    %v601 = vpop.f32.mrf.mxu0
    %v602 = vadd.f32 0.0, %v601
    %v603 = vpop.f32.mrf.mxu0
    %604 = vdwg.mxu0
    %v605 = vmul.f32 %v579, 0.17677669
    %v606 = vmul.f32 %v602, 0.17677669
    %v607 = vadd.f32 %v605, %v483
    %v608 = vadd.f32 %v606, %v484
    %v609 = vsel %vm489, %v607, -inf
    %610 = vmax.xlane.f32.xlu0 %v609
    %v611 = vpop.xlane.xlu0 %610
    %v612 = vsel %vm489, %v608, -inf
    %613 = vmax.xlane.f32.xlu0 %v612
    %v614 = vpop.xlane.xlu0 %613
    %v615 = vsub.f32 %v607, %v611
    %v616 = vsub.f32 %v608, %v614
    %v617 = vmul.f32 %v615, 1.442695
    %v618 = vpow.pop %v617
    %v619 = vmul.f32 %v616, 1.442695
    %v620 = vpow.pop %v619
    %v621 = vsel %vm489, %v618, 0.0
    %622 = vadd.xlane.f32.xlu0 %v621
    %v623 = vpop.xlane.xlu0 %622
    %v624 = vsel %vm489, %v620, 0.0
    %625 = vadd.xlane.f32.xlu0 %v624
    %v626 = vpop.xlane.xlu0 %625
    %v627 = vrcp.pop %v623
    %v628 = vrcp.pop %v626
    %v629 = vmul.f32 %v618, %v627
    %v630 = vmul.f32 %v620, %v628
    %v631 = vpack.c.bf16 %v629, %v629
    %v632 = vpack.c.bf16 %v630, %v630
    %v634 = vsel %vm489, %v631, 0
    %v637 = vsel %vm517, %v557, 0
    %639 = vmatpush.bf16.msra.mxu0 0
    %640 = vmatpush.bf16.msra.mxu0 0
    %641 = vmatpush.bf16.msra.mxu0 0
    %642 = vmatpush.bf16.msra.mxu0 0
    %643 = vmatpush.bf16.msra.mxu0 0
    %644 = vmatpush.bf16.msra.mxu0 0
    %645 = vmatpush.bf16.msra.mxu0 0
    %646 = vmatpush.bf16.msra.mxu0 %v637
    %647 = vmatmul.bf16.gmra.mxu0 %v634
    %v648 = vpop.f32.mrf.mxu0
    %v649 = vadd.f32 0.0, %v648
    %v650 = vpop.f32.mrf.mxu0
    %651 = vdwg.mxu0
    %v653 = vsel %vm489, %v632, 0
    %v656 = vsel %vm517, %v558, 0
    %658 = vmatpush.bf16.msra.mxu0 0
    %659 = vmatpush.bf16.msra.mxu0 0
    %660 = vmatpush.bf16.msra.mxu0 0
    %661 = vmatpush.bf16.msra.mxu0 0
    %662 = vmatpush.bf16.msra.mxu0 0
    %663 = vmatpush.bf16.msra.mxu0 0
    %664 = vmatpush.bf16.msra.mxu0 0
    %665 = vmatpush.bf16.msra.mxu0 %v656
    %666 = vmatmul.bf16.gmra.mxu0 %v653
    %v667 = vpop.f32.mrf.mxu0
    %v668 = vadd.f32 0.0, %v667
    %v669 = vpop.f32.mrf.mxu0
    %670 = vdwg.mxu0
    %673 = vrot.lane.b32.xlu0 %v649, 32
    %v674 = vpop.permute.xlu0 %673
    %675 = vrot.lane.b32.xlu0 %v668, 32
    %v676 = vpop.permute.xlu0 %675
    %v679 = vsel %vm436, %v531, %v674
    %v680 = vsel %vm436, %v550, %v676
    %v681 = vpack.c.bf16 %v680, %v679
    %v682 = vld [vmem:[%s5] sm:$0xf]
    %v683 = vld [vmem:[%s5 + $0x4] sm:$0xf]
    %v684 = vld [vmem:[%s5 + $0x8] sm:$0xf]
    %v685 = vld [vmem:[%s5 + $0xc] sm:$0xf]
    %v686 = vld [vmem:[%s5 + $0x10] sm:$0xf]
    %v687 = vld [vmem:[%s5 + $0x14] sm:$0xf]
    %v688 = vld [vmem:[%s5 + $0x18] sm:$0xf]
    %v689 = vld [vmem:[%s5 + $0x1c] sm:$0xf]
    %v690 = vperm.slane %v273, 3
    %v699 = vunpack.c.l.b16 %v682
    %v700 = vunpack.c.l.b16 %v683
    %v701 = vunpack.c.l.b16 %v684
    %v702 = vunpack.c.l.b16 %v685
    %v703 = vunpack.c.l.b16 %v686
    %v704 = vunpack.c.l.b16 %v687
    %v705 = vunpack.c.l.b16 %v688
    %v706 = vunpack.c.l.b16 %v689
    %v707 = vpack.c.b16 %v700, %v699
    %v708 = vpack.c.b16 %v702, %v701
    %v709 = vpack.c.b16 %v704, %v703
    %v710 = vpack.c.b16 %v706, %v705
    %v716 = vsel %vm286, %v681, 0
    %718 = vmatpush.bf16.msra.mxu0 0
    %719 = vmatpush.bf16.msra.mxu0 0
    %720 = vmatpush.bf16.msra.mxu0 0
    %721 = vmatpush.bf16.msra.mxu0 0
    %722 = vmatpush.bf16.msra.mxu0 %v710
    %723 = vmatpush.bf16.msra.mxu0 %v709
    %724 = vmatpush.bf16.msra.mxu0 %v708
    %725 = vmatpush.bf16.msra.mxu0 %v707
    %726 = vmatmul.bf16.gmra.mxu0 %v716
    %v727 = vpop.f32.mrf.mxu0
    %v728 = vadd.f32 %v690, %v727
    %v729 = vpop.f32.mrf.mxu0
    %v730 = vadd.f32 %v690, %v729
    %731 = vdwg.mxu0
    %v732 = vadd.f32 %v342, %v728
    %v733 = vadd.f32 %v343, %v730
    %v734 = vsel %vm286, %v732, 0.0
    %735 = vadd.xlane.f32.xlu0 %v734
    %v736 = vpop.xlane.xlu0 %735
    %v737 = vsel %vm286, %v733, 0.0
    %738 = vadd.xlane.f32.xlu0 %v737
    %v739 = vpop.xlane.xlu0 %738
    %v740 = vmul.f32 %v736, %v299
    %v741 = vmul.f32 %v739, %v299
    %v742 = vsub.f32 %v732, %v740
    %v743 = vsub.f32 %v733, %v741
    %v744 = vmul.f32 %v742, %v742
    %v745 = vmul.f32 %v743, %v743
    %v746 = vsel %vm286, %v744, 0.0
    %747 = vadd.xlane.f32.xlu0 %v746
    %v748 = vpop.xlane.xlu0 %747
    %v749 = vsel %vm286, %v745, 0.0
    %750 = vadd.xlane.f32.xlu0 %v749
    %v751 = vpop.xlane.xlu0 %750
    %v752 = vmul.f32 %v748, %v299
    %v753 = vmul.f32 %v751, %v299
    %v754 = vadd.f32 %v752, 1e-12
    %v755 = vadd.f32 %v753, 1e-12
    %v756 = vrsqrt.pop %v754
    %v757 = vmul.f32 %v756, %v754
    %v758 = vmul.f32 %v757, %v756
    %v759 = vmul.f32 0.5, %v758
    %v760 = vsub.f32 1.5, %v759
    %v761 = vmul.f32 %v756, %v760
    %vm762 = vweird.f32 %v754
    %vm763 = vweird.f32 %v756
    %vm764 = vmor %vm762, %vm763
    %v765 = vsel %vm764, %v756, %v761
    %v766 = vrsqrt.pop %v755
    %v767 = vmul.f32 %v766, %v755
    %v768 = vmul.f32 %v767, %v766
    %v769 = vmul.f32 0.5, %v768
    %v770 = vsub.f32 1.5, %v769
    %v771 = vmul.f32 %v766, %v770
    %vm772 = vweird.f32 %v755
    %vm773 = vweird.f32 %v766
    %vm774 = vmor %vm772, %vm773
    %v775 = vsel %vm774, %v766, %v771
    %v776 = vmul.f32 %v742, %v765
    %v777 = vmul.f32 %v743, %v775
    %v778 = vperm.slane %v273, 4
    %v779 = vmul.f32 %v776, %v778
    %v780 = vmul.f32 %v777, %v778
    %v781 = vperm.slane %v273, 5
    %v782 = vadd.f32 %v779, %v781
    %v783 = vadd.f32 %v780, %v781
    %v784 = vpack.c.bf16 %v783, %v782
    %v785 = vld [vmem:[%s6] sm:$0xf]
    %v786 = vld [vmem:[%s6 + $0x4] sm:$0xf]
    %v787 = vld [vmem:[%s6 + $0x8] sm:$0xf]
    %v788 = vld [vmem:[%s6 + $0xc] sm:$0xf]
    %v789 = vld [vmem:[%s6 + $0x10] sm:$0xf]
    %v790 = vld [vmem:[%s6 + $0x14] sm:$0xf]
    %v791 = vld [vmem:[%s6 + $0x18] sm:$0xf]
    %v792 = vld [vmem:[%s6 + $0x1c] sm:$0xf]
    %v793 = vperm.slane %v273, 6
    %v802 = vunpack.c.l.b16 %v785
    %v803 = vunpack.c.l.b16 %v786
    %v804 = vunpack.c.l.b16 %v787
    %v805 = vunpack.c.l.b16 %v788
    %v806 = vunpack.c.l.b16 %v789
    %v807 = vunpack.c.l.b16 %v790
    %v808 = vunpack.c.l.b16 %v791
    %v809 = vunpack.c.l.b16 %v792
    %v810 = vpack.c.b16 %v803, %v802
    %v811 = vpack.c.b16 %v805, %v804
    %v812 = vpack.c.b16 %v807, %v806
    %v813 = vpack.c.b16 %v809, %v808
    %v819 = vsel %vm286, %v784, 0
    %821 = vmatpush.bf16.msra.mxu0 0
    %822 = vmatpush.bf16.msra.mxu0 0
    %823 = vmatpush.bf16.msra.mxu0 0
    %824 = vmatpush.bf16.msra.mxu0 0
    %825 = vmatpush.bf16.msra.mxu0 %v813
    %826 = vmatpush.bf16.msra.mxu0 %v812
    %827 = vmatpush.bf16.msra.mxu0 %v811
    %828 = vmatpush.bf16.msra.mxu0 %v810
    %829 = vmatmul.bf16.gmra.mxu0 %v819
    %v830 = vpop.f32.mrf.mxu0
    %v831 = vadd.f32 %v793, %v830
    %v832 = vpop.f32.mrf.mxu0
    %v833 = vadd.f32 %v793, %v832
    %834 = vdwg.mxu0
    %v835 = vmul.f32 %v831, %v831
    %v836 = vmul.f32 %v833, %v833
    %v837 = vmul.f32 %v831, %v835
    %v838 = vmul.f32 %v833, %v836
    %v839 = vmul.f32 %v837, 0.044715
    %v840 = vmul.f32 %v838, 0.044715
    %v841 = vadd.f32 %v831, %v839
    %v842 = vadd.f32 %v833, %v840
    %v843 = vmul.f32 %v841, 0.7978846
    %v844 = vmul.f32 %v842, 0.7978846
    %v845 = vtanh.pop %v843
    %v846 = vtanh.pop %v844
    %v847 = vadd.f32 %v845, 1.0
    %v848 = vadd.f32 %v846, 1.0
    %v849 = vmul.f32 %v847, 0.5
    %v850 = vmul.f32 %v848, 0.5
    %v851 = vmul.f32 %v831, %v849
    %v852 = vmul.f32 %v833, %v850
    %v853 = vpack.c.bf16 %v852, %v851
    %v854 = vld [vmem:[%s7] sm:$0xf]
    %v855 = vld [vmem:[%s7 + $0x4] sm:$0xf]
    %v856 = vld [vmem:[%s7 + $0x8] sm:$0xf]
    %v857 = vld [vmem:[%s7 + $0xc] sm:$0xf]
    %v858 = vld [vmem:[%s7 + $0x10] sm:$0xf]
    %v859 = vld [vmem:[%s7 + $0x14] sm:$0xf]
    %v860 = vld [vmem:[%s7 + $0x18] sm:$0xf]
    %v861 = vld [vmem:[%s7 + $0x1c] sm:$0xf]
    %v862 = vld [vmem:[%s7 + $0x20] sm:$0xf]
    %v863 = vld [vmem:[%s7 + $0x24] sm:$0xf]
    %v864 = vld [vmem:[%s7 + $0x28] sm:$0xf]
    %v865 = vld [vmem:[%s7 + $0x2c] sm:$0xf]
    %v866 = vld [vmem:[%s7 + $0x30] sm:$0xf]
    %v867 = vld [vmem:[%s7 + $0x34] sm:$0xf]
    %v868 = vld [vmem:[%s7 + $0x38] sm:$0xf]
    %v869 = vld [vmem:[%s7 + $0x3c] sm:$0xf]
    %v870 = vperm.slane %v273, 7
    %v887 = vunpack.c.l.b16 %v854
    %v888 = vunpack.c.l.b16 %v855
    %v889 = vunpack.c.l.b16 %v856
    %v890 = vunpack.c.l.b16 %v857
    %v891 = vunpack.c.l.b16 %v858
    %v892 = vunpack.c.l.b16 %v859
    %v893 = vunpack.c.l.b16 %v860
    %v894 = vunpack.c.l.b16 %v861
    %v895 = vunpack.c.l.b16 %v862
    %v896 = vunpack.c.l.b16 %v863
    %v897 = vunpack.c.l.b16 %v864
    %v898 = vunpack.c.l.b16 %v865
    %v899 = vunpack.c.l.b16 %v866
    %v900 = vunpack.c.l.b16 %v867
    %v901 = vunpack.c.l.b16 %v868
    %v902 = vunpack.c.l.b16 %v869
    %v903 = vpack.c.b16 %v888, %v887
    %v904 = vpack.c.b16 %v890, %v889
    %v905 = vpack.c.b16 %v892, %v891
    %v906 = vpack.c.b16 %v894, %v893
    %v907 = vpack.c.b16 %v896, %v895
    %v908 = vpack.c.b16 %v898, %v897
    %v909 = vpack.c.b16 %v900, %v899
    %v910 = vpack.c.b16 %v902, %v901
    %919 = vmatpush.bf16.msra.mxu0 %v910
    %920 = vmatpush.bf16.msra.mxu0 %v909
    %921 = vmatpush.bf16.msra.mxu0 %v908
    %922 = vmatpush.bf16.msra.mxu0 %v907
    %923 = vmatpush.bf16.msra.mxu0 %v906
    %924 = vmatpush.bf16.msra.mxu0 %v905
    %925 = vmatpush.bf16.msra.mxu0 %v904
    %926 = vmatpush.bf16.msra.mxu0 %v903
    %927 = vmatmul.bf16.gmra.mxu0 %v853
    %v928 = vpop.f32.mrf.mxu0
    %v929 = vadd.f32 %v870, %v928
    %v930 = vpop.f32.mrf.mxu0
    %v931 = vadd.f32 %v870, %v930
    %932 = vdwg.mxu0
    %v933 = vadd.f32 %v782, %v929
    %v934 = vadd.f32 %v783, %v931
    %v935 = vsel %vm286, %v933, 0.0
    %936 = vadd.xlane.f32.xlu0 %v935
    %v937 = vpop.xlane.xlu0 %936
    %v938 = vsel %vm286, %v934, 0.0
    %939 = vadd.xlane.f32.xlu0 %v938
    %v940 = vpop.xlane.xlu0 %939
    %v941 = vmul.f32 %v937, %v299
    %v942 = vmul.f32 %v940, %v299
    %v943 = vsub.f32 %v933, %v941
    %v944 = vsub.f32 %v934, %v942
    %v945 = vmul.f32 %v943, %v943
    %v946 = vmul.f32 %v944, %v944
    %v947 = vsel %vm286, %v945, 0.0
    %948 = vadd.xlane.f32.xlu0 %v947
    %v949 = vpop.xlane.xlu0 %948
    %v950 = vsel %vm286, %v946, 0.0
    %951 = vadd.xlane.f32.xlu0 %v950
    %v952 = vpop.xlane.xlu0 %951
    %v953 = vmul.f32 %v949, %v299
    %v954 = vmul.f32 %v952, %v299
    %v955 = vadd.f32 %v953, 1e-12
    %v956 = vadd.f32 %v954, 1e-12
    %v957 = vrsqrt.pop %v955
    %v958 = vmul.f32 %v957, %v955
    %v959 = vmul.f32 %v958, %v957
    %v960 = vmul.f32 0.5, %v959
    %v961 = vsub.f32 1.5, %v960
    %v962 = vmul.f32 %v957, %v961
    %vm963 = vweird.f32 %v955
    %vm964 = vweird.f32 %v957
    %vm965 = vmor %vm963, %vm964
    %v966 = vsel %vm965, %v957, %v962
    %v967 = vrsqrt.pop %v956
    %v968 = vmul.f32 %v967, %v956
    %v969 = vmul.f32 %v968, %v967
    %v970 = vmul.f32 0.5, %v969
    %v971 = vsub.f32 1.5, %v970
    %v972 = vmul.f32 %v967, %v971
    %vm973 = vweird.f32 %v956
    %vm974 = vweird.f32 %v967
    %vm975 = vmor %vm973, %vm974
    %v976 = vsel %vm975, %v967, %v972
    %v977 = vmul.f32 %v943, %v966
    %v978 = vmul.f32 %v944, %v976
    %v979 = vperm.slane %v275, 0
    %v980 = vmul.f32 %v977, %v979
    %v981 = vmul.f32 %v978, %v979
    %v982 = vperm.slane %v275, 1
    %v983 = vadd.f32 %v980, %v982
    %v984 = vadd.f32 %v981, %v982
    %v985 = vpack.c.bf16 %v984, %v983
    %s986 = scalar_lea.vmem %s4, 64
    %v987 = vld [vmem:[%s986] sm:$0xff]
    %v988 = vld [vmem:[%s986 + $0x8] sm:$0xff]
    %v989 = vld [vmem:[%s986 + $0x10] sm:$0xff]
    %v990 = vld [vmem:[%s986 + $0x18] sm:$0xff]
    %v991 = vld [vmem:[%s986 + $0x20] sm:$0xff]
    %v992 = vld [vmem:[%s986 + $0x28] sm:$0xff]
    %v993 = vld [vmem:[%s986 + $0x30] sm:$0xff]
    %v994 = vld [vmem:[%s986 + $0x38] sm:$0xff]
    %v995 = vperm.slane %v275, 2
    %v996 = vperm.slane %v276, 2
    %v1005 = vunpack.c.l.b16 %v987
    %v1006 = vunpack.c.h.b16 %v987
    %v1007 = vunpack.c.l.b16 %v988
    %v1008 = vunpack.c.h.b16 %v988
    %v1009 = vunpack.c.l.b16 %v989
    %v1010 = vunpack.c.h.b16 %v989
    %v1011 = vunpack.c.l.b16 %v990
    %v1012 = vunpack.c.h.b16 %v990
    %v1013 = vunpack.c.l.b16 %v991
    %v1014 = vunpack.c.h.b16 %v991
    %v1015 = vunpack.c.l.b16 %v992
    %v1016 = vunpack.c.h.b16 %v992
    %v1017 = vunpack.c.l.b16 %v993
    %v1018 = vunpack.c.h.b16 %v993
    %v1019 = vunpack.c.l.b16 %v994
    %v1020 = vunpack.c.h.b16 %v994
    %v1021 = vpack.c.b16 %v1007, %v1005
    %v1022 = vpack.c.b16 %v1008, %v1006
    %v1023 = vpack.c.b16 %v1011, %v1009
    %v1024 = vpack.c.b16 %v1012, %v1010
    %v1025 = vpack.c.b16 %v1015, %v1013
    %v1026 = vpack.c.b16 %v1016, %v1014
    %v1027 = vpack.c.b16 %v1019, %v1017
    %v1028 = vpack.c.b16 %v1020, %v1018
    %v1038 = vsel %vm286, %v985, 0
    %1040 = vmatpush.bf16.msra.mxu0 0
    %1041 = vmatpush.bf16.msra.mxu0 0
    %1042 = vmatpush.bf16.msra.mxu0 0
    %1043 = vmatpush.bf16.msra.mxu0 0
    %1044 = vmatpush.bf16.msra.mxu0 %v1027
    %1045 = vmatpush.bf16.msra.mxu0 %v1025
    %1046 = vmatpush.bf16.msra.mxu0 %v1023
    %1047 = vmatpush.bf16.msra.mxu0 %v1021
    %1048 = vmatmul.bf16.gmra.mxu0 %v1038
    %v1049 = vpop.f32.mrf.mxu0
    %v1050 = vadd.f32 %v995, %v1049
    %v1051 = vpop.f32.mrf.mxu0
    %v1052 = vadd.f32 %v995, %v1051
    %1053 = vdwg.mxu0
    %1054 = vmatpush.bf16.msra.mxu0 0
    %1055 = vmatpush.bf16.msra.mxu0 0
    %1056 = vmatpush.bf16.msra.mxu0 0
    %1057 = vmatpush.bf16.msra.mxu0 0
    %1058 = vmatpush.bf16.msra.mxu0 %v1028
    %1059 = vmatpush.bf16.msra.mxu0 %v1026
    %1060 = vmatpush.bf16.msra.mxu0 %v1024
    %1061 = vmatpush.bf16.msra.mxu0 %v1022
    %1062 = vmatmul.bf16.gmra.mxu0 %v1038
    %v1063 = vpop.f32.mrf.mxu0
    %v1064 = vadd.f32 %v996, %v1063
    %v1065 = vpop.f32.mrf.mxu0
    %v1066 = vadd.f32 %v996, %v1065
    %1067 = vdwg.mxu0
    %v1068 = vpack.c.bf16 %v1064, %v1050
    %v1069 = vpack.c.bf16 %v1066, %v1052
    %v1072 = vrot.slane %v1068, 4
    %v1073 = vrot.slane %v1069, 4
    %v1074 = vunpack.c.l.b16 %v1068
    %v1075 = vpack.c.b16 %v1074, %v1074
    %1076 = vrot.lane.b32.xlu0 %v1075, 64
    %v1077 = vpop.permute.xlu0 %1076
    %v1079 = vsel %vm436, %v1068, 0
    %v1082 = vsel %vm436, %v1077, 0
    %1084 = vmatpush.bf16.xpose.msra.mxu0 0
    %1085 = vmatpush.bf16.xpose.msra.mxu0 0
    %1086 = vmatpush.bf16.xpose.msra.mxu0 0
    %1087 = vmatpush.bf16.xpose.msra.mxu0 0
    %1088 = vmatpush.bf16.xpose.msra.mxu0 0
    %1089 = vmatpush.bf16.xpose.msra.mxu0 0
    %1090 = vmatpush.bf16.xpose.msra.mxu0 0
    %1091 = vmatpush.bf16.xpose.msra.mxu0 %v1082
    %1092 = vmatmul.bf16.gmra.mxu0 %v1079
    %v1093 = vpop.f32.mrf.mxu0
    %v1094 = vadd.f32 0.0, %v1093
    %v1095 = vpop.f32.mrf.mxu0
    %1096 = vdwg.mxu0
    %v1097 = vunpack.c.l.b16 %v1069
    %v1098 = vpack.c.b16 %v1097, %v1097
    %1099 = vrot.lane.b32.xlu0 %v1098, 64
    %v1100 = vpop.permute.xlu0 %1099
    %v1102 = vsel %vm436, %v1069, 0
    %v1105 = vsel %vm436, %v1100, 0
    %1107 = vmatpush.bf16.xpose.msra.mxu0 0
    %1108 = vmatpush.bf16.xpose.msra.mxu0 0
    %1109 = vmatpush.bf16.xpose.msra.mxu0 0
    %1110 = vmatpush.bf16.xpose.msra.mxu0 0
    %1111 = vmatpush.bf16.xpose.msra.mxu0 0
    %1112 = vmatpush.bf16.xpose.msra.mxu0 0
    %1113 = vmatpush.bf16.xpose.msra.mxu0 0
    %1114 = vmatpush.bf16.xpose.msra.mxu0 %v1105
    %1115 = vmatmul.bf16.gmra.mxu0 %v1102
    %v1116 = vpop.f32.mrf.mxu0
    %v1117 = vadd.f32 0.0, %v1116
    %v1118 = vpop.f32.mrf.mxu0
    %1119 = vdwg.mxu0
    %v1120 = vmul.f32 %v1094, 0.17677669
    %v1121 = vmul.f32 %v1117, 0.17677669
    %v1122 = vadd.f32 %v1120, %v483
    %v1123 = vadd.f32 %v1121, %v484
    %v1124 = vsel %vm489, %v1122, -inf
    %1125 = vmax.xlane.f32.xlu0 %v1124
    %v1126 = vpop.xlane.xlu0 %1125
    %v1127 = vsel %vm489, %v1123, -inf
    %1128 = vmax.xlane.f32.xlu0 %v1127
    %v1129 = vpop.xlane.xlu0 %1128
    %v1130 = vsub.f32 %v1122, %v1126
    %v1131 = vsub.f32 %v1123, %v1129
    %v1132 = vmul.f32 %v1130, 1.442695
    %v1133 = vpow.pop %v1132
    %v1134 = vmul.f32 %v1131, 1.442695
    %v1135 = vpow.pop %v1134
    %v1136 = vsel %vm489, %v1133, 0.0
    %1137 = vadd.xlane.f32.xlu0 %v1136
    %v1138 = vpop.xlane.xlu0 %1137
    %v1139 = vsel %vm489, %v1135, 0.0
    %1140 = vadd.xlane.f32.xlu0 %v1139
    %v1141 = vpop.xlane.xlu0 %1140
    %v1142 = vrcp.pop %v1138
    %v1143 = vrcp.pop %v1141
    %v1144 = vmul.f32 %v1133, %v1142
    %v1145 = vmul.f32 %v1135, %v1143
    %v1146 = vpack.c.bf16 %v1144, %v1144
    %v1147 = vpack.c.bf16 %v1145, %v1145
    %v1149 = vsel %vm489, %v1146, 0
    %v1152 = vsel %vm517, %v1072, 0
    %1154 = vmatpush.bf16.msra.mxu0 0
    %1155 = vmatpush.bf16.msra.mxu0 0
    %1156 = vmatpush.bf16.msra.mxu0 0
    %1157 = vmatpush.bf16.msra.mxu0 0
    %1158 = vmatpush.bf16.msra.mxu0 0
    %1159 = vmatpush.bf16.msra.mxu0 0
    %1160 = vmatpush.bf16.msra.mxu0 0
    %1161 = vmatpush.bf16.msra.mxu0 %v1152
    %1162 = vmatmul.bf16.gmra.mxu0 %v1149
    %v1163 = vpop.f32.mrf.mxu0
    %v1164 = vadd.f32 0.0, %v1163
    %v1165 = vpop.f32.mrf.mxu0
    %1166 = vdwg.mxu0
    %v1168 = vsel %vm489, %v1147, 0
    %v1171 = vsel %vm517, %v1073, 0
    %1173 = vmatpush.bf16.msra.mxu0 0
    %1174 = vmatpush.bf16.msra.mxu0 0
    %1175 = vmatpush.bf16.msra.mxu0 0
    %1176 = vmatpush.bf16.msra.mxu0 0
    %1177 = vmatpush.bf16.msra.mxu0 0
    %1178 = vmatpush.bf16.msra.mxu0 0
    %1179 = vmatpush.bf16.msra.mxu0 0
    %1180 = vmatpush.bf16.msra.mxu0 %v1171
    %1181 = vmatmul.bf16.gmra.mxu0 %v1168
    %v1182 = vpop.f32.mrf.mxu0
    %v1183 = vadd.f32 0.0, %v1182
    %v1184 = vpop.f32.mrf.mxu0
    %1185 = vdwg.mxu0
    %1186 = vrot.lane.b32.xlu0 %v1068, 96
    %v1187 = vpop.permute.xlu0 %1186
    %1188 = vrot.lane.b32.xlu0 %v1069, 96
    %v1189 = vpop.permute.xlu0 %1188
    %v1190 = vrot.slane %v1187, 4
    %v1191 = vrot.slane %v1189, 4
    %1192 = vrot.lane.b32.xlu0 %v1075, 96
    %v1193 = vpop.permute.xlu0 %1192
    %1194 = vrot.lane.b32.xlu0 %v1075, 32
    %v1195 = vpop.permute.xlu0 %1194
    %v1197 = vsel %vm436, %v1193, 0
    %v1200 = vsel %vm436, %v1195, 0
    %1202 = vmatpush.bf16.xpose.msra.mxu0 0
    %1203 = vmatpush.bf16.xpose.msra.mxu0 0
    %1204 = vmatpush.bf16.xpose.msra.mxu0 0
    %1205 = vmatpush.bf16.xpose.msra.mxu0 0
    %1206 = vmatpush.bf16.xpose.msra.mxu0 0
    %1207 = vmatpush.bf16.xpose.msra.mxu0 0
    %1208 = vmatpush.bf16.xpose.msra.mxu0 0
    %1209 = vmatpush.bf16.xpose.msra.mxu0 %v1200
    %1210 = vmatmul.bf16.gmra.mxu0 %v1197
    %v1211 = vpop.f32.mrf.mxu0
    %v1212 = vadd.f32 0.0, %v1211
    %v1213 = vpop.f32.mrf.mxu0
    %1214 = vdwg.mxu0
    %1215 = vrot.lane.b32.xlu0 %v1098, 96
    %v1216 = vpop.permute.xlu0 %1215
    %1217 = vrot.lane.b32.xlu0 %v1098, 32
    %v1218 = vpop.permute.xlu0 %1217
    %v1220 = vsel %vm436, %v1216, 0
    %v1223 = vsel %vm436, %v1218, 0
    %1225 = vmatpush.bf16.xpose.msra.mxu0 0
    %1226 = vmatpush.bf16.xpose.msra.mxu0 0
    %1227 = vmatpush.bf16.xpose.msra.mxu0 0
    %1228 = vmatpush.bf16.xpose.msra.mxu0 0
    %1229 = vmatpush.bf16.xpose.msra.mxu0 0
    %1230 = vmatpush.bf16.xpose.msra.mxu0 0
    %1231 = vmatpush.bf16.xpose.msra.mxu0 0
    %1232 = vmatpush.bf16.xpose.msra.mxu0 %v1223
    %1233 = vmatmul.bf16.gmra.mxu0 %v1220
    %v1234 = vpop.f32.mrf.mxu0
    %v1235 = vadd.f32 0.0, %v1234
    %v1236 = vpop.f32.mrf.mxu0
    %1237 = vdwg.mxu0
    %v1238 = vmul.f32 %v1212, 0.17677669
    %v1239 = vmul.f32 %v1235, 0.17677669
    %v1240 = vadd.f32 %v1238, %v483
    %v1241 = vadd.f32 %v1239, %v484
    %v1242 = vsel %vm489, %v1240, -inf
    %1243 = vmax.xlane.f32.xlu0 %v1242
    %v1244 = vpop.xlane.xlu0 %1243
    %v1245 = vsel %vm489, %v1241, -inf
    %1246 = vmax.xlane.f32.xlu0 %v1245
    %v1247 = vpop.xlane.xlu0 %1246
    %v1248 = vsub.f32 %v1240, %v1244
    %v1249 = vsub.f32 %v1241, %v1247
    %v1250 = vmul.f32 %v1248, 1.442695
    %v1251 = vpow.pop %v1250
    %v1252 = vmul.f32 %v1249, 1.442695
    %v1253 = vpow.pop %v1252
    %v1254 = vsel %vm489, %v1251, 0.0
    %1255 = vadd.xlane.f32.xlu0 %v1254
    %v1256 = vpop.xlane.xlu0 %1255
    %v1257 = vsel %vm489, %v1253, 0.0
    %1258 = vadd.xlane.f32.xlu0 %v1257
    %v1259 = vpop.xlane.xlu0 %1258
    %v1260 = vrcp.pop %v1256
    %v1261 = vrcp.pop %v1259
    %v1262 = vmul.f32 %v1251, %v1260
    %v1263 = vmul.f32 %v1253, %v1261
    %v1264 = vpack.c.bf16 %v1262, %v1262
    %v1265 = vpack.c.bf16 %v1263, %v1263
    %v1267 = vsel %vm489, %v1264, 0
    %v1270 = vsel %vm517, %v1190, 0
    %1272 = vmatpush.bf16.msra.mxu0 0
    %1273 = vmatpush.bf16.msra.mxu0 0
    %1274 = vmatpush.bf16.msra.mxu0 0
    %1275 = vmatpush.bf16.msra.mxu0 0
    %1276 = vmatpush.bf16.msra.mxu0 0
    %1277 = vmatpush.bf16.msra.mxu0 0
    %1278 = vmatpush.bf16.msra.mxu0 0
    %1279 = vmatpush.bf16.msra.mxu0 %v1270
    %1280 = vmatmul.bf16.gmra.mxu0 %v1267
    %v1281 = vpop.f32.mrf.mxu0
    %v1282 = vadd.f32 0.0, %v1281
    %v1283 = vpop.f32.mrf.mxu0
    %1284 = vdwg.mxu0
    %v1286 = vsel %vm489, %v1265, 0
    %v1289 = vsel %vm517, %v1191, 0
    %1291 = vmatpush.bf16.msra.mxu0 0
    %1292 = vmatpush.bf16.msra.mxu0 0
    %1293 = vmatpush.bf16.msra.mxu0 0
    %1294 = vmatpush.bf16.msra.mxu0 0
    %1295 = vmatpush.bf16.msra.mxu0 0
    %1296 = vmatpush.bf16.msra.mxu0 0
    %1297 = vmatpush.bf16.msra.mxu0 0
    %1298 = vmatpush.bf16.msra.mxu0 %v1289
    %1299 = vmatmul.bf16.gmra.mxu0 %v1286
    %v1300 = vpop.f32.mrf.mxu0
    %v1301 = vadd.f32 0.0, %v1300
    %v1302 = vpop.f32.mrf.mxu0
    %1303 = vdwg.mxu0
    %1306 = vrot.lane.b32.xlu0 %v1282, 32
    %v1307 = vpop.permute.xlu0 %1306
    %1308 = vrot.lane.b32.xlu0 %v1301, 32
    %v1309 = vpop.permute.xlu0 %1308
    %v1312 = vsel %vm436, %v1164, %v1307
    %v1313 = vsel %vm436, %v1183, %v1309
    %v1314 = vpack.c.bf16 %v1313, %v1312
    %s1315 = scalar_lea.vmem %s5, 32
    %v1316 = vld [vmem:[%s1315] sm:$0xf]
    %v1317 = vld [vmem:[%s1315 + $0x4] sm:$0xf]
    %v1318 = vld [vmem:[%s1315 + $0x8] sm:$0xf]
    %v1319 = vld [vmem:[%s1315 + $0xc] sm:$0xf]
    %v1320 = vld [vmem:[%s1315 + $0x10] sm:$0xf]
    %v1321 = vld [vmem:[%s1315 + $0x14] sm:$0xf]
    %v1322 = vld [vmem:[%s1315 + $0x18] sm:$0xf]
    %v1323 = vld [vmem:[%s1315 + $0x1c] sm:$0xf]
    %v1324 = vperm.slane %v275, 3
    %v1333 = vunpack.c.l.b16 %v1316
    %v1334 = vunpack.c.l.b16 %v1317
    %v1335 = vunpack.c.l.b16 %v1318
    %v1336 = vunpack.c.l.b16 %v1319
    %v1337 = vunpack.c.l.b16 %v1320
    %v1338 = vunpack.c.l.b16 %v1321
    %v1339 = vunpack.c.l.b16 %v1322
    %v1340 = vunpack.c.l.b16 %v1323
    %v1341 = vpack.c.b16 %v1334, %v1333
    %v1342 = vpack.c.b16 %v1336, %v1335
    %v1343 = vpack.c.b16 %v1338, %v1337
    %v1344 = vpack.c.b16 %v1340, %v1339
    %v1350 = vsel %vm286, %v1314, 0
    %1352 = vmatpush.bf16.msra.mxu0 0
    %1353 = vmatpush.bf16.msra.mxu0 0
    %1354 = vmatpush.bf16.msra.mxu0 0
    %1355 = vmatpush.bf16.msra.mxu0 0
    %1356 = vmatpush.bf16.msra.mxu0 %v1344
    %1357 = vmatpush.bf16.msra.mxu0 %v1343
    %1358 = vmatpush.bf16.msra.mxu0 %v1342
    %1359 = vmatpush.bf16.msra.mxu0 %v1341
    %1360 = vmatmul.bf16.gmra.mxu0 %v1350
    %v1361 = vpop.f32.mrf.mxu0
    %v1362 = vadd.f32 %v1324, %v1361
    %v1363 = vpop.f32.mrf.mxu0
    %v1364 = vadd.f32 %v1324, %v1363
    %1365 = vdwg.mxu0
    %v1366 = vadd.f32 %v983, %v1362
    %v1367 = vadd.f32 %v984, %v1364
    %v1368 = vsel %vm286, %v1366, 0.0
    %1369 = vadd.xlane.f32.xlu0 %v1368
    %v1370 = vpop.xlane.xlu0 %1369
    %v1371 = vsel %vm286, %v1367, 0.0
    %1372 = vadd.xlane.f32.xlu0 %v1371
    %v1373 = vpop.xlane.xlu0 %1372
    %v1374 = vmul.f32 %v1370, %v299
    %v1375 = vmul.f32 %v1373, %v299
    %v1376 = vsub.f32 %v1366, %v1374
    %v1377 = vsub.f32 %v1367, %v1375
    %v1378 = vmul.f32 %v1376, %v1376
    %v1379 = vmul.f32 %v1377, %v1377
    %v1380 = vsel %vm286, %v1378, 0.0
    %1381 = vadd.xlane.f32.xlu0 %v1380
    %v1382 = vpop.xlane.xlu0 %1381
    %v1383 = vsel %vm286, %v1379, 0.0
    %1384 = vadd.xlane.f32.xlu0 %v1383
    %v1385 = vpop.xlane.xlu0 %1384
    %v1386 = vmul.f32 %v1382, %v299
    %v1387 = vmul.f32 %v1385, %v299
    %v1388 = vadd.f32 %v1386, 1e-12
    %v1389 = vadd.f32 %v1387, 1e-12
    %v1390 = vrsqrt.pop %v1388
    %v1391 = vmul.f32 %v1390, %v1388
    %v1392 = vmul.f32 %v1391, %v1390
    %v1393 = vmul.f32 0.5, %v1392
    %v1394 = vsub.f32 1.5, %v1393
    %v1395 = vmul.f32 %v1390, %v1394
    %vm1396 = vweird.f32 %v1388
    %vm1397 = vweird.f32 %v1390
    %vm1398 = vmor %vm1396, %vm1397
    %v1399 = vsel %vm1398, %v1390, %v1395
    %v1400 = vrsqrt.pop %v1389
    %v1401 = vmul.f32 %v1400, %v1389
    %v1402 = vmul.f32 %v1401, %v1400
    %v1403 = vmul.f32 0.5, %v1402
    %v1404 = vsub.f32 1.5, %v1403
    %v1405 = vmul.f32 %v1400, %v1404
    %vm1406 = vweird.f32 %v1389
    %vm1407 = vweird.f32 %v1400
    %vm1408 = vmor %vm1406, %vm1407
    %v1409 = vsel %vm1408, %v1400, %v1405
    %v1410 = vmul.f32 %v1376, %v1399
    %v1411 = vmul.f32 %v1377, %v1409
    %v1412 = vperm.slane %v275, 4
    %v1413 = vmul.f32 %v1410, %v1412
    %v1414 = vmul.f32 %v1411, %v1412
    %v1415 = vperm.slane %v275, 5
    %v1416 = vadd.f32 %v1413, %v1415
    %v1417 = vadd.f32 %v1414, %v1415
    %v1418 = vpack.c.bf16 %v1417, %v1416
    %s1419 = scalar_lea.vmem %s6, 32
    %v1420 = vld [vmem:[%s1419] sm:$0xf]
    %v1421 = vld [vmem:[%s1419 + $0x4] sm:$0xf]
    %v1422 = vld [vmem:[%s1419 + $0x8] sm:$0xf]
    %v1423 = vld [vmem:[%s1419 + $0xc] sm:$0xf]
    %v1424 = vld [vmem:[%s1419 + $0x10] sm:$0xf]
    %v1425 = vld [vmem:[%s1419 + $0x14] sm:$0xf]
    %v1426 = vld [vmem:[%s1419 + $0x18] sm:$0xf]
    %v1427 = vld [vmem:[%s1419 + $0x1c] sm:$0xf]
    %v1428 = vperm.slane %v275, 6
    %v1437 = vunpack.c.l.b16 %v1420
    %v1438 = vunpack.c.l.b16 %v1421
    %v1439 = vunpack.c.l.b16 %v1422
    %v1440 = vunpack.c.l.b16 %v1423
    %v1441 = vunpack.c.l.b16 %v1424
    %v1442 = vunpack.c.l.b16 %v1425
    %v1443 = vunpack.c.l.b16 %v1426
    %v1444 = vunpack.c.l.b16 %v1427
    %v1445 = vpack.c.b16 %v1438, %v1437
    %v1446 = vpack.c.b16 %v1440, %v1439
    %v1447 = vpack.c.b16 %v1442, %v1441
    %v1448 = vpack.c.b16 %v1444, %v1443
    %v1454 = vsel %vm286, %v1418, 0
    %1456 = vmatpush.bf16.msra.mxu0 0
    %1457 = vmatpush.bf16.msra.mxu0 0
    %1458 = vmatpush.bf16.msra.mxu0 0
    %1459 = vmatpush.bf16.msra.mxu0 0
    %1460 = vmatpush.bf16.msra.mxu0 %v1448
    %1461 = vmatpush.bf16.msra.mxu0 %v1447
    %1462 = vmatpush.bf16.msra.mxu0 %v1446
    %1463 = vmatpush.bf16.msra.mxu0 %v1445
    %1464 = vmatmul.bf16.gmra.mxu0 %v1454
    %v1465 = vpop.f32.mrf.mxu0
    %v1466 = vadd.f32 %v1428, %v1465
    %v1467 = vpop.f32.mrf.mxu0
    %v1468 = vadd.f32 %v1428, %v1467
    %1469 = vdwg.mxu0
    %v1470 = vmul.f32 %v1466, %v1466
    %v1471 = vmul.f32 %v1468, %v1468
    %v1472 = vmul.f32 %v1466, %v1470
    %v1473 = vmul.f32 %v1468, %v1471
    %v1474 = vmul.f32 %v1472, 0.044715
    %v1475 = vmul.f32 %v1473, 0.044715
    %v1476 = vadd.f32 %v1466, %v1474
    %v1477 = vadd.f32 %v1468, %v1475
    %v1478 = vmul.f32 %v1476, 0.7978846
    %v1479 = vmul.f32 %v1477, 0.7978846
    %v1480 = vtanh.pop %v1478
    %v1481 = vtanh.pop %v1479
    %v1482 = vadd.f32 %v1480, 1.0
    %v1483 = vadd.f32 %v1481, 1.0
    %v1484 = vmul.f32 %v1482, 0.5
    %v1485 = vmul.f32 %v1483, 0.5
    %v1486 = vmul.f32 %v1466, %v1484
    %v1487 = vmul.f32 %v1468, %v1485
    %v1488 = vpack.c.bf16 %v1487, %v1486
    %s1489 = scalar_lea.vmem %s7, 64
    %v1490 = vld [vmem:[%s1489] sm:$0xf]
    %v1491 = vld [vmem:[%s1489 + $0x4] sm:$0xf]
    %v1492 = vld [vmem:[%s1489 + $0x8] sm:$0xf]
    %v1493 = vld [vmem:[%s1489 + $0xc] sm:$0xf]
    %v1494 = vld [vmem:[%s1489 + $0x10] sm:$0xf]
    %v1495 = vld [vmem:[%s1489 + $0x14] sm:$0xf]
    %v1496 = vld [vmem:[%s1489 + $0x18] sm:$0xf]
    %v1497 = vld [vmem:[%s1489 + $0x1c] sm:$0xf]
    %v1498 = vld [vmem:[%s1489 + $0x20] sm:$0xf]
    %v1499 = vld [vmem:[%s1489 + $0x24] sm:$0xf]
    %v1500 = vld [vmem:[%s1489 + $0x28] sm:$0xf]
    %v1501 = vld [vmem:[%s1489 + $0x2c] sm:$0xf]
    %v1502 = vld [vmem:[%s1489 + $0x30] sm:$0xf]
    %v1503 = vld [vmem:[%s1489 + $0x34] sm:$0xf]
    %v1504 = vld [vmem:[%s1489 + $0x38] sm:$0xf]
    %v1505 = vld [vmem:[%s1489 + $0x3c] sm:$0xf]
    %v1506 = vperm.slane %v275, 7
    %v1523 = vunpack.c.l.b16 %v1490
    %v1524 = vunpack.c.l.b16 %v1491
    %v1525 = vunpack.c.l.b16 %v1492
    %v1526 = vunpack.c.l.b16 %v1493
    %v1527 = vunpack.c.l.b16 %v1494
    %v1528 = vunpack.c.l.b16 %v1495
    %v1529 = vunpack.c.l.b16 %v1496
    %v1530 = vunpack.c.l.b16 %v1497
    %v1531 = vunpack.c.l.b16 %v1498
    %v1532 = vunpack.c.l.b16 %v1499
    %v1533 = vunpack.c.l.b16 %v1500
    %v1534 = vunpack.c.l.b16 %v1501
    %v1535 = vunpack.c.l.b16 %v1502
    %v1536 = vunpack.c.l.b16 %v1503
    %v1537 = vunpack.c.l.b16 %v1504
    %v1538 = vunpack.c.l.b16 %v1505
    %v1539 = vpack.c.b16 %v1524, %v1523
    %v1540 = vpack.c.b16 %v1526, %v1525
    %v1541 = vpack.c.b16 %v1528, %v1527
    %v1542 = vpack.c.b16 %v1530, %v1529
    %v1543 = vpack.c.b16 %v1532, %v1531
    %v1544 = vpack.c.b16 %v1534, %v1533
    %v1545 = vpack.c.b16 %v1536, %v1535
    %v1546 = vpack.c.b16 %v1538, %v1537
    %1555 = vmatpush.bf16.msra.mxu0 %v1546
    %1556 = vmatpush.bf16.msra.mxu0 %v1545
    %1557 = vmatpush.bf16.msra.mxu0 %v1544
    %1558 = vmatpush.bf16.msra.mxu0 %v1543
    %1559 = vmatpush.bf16.msra.mxu0 %v1542
    %1560 = vmatpush.bf16.msra.mxu0 %v1541
    %1561 = vmatpush.bf16.msra.mxu0 %v1540
    %1562 = vmatpush.bf16.msra.mxu0 %v1539
    %1563 = vmatmul.bf16.gmra.mxu0 %v1488
    %v1564 = vpop.f32.mrf.mxu0
    %v1565 = vadd.f32 %v1506, %v1564
    %v1566 = vpop.f32.mrf.mxu0
    %v1567 = vadd.f32 %v1506, %v1566
    %1568 = vdwg.mxu0
    %v1569 = vadd.f32 %v1416, %v1565
    %v1570 = vadd.f32 %v1417, %v1567
    %v1571 = vsel %vm286, %v1569, 0.0
    %1572 = vadd.xlane.f32.xlu0 %v1571
    %v1573 = vpop.xlane.xlu0 %1572
    %v1574 = vsel %vm286, %v1570, 0.0
    %1575 = vadd.xlane.f32.xlu0 %v1574
    %v1576 = vpop.xlane.xlu0 %1575
    %v1577 = vmul.f32 %v1573, %v299
    %v1578 = vmul.f32 %v1576, %v299
    %v1579 = vsub.f32 %v1569, %v1577
    %v1580 = vsub.f32 %v1570, %v1578
    %v1581 = vmul.f32 %v1579, %v1579
    %v1582 = vmul.f32 %v1580, %v1580
    %v1583 = vsel %vm286, %v1581, 0.0
    %1584 = vadd.xlane.f32.xlu0 %v1583
    %v1585 = vpop.xlane.xlu0 %1584
    %v1586 = vsel %vm286, %v1582, 0.0
    %1587 = vadd.xlane.f32.xlu0 %v1586
    %v1588 = vpop.xlane.xlu0 %1587
    %v1589 = vmul.f32 %v1585, %v299
    %v1590 = vmul.f32 %v1588, %v299
    %v1591 = vadd.f32 %v1589, 1e-12
    %v1592 = vadd.f32 %v1590, 1e-12
    %v1593 = vrsqrt.pop %v1591
    %v1594 = vmul.f32 %v1593, %v1591
    %v1595 = vmul.f32 %v1594, %v1593
    %v1596 = vmul.f32 0.5, %v1595
    %v1597 = vsub.f32 1.5, %v1596
    %v1598 = vmul.f32 %v1593, %v1597
    %vm1599 = vweird.f32 %v1591
    %vm1600 = vweird.f32 %v1593
    %vm1601 = vmor %vm1599, %vm1600
    %v1602 = vsel %vm1601, %v1593, %v1598
    %v1603 = vrsqrt.pop %v1592
    %v1604 = vmul.f32 %v1603, %v1592
    %v1605 = vmul.f32 %v1604, %v1603
    %v1606 = vmul.f32 0.5, %v1605
    %v1607 = vsub.f32 1.5, %v1606
    %v1608 = vmul.f32 %v1603, %v1607
    %vm1609 = vweird.f32 %v1592
    %vm1610 = vweird.f32 %v1603
    %vm1611 = vmor %vm1609, %vm1610
    %v1612 = vsel %vm1611, %v1603, %v1608
    %v1613 = vmul.f32 %v1579, %v1602
    %v1614 = vmul.f32 %v1580, %v1612
    %v1615 = vperm.slane %v277, 0
    %v1616 = vmul.f32 %v1613, %v1615
    %v1617 = vmul.f32 %v1614, %v1615
    %v1618 = vperm.slane %v277, 1
    %v1619 = vadd.f32 %v1616, %v1618
    %v1620 = vadd.f32 %v1617, %v1618
    %v1621 = vpack.c.bf16 %v1620, %v1619
    %v1622 = vld [vmem:[#allocation8] sm:$0xf]
    %v1623 = vld [vmem:[#allocation8 + $0x4] sm:$0xf]
    %v1624 = vld [vmem:[#allocation8 + $0x8] sm:$0xf]
    %v1625 = vld [vmem:[#allocation8 + $0xc] sm:$0xf]
    %v1626 = vld [vmem:[#allocation8 + $0x10] sm:$0xf]
    %v1627 = vld [vmem:[#allocation8 + $0x14] sm:$0xf]
    %v1628 = vld [vmem:[#allocation8 + $0x18] sm:$0xf]
    %v1629 = vld [vmem:[#allocation8 + $0x1c] sm:$0xf]
    %v1630 = vperm.slane %v277, 2
    %v1639 = vunpack.c.l.b16 %v1622
    %v1640 = vunpack.c.l.b16 %v1623
    %v1641 = vunpack.c.l.b16 %v1624
    %v1642 = vunpack.c.l.b16 %v1625
    %v1643 = vunpack.c.l.b16 %v1626
    %v1644 = vunpack.c.l.b16 %v1627
    %v1645 = vunpack.c.l.b16 %v1628
    %v1646 = vunpack.c.l.b16 %v1629
    %v1647 = vpack.c.b16 %v1640, %v1639
    %v1648 = vpack.c.b16 %v1642, %v1641
    %v1649 = vpack.c.b16 %v1644, %v1643
    %v1650 = vpack.c.b16 %v1646, %v1645
    %v1656 = vsel %vm286, %v1621, 0
    %1658 = vmatpush.bf16.msra.mxu0 0
    %1659 = vmatpush.bf16.msra.mxu0 0
    %1660 = vmatpush.bf16.msra.mxu0 0
    %1661 = vmatpush.bf16.msra.mxu0 0
    %1662 = vmatpush.bf16.msra.mxu0 %v1650
    %1663 = vmatpush.bf16.msra.mxu0 %v1649
    %1664 = vmatpush.bf16.msra.mxu0 %v1648
    %1665 = vmatpush.bf16.msra.mxu0 %v1647
    %1666 = vmatmul.bf16.gmra.mxu0 %v1656
    %v1667 = vpop.f32.mrf.mxu0
    %v1668 = vadd.f32 %v1630, %v1667
    %v1669 = vpop.f32.mrf.mxu0
    %v1670 = vadd.f32 %v1630, %v1669
    %1671 = vdwg.mxu0
    %v1672 = vld [vmem:[%s9] sm:$0xf]
    %v1673 = vld [vmem:[%s9 + $0x4] sm:$0xf]
    %v1674 = vld [vmem:[%s9 + $0x8] sm:$0xf]
    %v1675 = vld [vmem:[%s9 + $0xc] sm:$0xf]
    %v1676 = vlaneseq
    %v1677 = vand.u32 %v1676, 127
    %vm1678 = vcmp.ge.s32.totalorder %v1677, 64
    %vm1679 = vcmp.lt.s32.totalorder %v1677, 96
    %vm1680 = vmand %vm1678, %vm1679
    %v1681 = vsel %vm1680, 1.0, 0.5
    %v1682 = vsel %vm1680, 0.0, 0.5
    %v1687 = vunpack.c.l.b16 %v1672
    %v1688 = vunpack.c.l.b16 %v1673
    %v1689 = vunpack.c.l.b16 %v1674
    %v1690 = vunpack.c.l.b16 %v1675
    %v1691 = vpack.c.b16 %v1688, %v1687
    %v1692 = vpack.c.b16 %v1690, %v1689
    %v1696 = vsel %vm436, 0, 0
    %1698 = vmatpush.bf16.msra.mxu0 0
    %1699 = vmatpush.bf16.msra.mxu0 0
    %1700 = vmatpush.bf16.msra.mxu0 0
    %1701 = vmatpush.bf16.msra.mxu0 0
    %1702 = vmatpush.bf16.msra.mxu0 0
    %1703 = vmatpush.bf16.msra.mxu0 0
    %1704 = vmatpush.bf16.msra.mxu0 %v1692
    %1705 = vmatpush.bf16.msra.mxu0 %v1691
    %1706 = vmatmul.bf16.gmra.mxu0 %v1696
    %v1707 = vpop.f32.mrf.mxu0
    %v1708 = vadd.f32 0.0, %v1707
    %v1709 = vpop.f32.mrf.mxu0
    %1710 = vdwg.mxu0
    %v1712 = vrot.slane %v1708, 1
    %v1715 = vadd.f32 %v1668, %v1708
    %v1716 = vadd.f32 %v1670, %v1712
    %v1717 = vtanh.pop %v1715
    %v1718 = vtanh.pop %v1716
    %v1719 = vmul.f32 %v1717, %v1681
    %v1720 = vmul.f32 %v1718, %v1681
    %v1721 = vadd.f32 %v1719, %v1682
    %v1722 = vadd.f32 %v1720, %v1682
    %v1723 = vmul.f32 %v1721, 0.0
    %v1724 = vmul.f32 %v1722, 0.0
    %1727 = vrot.lane.b32.xlu0 %v1721, 64
    %v1728 = vpop.permute.xlu0 %1727
    %1729 = vrot.lane.b32.xlu0 %v1722, 64
    %v1730 = vpop.permute.xlu0 %1729
    %v1733 = vmul.f32 %v1721, %v1728
    %v1734 = vmul.f32 %v1722, %v1730
    %1737 = vrot.lane.b32.xlu0 %v1733, 32
    %v1738 = vpop.permute.xlu0 %1737
    %1739 = vrot.lane.b32.xlu0 %v1734, 32
    %v1740 = vpop.permute.xlu0 %1739
    %v1743 = vadd.f32 %v1723, %v1738
    %v1744 = vadd.f32 %v1724, %v1740
    %v1745 = vtanh.pop %v1743
    %v1746 = vtanh.pop %v1744
    %1749 = vrot.lane.b32.xlu0 %v1745, 64
    %v1750 = vpop.permute.xlu0 %1749
    %1751 = vrot.lane.b32.xlu0 %v1746, 64
    %v1752 = vpop.permute.xlu0 %1751
    %v1755 = vmul.f32 %v1721, %v1750
    %v1756 = vmul.f32 %v1722, %v1752
    %v1757 = vpack.c.bf16 %v1755, %v1755
    %v1758 = vpack.c.bf16 %v1756, %v1756
    %v1761 = vunpack.c.l.b16 %v1757
    %v1762 = vunpack.c.l.b16 %v1758
    %v1763 = vrot.slane %v1762, 7
    %vm1764 = vcmask 1041409
    %v1765 = vsel %vm1764, %v1763, %v1761
    %v1766 = vpack.c.b16 %v1765, %v1765
    %1767 = vrot.lane.b32.xlu0 %v1766, 32
    %v1768 = vpop.permute.xlu0 %1767
    %v1770 = vsel %vm436, %v1768, 0
    %1772 = vmatpush.bf16.msra.mxu0 0
    %1773 = vmatpush.bf16.msra.mxu0 0
    %1774 = vmatpush.bf16.msra.mxu0 0
    %1775 = vmatpush.bf16.msra.mxu0 0
    %1776 = vmatpush.bf16.msra.mxu0 0
    %1777 = vmatpush.bf16.msra.mxu0 0
    %1778 = vmatpush.bf16.msra.mxu0 %v1692
    %1779 = vmatpush.bf16.msra.mxu0 %v1691
    %1780 = vmatmul.bf16.gmra.mxu0 %v1770
    %v1781 = vpop.f32.mrf.mxu0
    %v1782 = vadd.f32 0.0, %v1781
    %v1783 = vpop.f32.mrf.mxu0
    %1784 = vdwg.mxu0
    %v1786 = vrot.slane %v1782, 7
    %v1789 = vadd.f32 %v1668, %v1786
    %v1790 = vadd.f32 %v1670, %v1782
    %v1791 = vtanh.pop %v1789
    %v1792 = vtanh.pop %v1790
    %v1793 = vmul.f32 %v1791, %v1681
    %v1794 = vmul.f32 %v1792, %v1681
    %v1795 = vadd.f32 %v1793, %v1682
    %v1796 = vadd.f32 %v1794, %v1682
    %v1799 = vrot.slane %v1743, 7
    %v1800 = vrot.slane %v1744, 7
    %v1803 = vmul.f32 %v1795, %v1799
    %v1804 = vmul.f32 %v1796, %v1800
    %1807 = vrot.lane.b32.xlu0 %v1795, 64
    %v1808 = vpop.permute.xlu0 %1807
    %1809 = vrot.lane.b32.xlu0 %v1796, 64
    %v1810 = vpop.permute.xlu0 %1809
    %v1813 = vmul.f32 %v1795, %v1808
    %v1814 = vmul.f32 %v1796, %v1810
    %1817 = vrot.lane.b32.xlu0 %v1813, 32
    %v1818 = vpop.permute.xlu0 %1817
    %1819 = vrot.lane.b32.xlu0 %v1814, 32
    %v1820 = vpop.permute.xlu0 %1819
    %v1823 = vadd.f32 %v1803, %v1818
    %v1824 = vadd.f32 %v1804, %v1820
    %v1825 = vtanh.pop %v1823
    %v1826 = vtanh.pop %v1824
    %1829 = vrot.lane.b32.xlu0 %v1825, 64
    %v1830 = vpop.permute.xlu0 %1829
    %1831 = vrot.lane.b32.xlu0 %v1826, 64
    %v1832 = vpop.permute.xlu0 %1831
    %v1835 = vmul.f32 %v1795, %v1830
    %v1836 = vmul.f32 %v1796, %v1832
    %v1837 = vpack.c.bf16 %v1835, %v1835
    %v1838 = vpack.c.bf16 %v1836, %v1836
    %v1841 = vunpack.c.l.b16 %v1837
    %v1842 = vunpack.c.l.b16 %v1838
    %v1843 = vrot.slane %v1841, 1
    %v1844 = vsel %vm1764, %v1842, %v1843
    %v1845 = vpack.c.b16 %v1844, %v1844
    %1846 = vrot.lane.b32.xlu0 %v1845, 32
    %v1847 = vpop.permute.xlu0 %1846
    %v1849 = vsel %vm436, %v1847, 0
    %1851 = vmatpush.bf16.msra.mxu0 0
    %1852 = vmatpush.bf16.msra.mxu0 0
    %1853 = vmatpush.bf16.msra.mxu0 0
    %1854 = vmatpush.bf16.msra.mxu0 0
    %1855 = vmatpush.bf16.msra.mxu0 0
    %1856 = vmatpush.bf16.msra.mxu0 0
    %1857 = vmatpush.bf16.msra.mxu0 %v1692
    %1858 = vmatpush.bf16.msra.mxu0 %v1691
    %1859 = vmatmul.bf16.gmra.mxu0 %v1849
    %v1860 = vpop.f32.mrf.mxu0
    %v1861 = vadd.f32 0.0, %v1860
    %v1862 = vpop.f32.mrf.mxu0
    %1863 = vdwg.mxu0
    %v1865 = vrot.slane %v1861, 6
    %v1866 = vrot.slane %v1861, 7
    %v1869 = vadd.f32 %v1668, %v1865
    %v1870 = vadd.f32 %v1670, %v1866
    %v1871 = vtanh.pop %v1869
    %v1872 = vtanh.pop %v1870
    %v1873 = vmul.f32 %v1871, %v1681
    %v1874 = vmul.f32 %v1872, %v1681
    %v1875 = vadd.f32 %v1873, %v1682
    %v1876 = vadd.f32 %v1874, %v1682
    %v1879 = vrot.slane %v1823, 7
    %v1880 = vrot.slane %v1824, 7
    %v1883 = vmul.f32 %v1875, %v1879
    %v1884 = vmul.f32 %v1876, %v1880
    %1887 = vrot.lane.b32.xlu0 %v1875, 64
    %v1888 = vpop.permute.xlu0 %1887
    %1889 = vrot.lane.b32.xlu0 %v1876, 64
    %v1890 = vpop.permute.xlu0 %1889
    %v1893 = vmul.f32 %v1875, %v1888
    %v1894 = vmul.f32 %v1876, %v1890
    %1897 = vrot.lane.b32.xlu0 %v1893, 32
    %v1898 = vpop.permute.xlu0 %1897
    %1899 = vrot.lane.b32.xlu0 %v1894, 32
    %v1900 = vpop.permute.xlu0 %1899
    %v1903 = vadd.f32 %v1883, %v1898
    %v1904 = vadd.f32 %v1884, %v1900
    %v1905 = vtanh.pop %v1903
    %v1906 = vtanh.pop %v1904
    %1909 = vrot.lane.b32.xlu0 %v1905, 64
    %v1910 = vpop.permute.xlu0 %1909
    %1911 = vrot.lane.b32.xlu0 %v1906, 64
    %v1912 = vpop.permute.xlu0 %1911
    %v1915 = vmul.f32 %v1875, %v1910
    %v1916 = vmul.f32 %v1876, %v1912
    %v1917 = vpack.c.bf16 %v1915, %v1915
    %v1918 = vpack.c.bf16 %v1916, %v1916
    %v1921 = vunpack.c.l.b16 %v1917
    %v1922 = vunpack.c.l.b16 %v1918
    %v1923 = vrot.slane %v1921, 2
    %v1924 = vrot.slane %v1922, 1
    %v1925 = vsel %vm1764, %v1924, %v1923
    %v1926 = vpack.c.b16 %v1925, %v1925
    %1927 = vrot.lane.b32.xlu0 %v1926, 32
    %v1928 = vpop.permute.xlu0 %1927
    %v1930 = vsel %vm436, %v1928, 0
    %1932 = vmatpush.bf16.msra.mxu0 0
    %1933 = vmatpush.bf16.msra.mxu0 0
    %1934 = vmatpush.bf16.msra.mxu0 0
    %1935 = vmatpush.bf16.msra.mxu0 0
    %1936 = vmatpush.bf16.msra.mxu0 0
    %1937 = vmatpush.bf16.msra.mxu0 0
    %1938 = vmatpush.bf16.msra.mxu0 %v1692
    %1939 = vmatpush.bf16.msra.mxu0 %v1691
    %1940 = vmatmul.bf16.gmra.mxu0 %v1930
    %v1941 = vpop.f32.mrf.mxu0
    %v1942 = vadd.f32 0.0, %v1941
    %v1943 = vpop.f32.mrf.mxu0
    %1944 = vdwg.mxu0
    %v1946 = vrot.slane %v1942, 5
    %v1947 = vrot.slane %v1942, 6
    %v1950 = vadd.f32 %v1668, %v1946
    %v1951 = vadd.f32 %v1670, %v1947
    %v1952 = vtanh.pop %v1950
    %v1953 = vtanh.pop %v1951
    %v1954 = vmul.f32 %v1952, %v1681
    %v1955 = vmul.f32 %v1953, %v1681
    %v1956 = vadd.f32 %v1954, %v1682
    %v1957 = vadd.f32 %v1955, %v1682
    %v1960 = vrot.slane %v1903, 7
    %v1961 = vrot.slane %v1904, 7
    %v1964 = vmul.f32 %v1956, %v1960
    %v1965 = vmul.f32 %v1957, %v1961
    %1968 = vrot.lane.b32.xlu0 %v1956, 64
    %v1969 = vpop.permute.xlu0 %1968
    %1970 = vrot.lane.b32.xlu0 %v1957, 64
    %v1971 = vpop.permute.xlu0 %1970
    %v1974 = vmul.f32 %v1956, %v1969
    %v1975 = vmul.f32 %v1957, %v1971
    %1978 = vrot.lane.b32.xlu0 %v1974, 32
    %v1979 = vpop.permute.xlu0 %1978
    %1980 = vrot.lane.b32.xlu0 %v1975, 32
    %v1981 = vpop.permute.xlu0 %1980
    %v1984 = vadd.f32 %v1964, %v1979
    %v1985 = vadd.f32 %v1965, %v1981
    %v1986 = vtanh.pop %v1984
    %v1987 = vtanh.pop %v1985
    %1990 = vrot.lane.b32.xlu0 %v1986, 64
    %v1991 = vpop.permute.xlu0 %1990
    %1992 = vrot.lane.b32.xlu0 %v1987, 64
    %v1993 = vpop.permute.xlu0 %1992
    %v1996 = vmul.f32 %v1956, %v1991
    %v1997 = vmul.f32 %v1957, %v1993
    %v1998 = vpack.c.bf16 %v1996, %v1996
    %v1999 = vpack.c.bf16 %v1997, %v1997
    %v2002 = vunpack.c.l.b16 %v1998
    %v2003 = vunpack.c.l.b16 %v1999
    %v2004 = vrot.slane %v2002, 3
    %v2005 = vrot.slane %v2003, 2
    %v2006 = vsel %vm1764, %v2005, %v2004
    %v2007 = vpack.c.b16 %v2006, %v2006
    %2008 = vrot.lane.b32.xlu0 %v2007, 32
    %v2009 = vpop.permute.xlu0 %2008
    %v2011 = vsel %vm436, %v2009, 0
    %2013 = vmatpush.bf16.msra.mxu0 0
    %2014 = vmatpush.bf16.msra.mxu0 0
    %2015 = vmatpush.bf16.msra.mxu0 0
    %2016 = vmatpush.bf16.msra.mxu0 0
    %2017 = vmatpush.bf16.msra.mxu0 0
    %2018 = vmatpush.bf16.msra.mxu0 0
    %2019 = vmatpush.bf16.msra.mxu0 %v1692
    %2020 = vmatpush.bf16.msra.mxu0 %v1691
    %2021 = vmatmul.bf16.gmra.mxu0 %v2011
    %v2022 = vpop.f32.mrf.mxu0
    %v2023 = vadd.f32 0.0, %v2022
    %v2024 = vpop.f32.mrf.mxu0
    %2025 = vdwg.mxu0
    %v2027 = vrot.slane %v2023, 4
    %v2028 = vrot.slane %v2023, 5
    %v2031 = vadd.f32 %v1668, %v2027
    %v2032 = vadd.f32 %v1670, %v2028
    %v2033 = vtanh.pop %v2031
    %v2034 = vtanh.pop %v2032
    %v2035 = vmul.f32 %v2033, %v1681
    %v2036 = vmul.f32 %v2034, %v1681
    %v2037 = vadd.f32 %v2035, %v1682
    %v2038 = vadd.f32 %v2036, %v1682
    %v2041 = vrot.slane %v1984, 7
    %v2042 = vrot.slane %v1985, 7
    %v2045 = vmul.f32 %v2037, %v2041
    %v2046 = vmul.f32 %v2038, %v2042
    %2049 = vrot.lane.b32.xlu0 %v2037, 64
    %v2050 = vpop.permute.xlu0 %2049
    %2051 = vrot.lane.b32.xlu0 %v2038, 64
    %v2052 = vpop.permute.xlu0 %2051
    %v2055 = vmul.f32 %v2037, %v2050
    %v2056 = vmul.f32 %v2038, %v2052
    %2059 = vrot.lane.b32.xlu0 %v2055, 32
    %v2060 = vpop.permute.xlu0 %2059
    %2061 = vrot.lane.b32.xlu0 %v2056, 32
    %v2062 = vpop.permute.xlu0 %2061
    %v2065 = vadd.f32 %v2045, %v2060
    %v2066 = vadd.f32 %v2046, %v2062
    %v2067 = vtanh.pop %v2065
    %v2068 = vtanh.pop %v2066
    %2071 = vrot.lane.b32.xlu0 %v2067, 64
    %v2072 = vpop.permute.xlu0 %2071
    %2073 = vrot.lane.b32.xlu0 %v2068, 64
    %v2074 = vpop.permute.xlu0 %2073
    %v2077 = vmul.f32 %v2037, %v2072
    %v2078 = vmul.f32 %v2038, %v2074
    %v2079 = vpack.c.bf16 %v2077, %v2077
    %v2080 = vpack.c.bf16 %v2078, %v2078
    %v2083 = vunpack.c.l.b16 %v2079
    %v2084 = vunpack.c.l.b16 %v2080
    %v2085 = vrot.slane %v2083, 4
    %v2086 = vrot.slane %v2084, 3
    %v2087 = vsel %vm1764, %v2086, %v2085
    %v2088 = vpack.c.b16 %v2087, %v2087
    %2089 = vrot.lane.b32.xlu0 %v2088, 32
    %v2090 = vpop.permute.xlu0 %2089
    %v2092 = vsel %vm436, %v2090, 0
    %2094 = vmatpush.bf16.msra.mxu0 0
    %2095 = vmatpush.bf16.msra.mxu0 0
    %2096 = vmatpush.bf16.msra.mxu0 0
    %2097 = vmatpush.bf16.msra.mxu0 0
    %2098 = vmatpush.bf16.msra.mxu0 0
    %2099 = vmatpush.bf16.msra.mxu0 0
    %2100 = vmatpush.bf16.msra.mxu0 %v1692
    %2101 = vmatpush.bf16.msra.mxu0 %v1691
    %2102 = vmatmul.bf16.gmra.mxu0 %v2092
    %v2103 = vpop.f32.mrf.mxu0
    %v2104 = vadd.f32 0.0, %v2103
    %v2105 = vpop.f32.mrf.mxu0
    %2106 = vdwg.mxu0
    %v2108 = vrot.slane %v2104, 3
    %v2109 = vrot.slane %v2104, 4
    %v2112 = vadd.f32 %v1668, %v2108
    %v2113 = vadd.f32 %v1670, %v2109
    %v2114 = vtanh.pop %v2112
    %v2115 = vtanh.pop %v2113
    %v2116 = vmul.f32 %v2114, %v1681
    %v2117 = vmul.f32 %v2115, %v1681
    %v2118 = vadd.f32 %v2116, %v1682
    %v2119 = vadd.f32 %v2117, %v1682
    %v2122 = vrot.slane %v2065, 7
    %v2123 = vrot.slane %v2066, 7
    %v2126 = vmul.f32 %v2118, %v2122
    %v2127 = vmul.f32 %v2119, %v2123
    %2130 = vrot.lane.b32.xlu0 %v2118, 64
    %v2131 = vpop.permute.xlu0 %2130
    %2132 = vrot.lane.b32.xlu0 %v2119, 64
    %v2133 = vpop.permute.xlu0 %2132
    %v2136 = vmul.f32 %v2118, %v2131
    %v2137 = vmul.f32 %v2119, %v2133
    %2140 = vrot.lane.b32.xlu0 %v2136, 32
    %v2141 = vpop.permute.xlu0 %2140
    %2142 = vrot.lane.b32.xlu0 %v2137, 32
    %v2143 = vpop.permute.xlu0 %2142
    %v2146 = vadd.f32 %v2126, %v2141
    %v2147 = vadd.f32 %v2127, %v2143
    %v2148 = vtanh.pop %v2146
    %v2149 = vtanh.pop %v2147
    %2152 = vrot.lane.b32.xlu0 %v2148, 64
    %v2153 = vpop.permute.xlu0 %2152
    %2154 = vrot.lane.b32.xlu0 %v2149, 64
    %v2155 = vpop.permute.xlu0 %2154
    %v2158 = vmul.f32 %v2118, %v2153
    %v2159 = vmul.f32 %v2119, %v2155
    %v2160 = vpack.c.bf16 %v2158, %v2158
    %v2161 = vpack.c.bf16 %v2159, %v2159
    %v2164 = vunpack.c.l.b16 %v2160
    %v2165 = vunpack.c.l.b16 %v2161
    %v2166 = vrot.slane %v2164, 5
    %v2167 = vrot.slane %v2165, 4
    %v2168 = vsel %vm1764, %v2167, %v2166
    %v2169 = vpack.c.b16 %v2168, %v2168
    %2170 = vrot.lane.b32.xlu0 %v2169, 32
    %v2171 = vpop.permute.xlu0 %2170
    %v2173 = vsel %vm436, %v2171, 0
    %2175 = vmatpush.bf16.msra.mxu0 0
    %2176 = vmatpush.bf16.msra.mxu0 0
    %2177 = vmatpush.bf16.msra.mxu0 0
    %2178 = vmatpush.bf16.msra.mxu0 0
    %2179 = vmatpush.bf16.msra.mxu0 0
    %2180 = vmatpush.bf16.msra.mxu0 0
    %2181 = vmatpush.bf16.msra.mxu0 %v1692
    %2182 = vmatpush.bf16.msra.mxu0 %v1691
    %2183 = vmatmul.bf16.gmra.mxu0 %v2173
    %v2184 = vpop.f32.mrf.mxu0
    %v2185 = vadd.f32 0.0, %v2184
    %v2186 = vpop.f32.mrf.mxu0
    %2187 = vdwg.mxu0
    %v2189 = vrot.slane %v2185, 2
    %v2190 = vrot.slane %v2185, 3
    %v2193 = vadd.f32 %v1668, %v2189
    %v2194 = vadd.f32 %v1670, %v2190
    %v2195 = vtanh.pop %v2193
    %v2196 = vtanh.pop %v2194
    %v2197 = vmul.f32 %v2195, %v1681
    %v2198 = vmul.f32 %v2196, %v1681
    %v2199 = vadd.f32 %v2197, %v1682
    %v2200 = vadd.f32 %v2198, %v1682
    %v2203 = vrot.slane %v2146, 7
    %v2204 = vrot.slane %v2147, 7
    %v2207 = vmul.f32 %v2199, %v2203
    %v2208 = vmul.f32 %v2200, %v2204
    %2211 = vrot.lane.b32.xlu0 %v2199, 64
    %v2212 = vpop.permute.xlu0 %2211
    %2213 = vrot.lane.b32.xlu0 %v2200, 64
    %v2214 = vpop.permute.xlu0 %2213
    %v2217 = vmul.f32 %v2199, %v2212
    %v2218 = vmul.f32 %v2200, %v2214
    %2221 = vrot.lane.b32.xlu0 %v2217, 32
    %v2222 = vpop.permute.xlu0 %2221
    %2223 = vrot.lane.b32.xlu0 %v2218, 32
    %v2224 = vpop.permute.xlu0 %2223
    %v2227 = vadd.f32 %v2207, %v2222
    %v2228 = vadd.f32 %v2208, %v2224
    %v2229 = vtanh.pop %v2227
    %v2230 = vtanh.pop %v2228
    %2233 = vrot.lane.b32.xlu0 %v2229, 64
    %v2234 = vpop.permute.xlu0 %2233
    %2235 = vrot.lane.b32.xlu0 %v2230, 64
    %v2236 = vpop.permute.xlu0 %2235
    %v2239 = vmul.f32 %v2199, %v2234
    %v2240 = vmul.f32 %v2200, %v2236
    %v2241 = vpack.c.bf16 %v2239, %v2239
    %v2242 = vpack.c.bf16 %v2240, %v2240
    %v2245 = vunpack.c.l.b16 %v2241
    %v2246 = vunpack.c.l.b16 %v2242
    %v2247 = vrot.slane %v2245, 6
    %v2248 = vrot.slane %v2246, 5
    %v2249 = vsel %vm1764, %v2248, %v2247
    %v2250 = vpack.c.b16 %v2249, %v2249
    %2251 = vrot.lane.b32.xlu0 %v2250, 32
    %v2252 = vpop.permute.xlu0 %2251
    %v2254 = vsel %vm436, %v2252, 0
    %2256 = vmatpush.bf16.msra.mxu0 0
    %2257 = vmatpush.bf16.msra.mxu0 0
    %2258 = vmatpush.bf16.msra.mxu0 0
    %2259 = vmatpush.bf16.msra.mxu0 0
    %2260 = vmatpush.bf16.msra.mxu0 0
    %2261 = vmatpush.bf16.msra.mxu0 0
    %2262 = vmatpush.bf16.msra.mxu0 %v1692
    %2263 = vmatpush.bf16.msra.mxu0 %v1691
    %2264 = vmatmul.bf16.gmra.mxu0 %v2254
    %v2265 = vpop.f32.mrf.mxu0
    %v2266 = vadd.f32 0.0, %v2265
    %v2267 = vpop.f32.mrf.mxu0
    %2268 = vdwg.mxu0
    %v2270 = vrot.slane %v2266, 1
    %v2271 = vrot.slane %v2266, 2
    %v2274 = vadd.f32 %v1668, %v2270
    %v2275 = vadd.f32 %v1670, %v2271
    %v2276 = vtanh.pop %v2274
    %v2277 = vtanh.pop %v2275
    %v2278 = vmul.f32 %v2276, %v1681
    %v2279 = vmul.f32 %v2277, %v1681
    %v2280 = vadd.f32 %v2278, %v1682
    %v2281 = vadd.f32 %v2279, %v1682
    %v2284 = vrot.slane %v2227, 7
    %v2285 = vrot.slane %v2228, 7
    %v2288 = vmul.f32 %v2280, %v2284
    %v2289 = vmul.f32 %v2281, %v2285
    %2292 = vrot.lane.b32.xlu0 %v2280, 64
    %v2293 = vpop.permute.xlu0 %2292
    %2294 = vrot.lane.b32.xlu0 %v2281, 64
    %v2295 = vpop.permute.xlu0 %2294
    %v2298 = vmul.f32 %v2280, %v2293
    %v2299 = vmul.f32 %v2281, %v2295
    %2302 = vrot.lane.b32.xlu0 %v2298, 32
    %v2303 = vpop.permute.xlu0 %2302
    %2304 = vrot.lane.b32.xlu0 %v2299, 32
    %v2305 = vpop.permute.xlu0 %2304
    %v2308 = vadd.f32 %v2288, %v2303
    %v2309 = vadd.f32 %v2289, %v2305
    %v2310 = vtanh.pop %v2308
    %v2311 = vtanh.pop %v2309
    %2314 = vrot.lane.b32.xlu0 %v2310, 64
    %v2315 = vpop.permute.xlu0 %2314
    %2316 = vrot.lane.b32.xlu0 %v2311, 64
    %v2317 = vpop.permute.xlu0 %2316
    %v2320 = vmul.f32 %v2280, %v2315
    %v2321 = vmul.f32 %v2281, %v2317
    %v2322 = vperm.slane %v277, 3
    %2324 = vrot.lane.b32.xlu0 %v2322, 96
    %v2325 = vpop.permute.xlu0 %2324
    %v2327 = vmul.f32 %v2320, %v2325
    %v2328 = vmul.f32 %v2321, %v2325
    %v2331 = vrot.slane %v2328, 7
    %2332 = vrot.lane.b32.xlu0 %v2327, 32
    %v2333 = vpop.permute.xlu0 %2332
    %2334 = vrot.lane.b32.xlu0 %v2331, 32
    %v2335 = vpop.permute.xlu0 %2334
    %vm2338 = vcmask 261127
    %v2339 = vsel %vm2338, %v2333, 0.0
    %2340 = vadd.xlane.f32.xlu0 %v2339
    %v2341 = vpop.xlane.xlu0 %2340
    %vm2342 = vcmask 253952
    %v2343 = vsel %vm2342, %v2335, 0.0
    %2344 = vadd.xlane.f32.xlu0 %v2343
    %v2345 = vpop.xlane.xlu0 %2344
    %v2346 = vperm.slane %v277, 4
    %v2347 = vadd.f32 %v2341, %v2346
    %v2348 = vadd.f32 %v2345, %v2346
    %v2349 = vxor.u32 %v2347, 2147483648
    %v2350 = vxor.u32 %v2348, 2147483648
    %v2351 = vmul.f32 %v2349, 1.442695
    %v2352 = vpow.pop %v2351
    %v2353 = vmul.f32 %v2350, 1.442695
    %v2354 = vpow.pop %v2353
    %v2355 = vadd.f32 %v2352, 1.0
    %v2356 = vadd.f32 %v2354, 1.0
    %v2357 = vrcp.pop %v2355
    %v2358 = vmul.f32 %v2355, %v2357
    %v2359 = vsub.f32 1.0, %v2358
    %v2360 = vmul.f32 %v2357, %v2359
    %v2361 = vadd.f32 %v2357, %v2360
    %vm2362 = vweird.f32 %v2355
    %vm2363 = vweird.f32 %v2357
    %vm2364 = vmor %vm2362, %vm2363
    %v2365 = vsel %vm2364, %v2357, %v2361
    %v2366 = vand.u32 2147483647, %v2355
    %vm2367 = vcmp.eq.f32.partialorder %v2366, 8.507059e+37
    %v2368 = vand.u32 %v2355, 2147483648
    %v2369 = vor.u32 1.1754944e-38, %v2368
    %v2370 = vsel %vm2367, %v2369, %v2365
    %v2371 = vmul.f32 1.0, %v2370
    %v2372 = vrcp.pop %v2356
    %v2373 = vmul.f32 %v2356, %v2372
    %v2374 = vsub.f32 1.0, %v2373
    %v2375 = vmul.f32 %v2372, %v2374
    %v2376 = vadd.f32 %v2372, %v2375
    %vm2377 = vweird.f32 %v2356
    %vm2378 = vweird.f32 %v2372
    %vm2379 = vmor %vm2377, %vm2378
    %v2380 = vsel %vm2379, %v2372, %v2376
    %v2381 = vand.u32 2147483647, %v2356
    %vm2382 = vcmp.eq.f32.partialorder %v2381, 8.507059e+37
    %v2383 = vand.u32 %v2356, 2147483648
    %v2384 = vor.u32 1.1754944e-38, %v2383
    %v2385 = vsel %vm2382, %v2384, %v2380
    %v2386 = vmul.f32 1.0, %v2385
    %vm2387 = vcmask 7175
    %2388 = vst.msk [vmem:[%s11 - $0x7] sm:$0x80] %vm2387, %v2371
    %vm2389 = vcmask 0
    %2390 = vst.msk [vmem:[%s11 + $0x1] sm:$0x1] %vm2389, %v2386
    // Predicated region
    $region62: #{bert_lstm_forward.1} parent=1 // pred_check
      _
    $region63: #{bert_lstm_forward.1} parent=1 // pred_check_branch
      %2392 = sbr.rel (0) target = $region65
    $region64: #{bert_lstm_forward.1} parent=1 // pred_region
      _
    $region65: #{bert_lstm_forward.1} parent=1 // pred_fallthru
      _
    // Predicated region
    $region66: #{bert_lstm_forward.1} parent=1 // pred_check
      _
    $region67: #{bert_lstm_forward.1} parent=1 // pred_check_branch
      %2394 = sbr.rel (0) target = $region69
    $region68: #{bert_lstm_forward.1} parent=1 // pred_region
      _
    $region69: #{bert_lstm_forward.1} parent=1 // pred_fallthru
      _
    %2395 = vsyncpa [#allocation4], 1
    %2396 = vsyncpa [#allocation10], 1
    %2397 = vsyncpa [#allocation5], 1
    %2398 = vsyncpa [#allocation7], 1

</llo_original>
